<compile_context>
chip_gen: v7x
topology: tpu7x:2x2x1
jax: 0.10.0
libtpu: 0.0.40
codegen_flags: <defaults>
</compile_context>

<pallas_src>
import math

import jax
import jax.numpy as jnp
from jax.experimental import pallas as pl
from jax.experimental.pallas import tpu as pltpu

# ---- small synthetic config (consistent with the module's forward) ----
N_LAYERS = 2
D_MODEL = 32
N_HEADS = 4
D_K = D_MODEL // N_HEADS
D_FF = 64
SEQ = 8
BATCH = 2
EPS = 1e-6
LANES = 128

# Packed bf16 weight-slab row offsets (per layer).  Every block starts at lane
# offset 0 and at a row offset that is a multiple of the bf16 sublane tile (16),
# so the in-kernel static slices are tile-aligned loads.
_R_WQKV = 0               # rows [0,32)   cols [0,96) : fused (D, 3D) QKV, cols [q|k|v][head][dk]
_R_WO = D_MODEL           # rows [32,64)  cols [0,32) : (D, D) output projection
_R_W1 = 2 * D_MODEL       # rows [64,96)  cols [0,64) : (D, D_FF)
_R_W2 = 3 * D_MODEL       # rows [96,160) cols [0,32) : (D_FF, D)
_W_ROWS = 3 * D_MODEL + D_FF


def _slab_to_rows(slab, d):
    """(R, 128) lane-dense slab -> (R*128/d, d) rows using only lane slices and
    leading-dim stacks/reshapes (no lane-width-changing reshape)."""
    g = LANES // d
    return jnp.stack([slab[:, i * d:(i + 1) * d] for i in range(g)],
                     axis=1).reshape(-1, d)


def _rows_to_slab(rows):
    """(M, d) rows -> (M*d/128, 128) lane-dense slab (inverse of _slab_to_rows)."""
    m, d = rows.shape
    g = LANES // d
    r3 = rows.reshape(m // g, g, d)
    return jnp.concatenate([r3[:, i, :] for i in range(g)], axis=-1)


def encoder_kernel(x_ref, mask_ref, w_ref, vec_ref, o_ref):
    B, S = mask_ref.shape
    D, H, DK, F = D_MODEL, N_HEADS, D_K, D_FF
    M = B * S                       # token rows
    N = B * H                       # (batch, head) pairs

    # lane-dense (M*D/128, 128) input slab -> (tokens, d_model) working layout
    x = _slab_to_rows(x_ref[...].astype(jnp.float32), D)            # (M, D)

    inv_sqrt_dk = jnp.float32(1.0 / math.sqrt(DK))

    # Additive attention bias, computed ONCE per call (not per layer / head):
    # 0 where the key is visible, -1e9 where masked.  After softmax this is
    # identical to the reference masked_fill for any query row that sees at
    # least one visible key (asserted at the wrapper level).
    m = mask_ref[...].astype(jnp.float32)                            # (B, S)
    bias = (m - 1.0) * jnp.float32(1e9)
    bias_n = jnp.broadcast_to(bias[:, None, None, :], (B, H, 1, S)).reshape(N, 1, S)

    def layer_norm(z, a, b):
        # annotated_transformer.LayerNorm: a*(z-mean)/(std+eps)+b, unbiased std.
        # Exact reciprocal here: the eps=1e-6 semantics would be swamped by the
        # EUP approximate reciprocal (review correctness note).
        mean = jnp.mean(z, axis=-1, keepdims=True)
        var = jnp.sum((z - mean) ** 2, axis=-1, keepdims=True) * jnp.float32(1.0 / (D - 1))
        inv = 1.0 / (jnp.sqrt(var) + jnp.float32(EPS))
        return a * (z - mean) * inv + b

    for l in range(N_LAYERS):                 # static unroll over the stack
        # ---- per-layer parameters: static, tile-aligned slices of 2 slabs ----
        wqkv = w_ref[l, _R_WQKV:_R_WQKV + D, 0:3 * D]                # (D, 3D) bf16
        wo = w_ref[l, _R_WO:_R_WO + D, 0:D]                          # (D, D)  bf16
        w1 = w_ref[l, _R_W1:_R_W1 + D, 0:F]                          # (D, F)  bf16
        w2 = w_ref[l, _R_W2:_R_W2 + F, 0:D]                          # (F, D)  bf16
        bo = vec_ref[l, 0:1, 0:D]
        b1 = vec_ref[l, 1:2, 0:F]
        b2 = vec_ref[l, 2:3, 0:D]
        ln1a, ln1b = vec_ref[l, 3:4, 0:D], vec_ref[l, 4:5, 0:D]
        ln2a, ln2b = vec_ref[l, 5:6, 0:D], vec_ref[l, 6:7, 0:D]

        # ---- sublayer 0: multi-head self-attention (pre-norm + residual) ----
        xn = layer_norm(x, ln1a, ln1b)                               # (M, D) f32
        # ONE shared-weight QKV projection for all tokens and heads on the MXU
        # (bf16 operands, f32 accumulation).
        qkv = jnp.dot(xn.astype(jnp.bfloat16), wqkv,
                      preferred_element_type=jnp.float32)            # (M, 3D)
        qkv3 = qkv.reshape(B, S, 3 * D)

        def split_heads(off):
            # (B, S, .) -> (B*H, S, DK) via leading-dim stacks/reshapes plus
            # DK-wide lane slices (sub-vreg copies, inherent to DK=8 heads;
            # no weight/activation replication, no extra MXU work).
            heads = [qkv3[:, :, off + h * DK: off + (h + 1) * DK] for h in range(H)]
            return jnp.stack(heads, axis=1).reshape(N, S, DK)

        q = split_heads(0)
        k = split_heads(D)
        v = split_heads(2 * D)

        # batched-over-(batch*head) attention; the tiny score math stays in f32.
        scores = jnp.einsum('nqd,nkd->nqk', q, k,
                            preferred_element_type=jnp.float32) * inv_sqrt_dk + bias_n
        scores = scores - jnp.max(scores, axis=-1, keepdims=True)
        p = jnp.exp(scores)
        # approx reciprocal (EUP slot): error << downstream bf16 matmul rounding.
        p = p * pl.reciprocal(jnp.sum(p, axis=-1, keepdims=True), approx=True)
        ctx = jnp.einsum('nqk,nkd->nqd', p, v,
                         preferred_element_type=jnp.float32)          # (N, S, DK)

        # concat heads back to (B*S, H*DK) and apply Wo as ONE matmul
        # (no per-head projection, no head-sum loop).
        ctx4 = ctx.reshape(B, H, S, DK)
        ctx_bs = jnp.concatenate([ctx4[:, h] for h in range(H)], axis=-1)   # (B, S, D)
        attn = jnp.dot(ctx_bs.reshape(M, D).astype(jnp.bfloat16), wo,
                       preferred_element_type=jnp.float32) + bo
        x = x + attn
        # TODO(synk): dropout omitted (identity in eval mode)

        # ---- sublayer 1: position-wise feed-forward (pre-norm + residual) ----
        xn = layer_norm(x, ln2a, ln2b)
        h1 = jnp.dot(xn.astype(jnp.bfloat16), w1,
                     preferred_element_type=jnp.float32) + b1
        h1 = jnp.maximum(h1, 0.0)
        ff = jnp.dot(h1.astype(jnp.bfloat16), w2,
                     preferred_element_type=jnp.float32) + b2
        x = x + ff

    # ---- final Encoder LayerNorm, stored as a lane-dense (M*D/128, 128) slab ----
    y = layer_norm(x, vec_ref[N_LAYERS, 0:1, 0:D], vec_ref[N_LAYERS, 1:2, 0:D])
    o_ref[...] = _rows_to_slab(y).astype(o_ref.dtype)


def pack_params(p):
    """Pack the 18 PyTorch-style parameter arrays into 2 lane-dense slabs."""
    L, D, F = N_LAYERS, D_MODEL, D_FF

    # --- bf16 weight slab: (L, 160, 128), un-replicated, tile-aligned blocks ---
    w = jnp.zeros((L, _W_ROWS, LANES), jnp.float32)
    wqkv = jnp.concatenate([p["wq"], p["wk"], p["wv"]], axis=-1)     # (L, D, 3D)
    w = w.at[:, _R_WQKV:_R_WQKV + D, 0:3 * D].set(wqkv)
    w = w.at[:, _R_WO:_R_WO + D, 0:D].set(p["wo"])
    w = w.at[:, _R_W1:_R_W1 + D, 0:F].set(p["w1"])
    w = w.at[:, _R_W2:_R_W2 + F, 0:D].set(p["w2"])
    w = w.astype(jnp.bfloat16)

    # --- f32 vector slab: biases + LayerNorm params; row L holds the final norm ---
    vecs = jnp.zeros((L + 1, 8, LANES), jnp.float32)
    vecs = vecs.at[:L, 0, 0:D].set(p["bo"])
    vecs = vecs.at[:L, 1, 0:F].set(p["b1"])
    vecs = vecs.at[:L, 2, 0:D].set(p["b2"])
    vecs = vecs.at[:L, 3, 0:D].set(p["ln1a"])
    vecs = vecs.at[:L, 4, 0:D].set(p["ln1b"])
    vecs = vecs.at[:L, 5, 0:D].set(p["ln2a"])
    vecs = vecs.at[:L, 6, 0:D].set(p["ln2b"])
    vecs = vecs.at[L, 0, 0:D].set(p["fa"])
    vecs = vecs.at[L, 1, 0:D].set(p["fb"])
    return {"w": w, "vecs": vecs}


def encoder_forward(x, mask, packed):
    B, S, D = x.shape
    assert (B * S * D) % LANES == 0
    x_slab = x.reshape(B * S * D // LANES, LANES)      # free: contiguous relabel
    mask2d = mask.reshape(B, S).astype(jnp.float32)

    flops_layer = (2 * B * S * D * 3 * D               # QKV projection
                   + 2 * B * N_HEADS * S * S * D_K * 2  # scores + ctx
                   + 2 * B * S * D * D                 # output projection
                   + 2 * B * S * D * D_FF * 2)         # feed-forward
    cost = pl.CostEstimate(
        flops=N_LAYERS * flops_layer,
        transcendentals=N_LAYERS * B * N_HEADS * S * S,  # softmax exps
        bytes_accessed=(x_slab.size * 4 + mask2d.size * 4
                        + packed["w"].size * 2 + packed["vecs"].size * 4
                        + B * S * D * 4))

    vmem = pltpu.MemorySpace.VMEM
    # Single kernel invocation (no grid): at B=2, S=8 the whole problem is a
    # few vregs and a grid would only add ~0.35us/step overhead.  For large
    # B/S on v7x, reintroduce a leading grid axis with
    # dimension_semantics=("parallel",) to split work across the 2 TensorCores.
    out_slab = pl.pallas_call(
        encoder_kernel,
        out_shape=jax.ShapeDtypeStruct((B * S * D // LANES, LANES), x.dtype),
        in_specs=[pl.BlockSpec(memory_space=vmem)] * 4,
        out_specs=pl.BlockSpec(memory_space=vmem),
        cost_estimate=cost,
    )(x_slab, mask2d, packed["w"], packed["vecs"])
    return out_slab.reshape(B, S, D)


def init_params(key):
    ks = jax.random.split(key, 6)

    def lin_w(k, shape, fan_in):
        return jax.random.normal(k, shape, jnp.float32) / math.sqrt(fan_in)

    p = {}
    p["wq"] = lin_w(ks[0], (N_LAYERS, D_MODEL, D_MODEL), D_MODEL)
    p["wk"] = lin_w(ks[1], (N_LAYERS, D_MODEL, D_MODEL), D_MODEL)
    p["wv"] = lin_w(ks[2], (N_LAYERS, D_MODEL, D_MODEL), D_MODEL)
    p["wo"] = lin_w(ks[3], (N_LAYERS, D_MODEL, D_MODEL), D_MODEL)
    p["bq"] = jnp.zeros((N_LAYERS, D_MODEL), jnp.float32)
    p["bk"] = jnp.zeros((N_LAYERS, D_MODEL), jnp.float32)
    p["bv"] = jnp.zeros((N_LAYERS, D_MODEL), jnp.float32)
    p["bo"] = jnp.zeros((N_LAYERS, D_MODEL), jnp.float32)
    p["w1"] = lin_w(ks[4], (N_LAYERS, D_MODEL, D_FF), D_MODEL)
    p["b1"] = jnp.zeros((N_LAYERS, D_FF), jnp.float32)
    p["w2"] = lin_w(ks[5], (N_LAYERS, D_FF, D_MODEL), D_FF)
    p["b2"] = jnp.zeros((N_LAYERS, D_MODEL), jnp.float32)
    p["ln1a"] = jnp.ones((N_LAYERS, D_MODEL), jnp.float32)
    p["ln1b"] = jnp.zeros((N_LAYERS, D_MODEL), jnp.float32)
    p["ln2a"] = jnp.ones((N_LAYERS, D_MODEL), jnp.float32)
    p["ln2b"] = jnp.zeros((N_LAYERS, D_MODEL), jnp.float32)
    p["fa"] = jnp.ones((D_MODEL,), jnp.float32)
    p["fb"] = jnp.zeros((D_MODEL,), jnp.float32)
    return p


if __name__ == "__main__":
    root = jax.random.PRNGKey(0)
    kx, kp = jax.random.split(root)
    x = jax.random.normal(kx, (BATCH, SEQ, D_MODEL), jnp.float32)
    mask = jnp.ones((BATCH, 1, SEQ), jnp.float32)
    mask = mask.at[1, 0, 6:].set(0.0)   # pad out last 2 positions of batch 1
    # additive-bias formulation assumes every query sees >=1 visible key
    assert float(jnp.min(jnp.sum(mask, axis=-1))) > 0

    params = init_params(kp)
    packed = pack_params(params)

    out = encoder_forward(x, mask, packed)
    jax.block_until_ready(out)
    assert out.shape == (BATCH, SEQ, D_MODEL)
    print("KERNEL_OK")
</pallas_src>

<mosaic_0001>
module attributes {stable_mosaic.version = 11 : i64} {
  func.func @encoder_kernel(%arg0: memref<4x128xf32, #tpu.memory_space<vmem>>, %arg1: memref<2x8xf32, #tpu.memory_space<vmem>>, %arg2: memref<2x160x128xbf16, #tpu.memory_space<vmem>>, %arg3: memref<3x8x128xf32, #tpu.memory_space<vmem>>, %arg4: memref<4x128xf32, #tpu.memory_space<vmem>>) attributes {dimension_semantics = [], scalar_prefetch = 0 : i64, scratch_operands = 0 : i64, tpu.core_type = #tpu.core_type<tc>} {
    %c0 = arith.constant 0 : index
    %c0_0 = arith.constant 0 : index
    %0 = vector.load %arg0[%c0, %c0_0] : memref<4x128xf32, #tpu.memory_space<vmem>>, vector<4x128xf32>
    %1 = vector.extract_strided_slice %0 {offsets = [0, 0], sizes = [4, 32], strides = [1, 1]} : vector<4x128xf32> to vector<4x32xf32>
    %2 = vector.extract_strided_slice %0 {offsets = [0, 32], sizes = [4, 32], strides = [1, 1]} : vector<4x128xf32> to vector<4x32xf32>
    %3 = vector.extract_strided_slice %0 {offsets = [0, 64], sizes = [4, 32], strides = [1, 1]} : vector<4x128xf32> to vector<4x32xf32>
    %4 = vector.extract_strided_slice %0 {offsets = [0, 96], sizes = [4, 32], strides = [1, 1]} : vector<4x128xf32> to vector<4x32xf32>
    %5 = vector.shape_cast %1 : vector<4x32xf32> to vector<4x1x32xf32>
    %6 = vector.shape_cast %2 : vector<4x32xf32> to vector<4x1x32xf32>
    %7 = vector.shape_cast %3 : vector<4x32xf32> to vector<4x1x32xf32>
    %8 = vector.shape_cast %4 : vector<4x32xf32> to vector<4x1x32xf32>
    %9 = tpu.concatenate %5, %6, %7, %8 in 1 : vector<4x1x32xf32>, vector<4x1x32xf32>, vector<4x1x32xf32>, vector<4x1x32xf32> -> vector<4x4x32xf32>
    %10 = vector.shape_cast %9 : vector<4x4x32xf32> to vector<16x32xf32>
    %c0_1 = arith.constant 0 : index
    %c0_2 = arith.constant 0 : index
    %11 = vector.load %arg1[%c0_1, %c0_2] : memref<2x8xf32, #tpu.memory_space<vmem>>, vector<2x8xf32>
    %cst = arith.constant 1.000000e+00 : f32
    %12 = vector.broadcast %cst : f32 to vector<2x8xf32>
    %13 = arith.subf %11, %12 : vector<2x8xf32>
    %cst_3 = arith.constant 1.000000e+09 : f32
    %14 = vector.broadcast %cst_3 : f32 to vector<2x8xf32>
    %15 = arith.mulf %13, %14 : vector<2x8xf32>
    %16 = vector.shape_cast %15 : vector<2x8xf32> to vector<2x1x1x8xf32>
    %17 = vector.shape_cast %16 : vector<2x1x1x8xf32> to vector<2x1x1x8xf32>
    %18 = vector.broadcast %17 : vector<2x1x1x8xf32> to vector<2x4x1x8xf32>
    %19 = vector.shape_cast %18 : vector<2x4x1x8xf32> to vector<8x1x8xf32>
    %c0_4 = arith.constant 0 : index
    %c0_5 = arith.constant 0 : index
    %c0_6 = arith.constant 0 : index
    %20 = vector.load %arg2[%c0_4, %c0_5, %c0_6] : memref<2x160x128xbf16, #tpu.memory_space<vmem>>, vector<1x32x96xbf16>
    %21 = vector.shape_cast %20 : vector<1x32x96xbf16> to vector<32x96xbf16>
    %c0_7 = arith.constant 0 : index
    %c32 = arith.constant 32 : index
    %c0_8 = arith.constant 0 : index
    %22 = vector.load %arg2[%c0_7, %c32, %c0_8] : memref<2x160x128xbf16, #tpu.memory_space<vmem>>, vector<1x32x32xbf16>
    %23 = vector.shape_cast %22 : vector<1x32x32xbf16> to vector<32x32xbf16>
    %c0_9 = arith.constant 0 : index
    %c64 = arith.constant 64 : index
    %c0_10 = arith.constant 0 : index
    %24 = vector.load %arg2[%c0_9, %c64, %c0_10] : memref<2x160x128xbf16, #tpu.memory_space<vmem>>, vector<1x32x64xbf16>
    %25 = vector.shape_cast %24 : vector<1x32x64xbf16> to vector<32x64xbf16>
    %c0_11 = arith.constant 0 : index
    %c96 = arith.constant 96 : index
    %c0_12 = arith.constant 0 : index
    %26 = vector.load %arg2[%c0_11, %c96, %c0_12] : memref<2x160x128xbf16, #tpu.memory_space<vmem>>, vector<1x64x32xbf16>
    %27 = vector.shape_cast %26 : vector<1x64x32xbf16> to vector<64x32xbf16>
    %c0_13 = arith.constant 0 : index
    %c0_14 = arith.constant 0 : index
    %c0_15 = arith.constant 0 : index
    %28 = vector.load %arg3[%c0_13, %c0_14, %c0_15] : memref<3x8x128xf32, #tpu.memory_space<vmem>>, vector<1x1x32xf32>
    %29 = vector.shape_cast %28 : vector<1x1x32xf32> to vector<1x32xf32>
    %c0_16 = arith.constant 0 : index
    %c1 = arith.constant 1 : index
    %c0_17 = arith.constant 0 : index
    %30 = vector.load %arg3[%c0_16, %c1, %c0_17] : memref<3x8x128xf32, #tpu.memory_space<vmem>>, vector<1x1x64xf32>
    %31 = vector.shape_cast %30 : vector<1x1x64xf32> to vector<1x64xf32>
    %c0_18 = arith.constant 0 : index
    %c2 = arith.constant 2 : index
    %c0_19 = arith.constant 0 : index
    %32 = vector.load %arg3[%c0_18, %c2, %c0_19] : memref<3x8x128xf32, #tpu.memory_space<vmem>>, vector<1x1x32xf32>
    %33 = vector.shape_cast %32 : vector<1x1x32xf32> to vector<1x32xf32>
    %c0_20 = arith.constant 0 : index
    %c3 = arith.constant 3 : index
    %c0_21 = arith.constant 0 : index
    %34 = vector.load %arg3[%c0_20, %c3, %c0_21] : memref<3x8x128xf32, #tpu.memory_space<vmem>>, vector<1x1x32xf32>
    %35 = vector.shape_cast %34 : vector<1x1x32xf32> to vector<1x32xf32>
    %c0_22 = arith.constant 0 : index
    %c4 = arith.constant 4 : index
    %c0_23 = arith.constant 0 : index
    %36 = vector.load %arg3[%c0_22, %c4, %c0_23] : memref<3x8x128xf32, #tpu.memory_space<vmem>>, vector<1x1x32xf32>
    %37 = vector.shape_cast %36 : vector<1x1x32xf32> to vector<1x32xf32>
    %c0_24 = arith.constant 0 : index
    %c5 = arith.constant 5 : index
    %c0_25 = arith.constant 0 : index
    %38 = vector.load %arg3[%c0_24, %c5, %c0_25] : memref<3x8x128xf32, #tpu.memory_space<vmem>>, vector<1x1x32xf32>
    %39 = vector.shape_cast %38 : vector<1x1x32xf32> to vector<1x32xf32>
    %c0_26 = arith.constant 0 : index
    %c6 = arith.constant 6 : index
    %c0_27 = arith.constant 0 : index
    %40 = vector.load %arg3[%c0_26, %c6, %c0_27] : memref<3x8x128xf32, #tpu.memory_space<vmem>>, vector<1x1x32xf32>
    %41 = vector.shape_cast %40 : vector<1x1x32xf32> to vector<1x32xf32>
    %cst_28 = arith.constant dense<0.000000e+00> : vector<16xf32>
    %42 = vector.multi_reduction <add>, %10, %cst_28 [1] : vector<16x32xf32> to vector<16xf32>
    %43 = vector.shape_cast %42 : vector<16xf32> to vector<16x1xf32>
    %cst_29 = arith.constant 3.200000e+01 : f32
    %44 = vector.broadcast %cst_29 : f32 to vector<16x1xf32>
    %45 = arith.divf %43, %44 : vector<16x1xf32>
    %46 = vector.broadcast %45 : vector<16x1xf32> to vector<16x32xf32>
    %47 = arith.subf %10, %46 : vector<16x32xf32>
    %48 = arith.mulf %47, %47 : vector<16x32xf32>
    %cst_30 = arith.constant dense<0.000000e+00> : vector<16xf32>
    %49 = vector.multi_reduction <add>, %48, %cst_30 [1] : vector<16x32xf32> to vector<16xf32>
    %50 = vector.shape_cast %49 : vector<16xf32> to vector<16x1xf32>
    %cst_31 = arith.constant 0.0322580636 : f32
    %51 = vector.broadcast %cst_31 : f32 to vector<16x1xf32>
    %52 = arith.mulf %50, %51 : vector<16x1xf32>
    %53 = math.sqrt %52 : vector<16x1xf32>
    %cst_32 = arith.constant 9.99999997E-7 : f32
    %54 = vector.broadcast %cst_32 : f32 to vector<16x1xf32>
    %55 = arith.addf %53, %54 : vector<16x1xf32>
    %cst_33 = arith.constant 1.000000e+00 : f32
    %56 = vector.broadcast %cst_33 : f32 to vector<16x1xf32>
    %57 = arith.divf %56, %55 : vector<16x1xf32>
    %58 = vector.broadcast %45 : vector<16x1xf32> to vector<16x32xf32>
    %59 = arith.subf %10, %58 : vector<16x32xf32>
    %60 = vector.broadcast %35 : vector<1x32xf32> to vector<16x32xf32>
    %61 = arith.mulf %60, %59 : vector<16x32xf32>
    %62 = vector.broadcast %57 : vector<16x1xf32> to vector<16x32xf32>
    %63 = arith.mulf %61, %62 : vector<16x32xf32>
    %64 = vector.broadcast %37 : vector<1x32xf32> to vector<16x32xf32>
    %65 = arith.addf %63, %64 : vector<16x32xf32>
    %66 = arith.truncf %65 : vector<16x32xf32> to vector<16x32xbf16>
    %cst_34 = arith.constant dense<0.000000e+00> : vector<16x96xf32>
    %67 = tpu.matmul %66, %21, %cst_34 {dimension_numbers = #tpu.dot_dimension_numbers<[1], [0], [0], [1], [0, 0, 1, 1], [], []>} : vector<16x32xbf16>, vector<32x96xbf16>, vector<16x96xf32> -> vector<16x96xf32>
    %68 = vector.shape_cast %67 : vector<16x96xf32> to vector<2x8x96xf32>
    %69 = vector.extract_strided_slice %68 {offsets = [0, 0, 0], sizes = [2, 8, 8], strides = [1, 1, 1]} : vector<2x8x96xf32> to vector<2x8x8xf32>
    %70 = vector.extract_strided_slice %68 {offsets = [0, 0, 8], sizes = [2, 8, 8], strides = [1, 1, 1]} : vector<2x8x96xf32> to vector<2x8x8xf32>
    %71 = vector.extract_strided_slice %68 {offsets = [0, 0, 16], sizes = [2, 8, 8], strides = [1, 1, 1]} : vector<2x8x96xf32> to vector<2x8x8xf32>
    %72 = vector.extract_strided_slice %68 {offsets = [0, 0, 24], sizes = [2, 8, 8], strides = [1, 1, 1]} : vector<2x8x96xf32> to vector<2x8x8xf32>
    %73 = vector.shape_cast %69 : vector<2x8x8xf32> to vector<2x1x8x8xf32>
    %74 = vector.shape_cast %70 : vector<2x8x8xf32> to vector<2x1x8x8xf32>
    %75 = vector.shape_cast %71 : vector<2x8x8xf32> to vector<2x1x8x8xf32>
    %76 = vector.shape_cast %72 : vector<2x8x8xf32> to vector<2x1x8x8xf32>
    %77 = tpu.concatenate %73, %74, %75, %76 in 1 : vector<2x1x8x8xf32>, vector<2x1x8x8xf32>, vector<2x1x8x8xf32>, vector<2x1x8x8xf32> -> vector<2x4x8x8xf32>
    %78 = vector.shape_cast %77 : vector<2x4x8x8xf32> to vector<8x8x8xf32>
    %79 = vector.extract_strided_slice %68 {offsets = [0, 0, 32], sizes = [2, 8, 8], strides = [1, 1, 1]} : vector<2x8x96xf32> to vector<2x8x8xf32>
    %80 = vector.extract_strided_slice %68 {offsets = [0, 0, 40], sizes = [2, 8, 8], strides = [1, 1, 1]} : vector<2x8x96xf32> to vector<2x8x8xf32>
    %81 = vector.extract_strided_slice %68 {offsets = [0, 0, 48], sizes = [2, 8, 8], strides = [1, 1, 1]} : vector<2x8x96xf32> to vector<2x8x8xf32>
    %82 = vector.extract_strided_slice %68 {offsets = [0, 0, 56], sizes = [2, 8, 8], strides = [1, 1, 1]} : vector<2x8x96xf32> to vector<2x8x8xf32>
    %83 = vector.shape_cast %79 : vector<2x8x8xf32> to vector<2x1x8x8xf32>
    %84 = vector.shape_cast %80 : vector<2x8x8xf32> to vector<2x1x8x8xf32>
    %85 = vector.shape_cast %81 : vector<2x8x8xf32> to vector<2x1x8x8xf32>
    %86 = vector.shape_cast %82 : vector<2x8x8xf32> to vector<2x1x8x8xf32>
    %87 = tpu.concatenate %83, %84, %85, %86 in 1 : vector<2x1x8x8xf32>, vector<2x1x8x8xf32>, vector<2x1x8x8xf32>, vector<2x1x8x8xf32> -> vector<2x4x8x8xf32>
    %88 = vector.shape_cast %87 : vector<2x4x8x8xf32> to vector<8x8x8xf32>
    %89 = vector.extract_strided_slice %68 {offsets = [0, 0, 64], sizes = [2, 8, 8], strides = [1, 1, 1]} : vector<2x8x96xf32> to vector<2x8x8xf32>
    %90 = vector.extract_strided_slice %68 {offsets = [0, 0, 72], sizes = [2, 8, 8], strides = [1, 1, 1]} : vector<2x8x96xf32> to vector<2x8x8xf32>
    %91 = vector.extract_strided_slice %68 {offsets = [0, 0, 80], sizes = [2, 8, 8], strides = [1, 1, 1]} : vector<2x8x96xf32> to vector<2x8x8xf32>
    %92 = vector.extract_strided_slice %68 {offsets = [0, 0, 88], sizes = [2, 8, 8], strides = [1, 1, 1]} : vector<2x8x96xf32> to vector<2x8x8xf32>
    %93 = vector.shape_cast %89 : vector<2x8x8xf32> to vector<2x1x8x8xf32>
    %94 = vector.shape_cast %90 : vector<2x8x8xf32> to vector<2x1x8x8xf32>
    %95 = vector.shape_cast %91 : vector<2x8x8xf32> to vector<2x1x8x8xf32>
    %96 = vector.shape_cast %92 : vector<2x8x8xf32> to vector<2x1x8x8xf32>
    %97 = tpu.concatenate %93, %94, %95, %96 in 1 : vector<2x1x8x8xf32>, vector<2x1x8x8xf32>, vector<2x1x8x8xf32>, vector<2x1x8x8xf32> -> vector<2x4x8x8xf32>
    %98 = vector.shape_cast %97 : vector<2x4x8x8xf32> to vector<8x8x8xf32>
    "tpu.trace_start"() <{level = 10 : i32, message = "nqd,nkd->nqk"}> : () -> ()
    %cst_35 = arith.constant dense<0.000000e+00> : vector<8x8x8xf32>
    %99 = tpu.matmul %78, %88, %cst_35 {dimension_numbers = #tpu.dot_dimension_numbers<[2], [2], [1], [1], [0, 0, 0, 1, 1, 1], [0], [0]>} : vector<8x8x8xf32>, vector<8x8x8xf32>, vector<8x8x8xf32> -> vector<8x8x8xf32>
    "tpu.trace_stop"() : () -> ()
    %cst_36 = arith.constant 0.353553385 : f32
    %100 = vector.broadcast %cst_36 : f32 to vector<8x8x8xf32>
    %101 = arith.mulf %99, %100 : vector<8x8x8xf32>
    %102 = vector.broadcast %19 : vector<8x1x8xf32> to vector<8x8x8xf32>
    %103 = arith.addf %101, %102 : vector<8x8x8xf32>
    %cst_37 = arith.constant dense<0xFF800000> : vector<8x8xf32>
    %104 = vector.multi_reduction <maximumf>, %103, %cst_37 [2] : vector<8x8x8xf32> to vector<8x8xf32>
    %105 = vector.shape_cast %104 : vector<8x8xf32> to vector<8x8x1xf32>
    %106 = vector.broadcast %105 : vector<8x8x1xf32> to vector<8x8x8xf32>
    %107 = arith.subf %103, %106 : vector<8x8x8xf32>
    %108 = math.exp %107 : vector<8x8x8xf32>
    %cst_38 = arith.constant dense<0.000000e+00> : vector<8x8xf32>
    %109 = vector.multi_reduction <add>, %108, %cst_38 [2] : vector<8x8x8xf32> to vector<8x8xf32>
    %110 = vector.shape_cast %109 : vector<8x8xf32> to vector<8x8x1xf32>
    %111 = tpu.reciprocal %110 {approx = true} : vector<8x8x1xf32> -> vector<8x8x1xf32>
    %112 = vector.broadcast %111 : vector<8x8x1xf32> to vector<8x8x8xf32>
    %113 = arith.mulf %108, %112 : vector<8x8x8xf32>
    "tpu.trace_start"() <{level = 10 : i32, message = "nqk,nkd->nqd"}> : () -> ()
    %cst_39 = arith.constant dense<0.000000e+00> : vector<8x8x8xf32>
    %114 = tpu.matmul %113, %98, %cst_39 {dimension_numbers = #tpu.dot_dimension_numbers<[2], [1], [1], [2], [0, 0, 0, 1, 1, 2], [0], [0]>} : vector<8x8x8xf32>, vector<8x8x8xf32>, vector<8x8x8xf32> -> vector<8x8x8xf32>
    "tpu.trace_stop"() : () -> ()
    %115 = vector.shape_cast %114 : vector<8x8x8xf32> to vector<2x4x8x8xf32>
    %116 = vector.extract_strided_slice %115 {offsets = [0, 0, 0, 0], sizes = [2, 1, 8, 8], strides = [1, 1, 1, 1]} : vector<2x4x8x8xf32> to vector<2x1x8x8xf32>
    %117 = vector.shape_cast %116 : vector<2x1x8x8xf32> to vector<2x8x8xf32>
    %118 = vector.extract_strided_slice %115 {offsets = [0, 1, 0, 0], sizes = [2, 1, 8, 8], strides = [1, 1, 1, 1]} : vector<2x4x8x8xf32> to vector<2x1x8x8xf32>
    %119 = vector.shape_cast %118 : vector<2x1x8x8xf32> to vector<2x8x8xf32>
    %120 = vector.extract_strided_slice %115 {offsets = [0, 2, 0, 0], sizes = [2, 1, 8, 8], strides = [1, 1, 1, 1]} : vector<2x4x8x8xf32> to vector<2x1x8x8xf32>
    %121 = vector.shape_cast %120 : vector<2x1x8x8xf32> to vector<2x8x8xf32>
    %122 = vector.extract_strided_slice %115 {offsets = [0, 3, 0, 0], sizes = [2, 1, 8, 8], strides = [1, 1, 1, 1]} : vector<2x4x8x8xf32> to vector<2x1x8x8xf32>
    %123 = vector.shape_cast %122 : vector<2x1x8x8xf32> to vector<2x8x8xf32>
    %124 = tpu.concatenate %117, %119, %121, %123 in 2 : vector<2x8x8xf32>, vector<2x8x8xf32>, vector<2x8x8xf32>, vector<2x8x8xf32> -> vector<2x8x32xf32>
    %125 = vector.shape_cast %124 : vector<2x8x32xf32> to vector<16x32xf32>
    %126 = arith.truncf %125 : vector<16x32xf32> to vector<16x32xbf16>
    %cst_40 = arith.constant dense<0.000000e+00> : vector<16x32xf32>
    %127 = tpu.matmul %126, %23, %cst_40 {dimension_numbers = #tpu.dot_dimension_numbers<[1], [0], [0], [1], [0, 0, 1, 1], [], []>} : vector<16x32xbf16>, vector<32x32xbf16>, vector<16x32xf32> -> vector<16x32xf32>
    %128 = vector.broadcast %29 : vector<1x32xf32> to vector<16x32xf32>
    %129 = arith.addf %127, %128 : vector<16x32xf32>
    %130 = arith.addf %10, %129 : vector<16x32xf32>
    %cst_41 = arith.constant dense<0.000000e+00> : vector<16xf32>
    %131 = vector.multi_reduction <add>, %130, %cst_41 [1] : vector<16x32xf32> to vector<16xf32>
    %132 = vector.shape_cast %131 : vector<16xf32> to vector<16x1xf32>
    %cst_42 = arith.constant 3.200000e+01 : f32
    %133 = vector.broadcast %cst_42 : f32 to vector<16x1xf32>
    %134 = arith.divf %132, %133 : vector<16x1xf32>
    %135 = vector.broadcast %134 : vector<16x1xf32> to vector<16x32xf32>
    %136 = arith.subf %130, %135 : vector<16x32xf32>
    %137 = arith.mulf %136, %136 : vector<16x32xf32>
    %cst_43 = arith.constant dense<0.000000e+00> : vector<16xf32>
    %138 = vector.multi_reduction <add>, %137, %cst_43 [1] : vector<16x32xf32> to vector<16xf32>
    %139 = vector.shape_cast %138 : vector<16xf32> to vector<16x1xf32>
    %cst_44 = arith.constant 0.0322580636 : f32
    %140 = vector.broadcast %cst_44 : f32 to vector<16x1xf32>
    %141 = arith.mulf %139, %140 : vector<16x1xf32>
    %142 = math.sqrt %141 : vector<16x1xf32>
    %cst_45 = arith.constant 9.99999997E-7 : f32
    %143 = vector.broadcast %cst_45 : f32 to vector<16x1xf32>
    %144 = arith.addf %142, %143 : vector<16x1xf32>
    %cst_46 = arith.constant 1.000000e+00 : f32
    %145 = vector.broadcast %cst_46 : f32 to vector<16x1xf32>
    %146 = arith.divf %145, %144 : vector<16x1xf32>
    %147 = vector.broadcast %134 : vector<16x1xf32> to vector<16x32xf32>
    %148 = arith.subf %130, %147 : vector<16x32xf32>
    %149 = vector.broadcast %39 : vector<1x32xf32> to vector<16x32xf32>
    %150 = arith.mulf %149, %148 : vector<16x32xf32>
    %151 = vector.broadcast %146 : vector<16x1xf32> to vector<16x32xf32>
    %152 = arith.mulf %150, %151 : vector<16x32xf32>
    %153 = vector.broadcast %41 : vector<1x32xf32> to vector<16x32xf32>
    %154 = arith.addf %152, %153 : vector<16x32xf32>
    %155 = arith.truncf %154 : vector<16x32xf32> to vector<16x32xbf16>
    %cst_47 = arith.constant dense<0.000000e+00> : vector<16x64xf32>
    %156 = tpu.matmul %155, %25, %cst_47 {dimension_numbers = #tpu.dot_dimension_numbers<[1], [0], [0], [1], [0, 0, 1, 1], [], []>} : vector<16x32xbf16>, vector<32x64xbf16>, vector<16x64xf32> -> vector<16x64xf32>
    %157 = vector.broadcast %31 : vector<1x64xf32> to vector<16x64xf32>
    %158 = arith.addf %156, %157 : vector<16x64xf32>
    %cst_48 = arith.constant 0.000000e+00 : f32
    %159 = vector.broadcast %cst_48 : f32 to vector<16x64xf32>
    %160 = arith.maximumf %158, %159 : vector<16x64xf32>
    %161 = arith.truncf %160 : vector<16x64xf32> to vector<16x64xbf16>
    %cst_49 = arith.constant dense<0.000000e+00> : vector<16x32xf32>
    %162 = tpu.matmul %161, %27, %cst_49 {dimension_numbers = #tpu.dot_dimension_numbers<[1], [0], [0], [1], [0, 0, 1, 1], [], []>} : vector<16x64xbf16>, vector<64x32xbf16>, vector<16x32xf32> -> vector<16x32xf32>
    %163 = vector.broadcast %33 : vector<1x32xf32> to vector<16x32xf32>
    %164 = arith.addf %162, %163 : vector<16x32xf32>
    %165 = arith.addf %130, %164 : vector<16x32xf32>
    %c1_50 = arith.constant 1 : index
    %c0_51 = arith.constant 0 : index
    %c0_52 = arith.constant 0 : index
    %166 = vector.load %arg2[%c1_50, %c0_51, %c0_52] : memref<2x160x128xbf16, #tpu.memory_space<vmem>>, vector<1x32x96xbf16>
    %167 = vector.shape_cast %166 : vector<1x32x96xbf16> to vector<32x96xbf16>
    %c1_53 = arith.constant 1 : index
    %c32_54 = arith.constant 32 : index
    %c0_55 = arith.constant 0 : index
    %168 = vector.load %arg2[%c1_53, %c32_54, %c0_55] : memref<2x160x128xbf16, #tpu.memory_space<vmem>>, vector<1x32x32xbf16>
    %169 = vector.shape_cast %168 : vector<1x32x32xbf16> to vector<32x32xbf16>
    %c1_56 = arith.constant 1 : index
    %c64_57 = arith.constant 64 : index
    %c0_58 = arith.constant 0 : index
    %170 = vector.load %arg2[%c1_56, %c64_57, %c0_58] : memref<2x160x128xbf16, #tpu.memory_space<vmem>>, vector<1x32x64xbf16>
    %171 = vector.shape_cast %170 : vector<1x32x64xbf16> to vector<32x64xbf16>
    %c1_59 = arith.constant 1 : index
    %c96_60 = arith.constant 96 : index
    %c0_61 = arith.constant 0 : index
    %172 = vector.load %arg2[%c1_59, %c96_60, %c0_61] : memref<2x160x128xbf16, #tpu.memory_space<vmem>>, vector<1x64x32xbf16>
    %173 = vector.shape_cast %172 : vector<1x64x32xbf16> to vector<64x32xbf16>
    %c1_62 = arith.constant 1 : index
    %c0_63 = arith.constant 0 : index
    %c0_64 = arith.constant 0 : index
    %174 = vector.load %arg3[%c1_62, %c0_63, %c0_64] : memref<3x8x128xf32, #tpu.memory_space<vmem>>, vector<1x1x32xf32>
    %175 = vector.shape_cast %174 : vector<1x1x32xf32> to vector<1x32xf32>
    %c1_65 = arith.constant 1 : index
    %c1_66 = arith.constant 1 : index
    %c0_67 = arith.constant 0 : index
    %176 = vector.load %arg3[%c1_65, %c1_66, %c0_67] : memref<3x8x128xf32, #tpu.memory_space<vmem>>, vector<1x1x64xf32>
    %177 = vector.shape_cast %176 : vector<1x1x64xf32> to vector<1x64xf32>
    %c1_68 = arith.constant 1 : index
    %c2_69 = arith.constant 2 : index
    %c0_70 = arith.constant 0 : index
    %178 = vector.load %arg3[%c1_68, %c2_69, %c0_70] : memref<3x8x128xf32, #tpu.memory_space<vmem>>, vector<1x1x32xf32>
    %179 = vector.shape_cast %178 : vector<1x1x32xf32> to vector<1x32xf32>
    %c1_71 = arith.constant 1 : index
    %c3_72 = arith.constant 3 : index
    %c0_73 = arith.constant 0 : index
    %180 = vector.load %arg3[%c1_71, %c3_72, %c0_73] : memref<3x8x128xf32, #tpu.memory_space<vmem>>, vector<1x1x32xf32>
    %181 = vector.shape_cast %180 : vector<1x1x32xf32> to vector<1x32xf32>
    %c1_74 = arith.constant 1 : index
    %c4_75 = arith.constant 4 : index
    %c0_76 = arith.constant 0 : index
    %182 = vector.load %arg3[%c1_74, %c4_75, %c0_76] : memref<3x8x128xf32, #tpu.memory_space<vmem>>, vector<1x1x32xf32>
    %183 = vector.shape_cast %182 : vector<1x1x32xf32> to vector<1x32xf32>
    %c1_77 = arith.constant 1 : index
    %c5_78 = arith.constant 5 : index
    %c0_79 = arith.constant 0 : index
    %184 = vector.load %arg3[%c1_77, %c5_78, %c0_79] : memref<3x8x128xf32, #tpu.memory_space<vmem>>, vector<1x1x32xf32>
    %185 = vector.shape_cast %184 : vector<1x1x32xf32> to vector<1x32xf32>
    %c1_80 = arith.constant 1 : index
    %c6_81 = arith.constant 6 : index
    %c0_82 = arith.constant 0 : index
    %186 = vector.load %arg3[%c1_80, %c6_81, %c0_82] : memref<3x8x128xf32, #tpu.memory_space<vmem>>, vector<1x1x32xf32>
    %187 = vector.shape_cast %186 : vector<1x1x32xf32> to vector<1x32xf32>
    %cst_83 = arith.constant dense<0.000000e+00> : vector<16xf32>
    %188 = vector.multi_reduction <add>, %165, %cst_83 [1] : vector<16x32xf32> to vector<16xf32>
    %189 = vector.shape_cast %188 : vector<16xf32> to vector<16x1xf32>
    %cst_84 = arith.constant 3.200000e+01 : f32
    %190 = vector.broadcast %cst_84 : f32 to vector<16x1xf32>
    %191 = arith.divf %189, %190 : vector<16x1xf32>
    %192 = vector.broadcast %191 : vector<16x1xf32> to vector<16x32xf32>
    %193 = arith.subf %165, %192 : vector<16x32xf32>
    %194 = arith.mulf %193, %193 : vector<16x32xf32>
    %cst_85 = arith.constant dense<0.000000e+00> : vector<16xf32>
    %195 = vector.multi_reduction <add>, %194, %cst_85 [1] : vector<16x32xf32> to vector<16xf32>
    %196 = vector.shape_cast %195 : vector<16xf32> to vector<16x1xf32>
    %cst_86 = arith.constant 0.0322580636 : f32
    %197 = vector.broadcast %cst_86 : f32 to vector<16x1xf32>
    %198 = arith.mulf %196, %197 : vector<16x1xf32>
    %199 = math.sqrt %198 : vector<16x1xf32>
    %cst_87 = arith.constant 9.99999997E-7 : f32
    %200 = vector.broadcast %cst_87 : f32 to vector<16x1xf32>
    %201 = arith.addf %199, %200 : vector<16x1xf32>
    %cst_88 = arith.constant 1.000000e+00 : f32
    %202 = vector.broadcast %cst_88 : f32 to vector<16x1xf32>
    %203 = arith.divf %202, %201 : vector<16x1xf32>
    %204 = vector.broadcast %191 : vector<16x1xf32> to vector<16x32xf32>
    %205 = arith.subf %165, %204 : vector<16x32xf32>
    %206 = vector.broadcast %181 : vector<1x32xf32> to vector<16x32xf32>
    %207 = arith.mulf %206, %205 : vector<16x32xf32>
    %208 = vector.broadcast %203 : vector<16x1xf32> to vector<16x32xf32>
    %209 = arith.mulf %207, %208 : vector<16x32xf32>
    %210 = vector.broadcast %183 : vector<1x32xf32> to vector<16x32xf32>
    %211 = arith.addf %209, %210 : vector<16x32xf32>
    %212 = arith.truncf %211 : vector<16x32xf32> to vector<16x32xbf16>
    %cst_89 = arith.constant dense<0.000000e+00> : vector<16x96xf32>
    %213 = tpu.matmul %212, %167, %cst_89 {dimension_numbers = #tpu.dot_dimension_numbers<[1], [0], [0], [1], [0, 0, 1, 1], [], []>} : vector<16x32xbf16>, vector<32x96xbf16>, vector<16x96xf32> -> vector<16x96xf32>
    %214 = vector.shape_cast %213 : vector<16x96xf32> to vector<2x8x96xf32>
    %215 = vector.extract_strided_slice %214 {offsets = [0, 0, 0], sizes = [2, 8, 8], strides = [1, 1, 1]} : vector<2x8x96xf32> to vector<2x8x8xf32>
    %216 = vector.extract_strided_slice %214 {offsets = [0, 0, 8], sizes = [2, 8, 8], strides = [1, 1, 1]} : vector<2x8x96xf32> to vector<2x8x8xf32>
    %217 = vector.extract_strided_slice %214 {offsets = [0, 0, 16], sizes = [2, 8, 8], strides = [1, 1, 1]} : vector<2x8x96xf32> to vector<2x8x8xf32>
    %218 = vector.extract_strided_slice %214 {offsets = [0, 0, 24], sizes = [2, 8, 8], strides = [1, 1, 1]} : vector<2x8x96xf32> to vector<2x8x8xf32>
    %219 = vector.shape_cast %215 : vector<2x8x8xf32> to vector<2x1x8x8xf32>
    %220 = vector.shape_cast %216 : vector<2x8x8xf32> to vector<2x1x8x8xf32>
    %221 = vector.shape_cast %217 : vector<2x8x8xf32> to vector<2x1x8x8xf32>
    %222 = vector.shape_cast %218 : vector<2x8x8xf32> to vector<2x1x8x8xf32>
    %223 = tpu.concatenate %219, %220, %221, %222 in 1 : vector<2x1x8x8xf32>, vector<2x1x8x8xf32>, vector<2x1x8x8xf32>, vector<2x1x8x8xf32> -> vector<2x4x8x8xf32>
    %224 = vector.shape_cast %223 : vector<2x4x8x8xf32> to vector<8x8x8xf32>
    %225 = vector.extract_strided_slice %214 {offsets = [0, 0, 32], sizes = [2, 8, 8], strides = [1, 1, 1]} : vector<2x8x96xf32> to vector<2x8x8xf32>
    %226 = vector.extract_strided_slice %214 {offsets = [0, 0, 40], sizes = [2, 8, 8], strides = [1, 1, 1]} : vector<2x8x96xf32> to vector<2x8x8xf32>
    %227 = vector.extract_strided_slice %214 {offsets = [0, 0, 48], sizes = [2, 8, 8], strides = [1, 1, 1]} : vector<2x8x96xf32> to vector<2x8x8xf32>
    %228 = vector.extract_strided_slice %214 {offsets = [0, 0, 56], sizes = [2, 8, 8], strides = [1, 1, 1]} : vector<2x8x96xf32> to vector<2x8x8xf32>
    %229 = vector.shape_cast %225 : vector<2x8x8xf32> to vector<2x1x8x8xf32>
    %230 = vector.shape_cast %226 : vector<2x8x8xf32> to vector<2x1x8x8xf32>
    %231 = vector.shape_cast %227 : vector<2x8x8xf32> to vector<2x1x8x8xf32>
    %232 = vector.shape_cast %228 : vector<2x8x8xf32> to vector<2x1x8x8xf32>
    %233 = tpu.concatenate %229, %230, %231, %232 in 1 : vector<2x1x8x8xf32>, vector<2x1x8x8xf32>, vector<2x1x8x8xf32>, vector<2x1x8x8xf32> -> vector<2x4x8x8xf32>
    %234 = vector.shape_cast %233 : vector<2x4x8x8xf32> to vector<8x8x8xf32>
    %235 = vector.extract_strided_slice %214 {offsets = [0, 0, 64], sizes = [2, 8, 8], strides = [1, 1, 1]} : vector<2x8x96xf32> to vector<2x8x8xf32>
    %236 = vector.extract_strided_slice %214 {offsets = [0, 0, 72], sizes = [2, 8, 8], strides = [1, 1, 1]} : vector<2x8x96xf32> to vector<2x8x8xf32>
    %237 = vector.extract_strided_slice %214 {offsets = [0, 0, 80], sizes = [2, 8, 8], strides = [1, 1, 1]} : vector<2x8x96xf32> to vector<2x8x8xf32>
    %238 = vector.extract_strided_slice %214 {offsets = [0, 0, 88], sizes = [2, 8, 8], strides = [1, 1, 1]} : vector<2x8x96xf32> to vector<2x8x8xf32>
    %239 = vector.shape_cast %235 : vector<2x8x8xf32> to vector<2x1x8x8xf32>
    %240 = vector.shape_cast %236 : vector<2x8x8xf32> to vector<2x1x8x8xf32>
    %241 = vector.shape_cast %237 : vector<2x8x8xf32> to vector<2x1x8x8xf32>
    %242 = vector.shape_cast %238 : vector<2x8x8xf32> to vector<2x1x8x8xf32>
    %243 = tpu.concatenate %239, %240, %241, %242 in 1 : vector<2x1x8x8xf32>, vector<2x1x8x8xf32>, vector<2x1x8x8xf32>, vector<2x1x8x8xf32> -> vector<2x4x8x8xf32>
    %244 = vector.shape_cast %243 : vector<2x4x8x8xf32> to vector<8x8x8xf32>
    "tpu.trace_start"() <{level = 10 : i32, message = "nqd,nkd->nqk"}> : () -> ()
    %cst_90 = arith.constant dense<0.000000e+00> : vector<8x8x8xf32>
    %245 = tpu.matmul %224, %234, %cst_90 {dimension_numbers = #tpu.dot_dimension_numbers<[2], [2], [1], [1], [0, 0, 0, 1, 1, 1], [0], [0]>} : vector<8x8x8xf32>, vector<8x8x8xf32>, vector<8x8x8xf32> -> vector<8x8x8xf32>
    "tpu.trace_stop"() : () -> ()
    %cst_91 = arith.constant 0.353553385 : f32
    %246 = vector.broadcast %cst_91 : f32 to vector<8x8x8xf32>
    %247 = arith.mulf %245, %246 : vector<8x8x8xf32>
    %248 = vector.broadcast %19 : vector<8x1x8xf32> to vector<8x8x8xf32>
    %249 = arith.addf %247, %248 : vector<8x8x8xf32>
    %cst_92 = arith.constant dense<0xFF800000> : vector<8x8xf32>
    %250 = vector.multi_reduction <maximumf>, %249, %cst_92 [2] : vector<8x8x8xf32> to vector<8x8xf32>
    %251 = vector.shape_cast %250 : vector<8x8xf32> to vector<8x8x1xf32>
    %252 = vector.broadcast %251 : vector<8x8x1xf32> to vector<8x8x8xf32>
    %253 = arith.subf %249, %252 : vector<8x8x8xf32>
    %254 = math.exp %253 : vector<8x8x8xf32>
    %cst_93 = arith.constant dense<0.000000e+00> : vector<8x8xf32>
    %255 = vector.multi_reduction <add>, %254, %cst_93 [2] : vector<8x8x8xf32> to vector<8x8xf32>
    %256 = vector.shape_cast %255 : vector<8x8xf32> to vector<8x8x1xf32>
    %257 = tpu.reciprocal %256 {approx = true} : vector<8x8x1xf32> -> vector<8x8x1xf32>
    %258 = vector.broadcast %257 : vector<8x8x1xf32> to vector<8x8x8xf32>
    %259 = arith.mulf %254, %258 : vector<8x8x8xf32>
    "tpu.trace_start"() <{level = 10 : i32, message = "nqk,nkd->nqd"}> : () -> ()
    %cst_94 = arith.constant dense<0.000000e+00> : vector<8x8x8xf32>
    %260 = tpu.matmul %259, %244, %cst_94 {dimension_numbers = #tpu.dot_dimension_numbers<[2], [1], [1], [2], [0, 0, 0, 1, 1, 2], [0], [0]>} : vector<8x8x8xf32>, vector<8x8x8xf32>, vector<8x8x8xf32> -> vector<8x8x8xf32>
    "tpu.trace_stop"() : () -> ()
    %261 = vector.shape_cast %260 : vector<8x8x8xf32> to vector<2x4x8x8xf32>
    %262 = vector.extract_strided_slice %261 {offsets = [0, 0, 0, 0], sizes = [2, 1, 8, 8], strides = [1, 1, 1, 1]} : vector<2x4x8x8xf32> to vector<2x1x8x8xf32>
    %263 = vector.shape_cast %262 : vector<2x1x8x8xf32> to vector<2x8x8xf32>
    %264 = vector.extract_strided_slice %261 {offsets = [0, 1, 0, 0], sizes = [2, 1, 8, 8], strides = [1, 1, 1, 1]} : vector<2x4x8x8xf32> to vector<2x1x8x8xf32>
    %265 = vector.shape_cast %264 : vector<2x1x8x8xf32> to vector<2x8x8xf32>
    %266 = vector.extract_strided_slice %261 {offsets = [0, 2, 0, 0], sizes = [2, 1, 8, 8], strides = [1, 1, 1, 1]} : vector<2x4x8x8xf32> to vector<2x1x8x8xf32>
    %267 = vector.shape_cast %266 : vector<2x1x8x8xf32> to vector<2x8x8xf32>
    %268 = vector.extract_strided_slice %261 {offsets = [0, 3, 0, 0], sizes = [2, 1, 8, 8], strides = [1, 1, 1, 1]} : vector<2x4x8x8xf32> to vector<2x1x8x8xf32>
    %269 = vector.shape_cast %268 : vector<2x1x8x8xf32> to vector<2x8x8xf32>
    %270 = tpu.concatenate %263, %265, %267, %269 in 2 : vector<2x8x8xf32>, vector<2x8x8xf32>, vector<2x8x8xf32>, vector<2x8x8xf32> -> vector<2x8x32xf32>
    %271 = vector.shape_cast %270 : vector<2x8x32xf32> to vector<16x32xf32>
    %272 = arith.truncf %271 : vector<16x32xf32> to vector<16x32xbf16>
    %cst_95 = arith.constant dense<0.000000e+00> : vector<16x32xf32>
    %273 = tpu.matmul %272, %169, %cst_95 {dimension_numbers = #tpu.dot_dimension_numbers<[1], [0], [0], [1], [0, 0, 1, 1], [], []>} : vector<16x32xbf16>, vector<32x32xbf16>, vector<16x32xf32> -> vector<16x32xf32>
    %274 = vector.broadcast %175 : vector<1x32xf32> to vector<16x32xf32>
    %275 = arith.addf %273, %274 : vector<16x32xf32>
    %276 = arith.addf %165, %275 : vector<16x32xf32>
    %cst_96 = arith.constant dense<0.000000e+00> : vector<16xf32>
    %277 = vector.multi_reduction <add>, %276, %cst_96 [1] : vector<16x32xf32> to vector<16xf32>
    %278 = vector.shape_cast %277 : vector<16xf32> to vector<16x1xf32>
    %cst_97 = arith.constant 3.200000e+01 : f32
    %279 = vector.broadcast %cst_97 : f32 to vector<16x1xf32>
    %280 = arith.divf %278, %279 : vector<16x1xf32>
    %281 = vector.broadcast %280 : vector<16x1xf32> to vector<16x32xf32>
    %282 = arith.subf %276, %281 : vector<16x32xf32>
    %283 = arith.mulf %282, %282 : vector<16x32xf32>
    %cst_98 = arith.constant dense<0.000000e+00> : vector<16xf32>
    %284 = vector.multi_reduction <add>, %283, %cst_98 [1] : vector<16x32xf32> to vector<16xf32>
    %285 = vector.shape_cast %284 : vector<16xf32> to vector<16x1xf32>
    %cst_99 = arith.constant 0.0322580636 : f32
    %286 = vector.broadcast %cst_99 : f32 to vector<16x1xf32>
    %287 = arith.mulf %285, %286 : vector<16x1xf32>
    %288 = math.sqrt %287 : vector<16x1xf32>
    %cst_100 = arith.constant 9.99999997E-7 : f32
    %289 = vector.broadcast %cst_100 : f32 to vector<16x1xf32>
    %290 = arith.addf %288, %289 : vector<16x1xf32>
    %cst_101 = arith.constant 1.000000e+00 : f32
    %291 = vector.broadcast %cst_101 : f32 to vector<16x1xf32>
    %292 = arith.divf %291, %290 : vector<16x1xf32>
    %293 = vector.broadcast %280 : vector<16x1xf32> to vector<16x32xf32>
    %294 = arith.subf %276, %293 : vector<16x32xf32>
    %295 = vector.broadcast %185 : vector<1x32xf32> to vector<16x32xf32>
    %296 = arith.mulf %295, %294 : vector<16x32xf32>
    %297 = vector.broadcast %292 : vector<16x1xf32> to vector<16x32xf32>
    %298 = arith.mulf %296, %297 : vector<16x32xf32>
    %299 = vector.broadcast %187 : vector<1x32xf32> to vector<16x32xf32>
    %300 = arith.addf %298, %299 : vector<16x32xf32>
    %301 = arith.truncf %300 : vector<16x32xf32> to vector<16x32xbf16>
    %cst_102 = arith.constant dense<0.000000e+00> : vector<16x64xf32>
    %302 = tpu.matmul %301, %171, %cst_102 {dimension_numbers = #tpu.dot_dimension_numbers<[1], [0], [0], [1], [0, 0, 1, 1], [], []>} : vector<16x32xbf16>, vector<32x64xbf16>, vector<16x64xf32> -> vector<16x64xf32>
    %303 = vector.broadcast %177 : vector<1x64xf32> to vector<16x64xf32>
    %304 = arith.addf %302, %303 : vector<16x64xf32>
    %cst_103 = arith.constant 0.000000e+00 : f32
    %305 = vector.broadcast %cst_103 : f32 to vector<16x64xf32>
    %306 = arith.maximumf %304, %305 : vector<16x64xf32>
    %307 = arith.truncf %306 : vector<16x64xf32> to vector<16x64xbf16>
    %cst_104 = arith.constant dense<0.000000e+00> : vector<16x32xf32>
    %308 = tpu.matmul %307, %173, %cst_104 {dimension_numbers = #tpu.dot_dimension_numbers<[1], [0], [0], [1], [0, 0, 1, 1], [], []>} : vector<16x64xbf16>, vector<64x32xbf16>, vector<16x32xf32> -> vector<16x32xf32>
    %309 = vector.broadcast %179 : vector<1x32xf32> to vector<16x32xf32>
    %310 = arith.addf %308, %309 : vector<16x32xf32>
    %311 = arith.addf %276, %310 : vector<16x32xf32>
    %c2_105 = arith.constant 2 : index
    %c0_106 = arith.constant 0 : index
    %c0_107 = arith.constant 0 : index
    %312 = vector.load %arg3[%c2_105, %c0_106, %c0_107] : memref<3x8x128xf32, #tpu.memory_space<vmem>>, vector<1x1x32xf32>
    %313 = vector.shape_cast %312 : vector<1x1x32xf32> to vector<1x32xf32>
    %c2_108 = arith.constant 2 : index
    %c1_109 = arith.constant 1 : index
    %c0_110 = arith.constant 0 : index
    %314 = vector.load %arg3[%c2_108, %c1_109, %c0_110] : memref<3x8x128xf32, #tpu.memory_space<vmem>>, vector<1x1x32xf32>
    %315 = vector.shape_cast %314 : vector<1x1x32xf32> to vector<1x32xf32>
    %cst_111 = arith.constant dense<0.000000e+00> : vector<16xf32>
    %316 = vector.multi_reduction <add>, %311, %cst_111 [1] : vector<16x32xf32> to vector<16xf32>
    %317 = vector.shape_cast %316 : vector<16xf32> to vector<16x1xf32>
    %cst_112 = arith.constant 3.200000e+01 : f32
    %318 = vector.broadcast %cst_112 : f32 to vector<16x1xf32>
    %319 = arith.divf %317, %318 : vector<16x1xf32>
    %320 = vector.broadcast %319 : vector<16x1xf32> to vector<16x32xf32>
    %321 = arith.subf %311, %320 : vector<16x32xf32>
    %322 = arith.mulf %321, %321 : vector<16x32xf32>
    %cst_113 = arith.constant dense<0.000000e+00> : vector<16xf32>
    %323 = vector.multi_reduction <add>, %322, %cst_113 [1] : vector<16x32xf32> to vector<16xf32>
    %324 = vector.shape_cast %323 : vector<16xf32> to vector<16x1xf32>
    %cst_114 = arith.constant 0.0322580636 : f32
    %325 = vector.broadcast %cst_114 : f32 to vector<16x1xf32>
    %326 = arith.mulf %324, %325 : vector<16x1xf32>
    %327 = math.sqrt %326 : vector<16x1xf32>
    %cst_115 = arith.constant 9.99999997E-7 : f32
    %328 = vector.broadcast %cst_115 : f32 to vector<16x1xf32>
    %329 = arith.addf %327, %328 : vector<16x1xf32>
    %cst_116 = arith.constant 1.000000e+00 : f32
    %330 = vector.broadcast %cst_116 : f32 to vector<16x1xf32>
    %331 = arith.divf %330, %329 : vector<16x1xf32>
    %332 = vector.broadcast %319 : vector<16x1xf32> to vector<16x32xf32>
    %333 = arith.subf %311, %332 : vector<16x32xf32>
    %334 = vector.broadcast %313 : vector<1x32xf32> to vector<16x32xf32>
    %335 = arith.mulf %334, %333 : vector<16x32xf32>
    %336 = vector.broadcast %331 : vector<16x1xf32> to vector<16x32xf32>
    %337 = arith.mulf %335, %336 : vector<16x32xf32>
    %338 = vector.broadcast %315 : vector<1x32xf32> to vector<16x32xf32>
    %339 = arith.addf %337, %338 : vector<16x32xf32>
    %340 = vector.shape_cast %339 : vector<16x32xf32> to vector<4x4x32xf32>
    %341 = vector.extract_strided_slice %340 {offsets = [0, 0, 0], sizes = [4, 1, 32], strides = [1, 1, 1]} : vector<4x4x32xf32> to vector<4x1x32xf32>
    %342 = vector.shape_cast %341 : vector<4x1x32xf32> to vector<4x32xf32>
    %343 = vector.extract_strided_slice %340 {offsets = [0, 1, 0], sizes = [4, 1, 32], strides = [1, 1, 1]} : vector<4x4x32xf32> to vector<4x1x32xf32>
    %344 = vector.shape_cast %343 : vector<4x1x32xf32> to vector<4x32xf32>
    %345 = vector.extract_strided_slice %340 {offsets = [0, 2, 0], sizes = [4, 1, 32], strides = [1, 1, 1]} : vector<4x4x32xf32> to vector<4x1x32xf32>
    %346 = vector.shape_cast %345 : vector<4x1x32xf32> to vector<4x32xf32>
    %347 = vector.extract_strided_slice %340 {offsets = [0, 3, 0], sizes = [4, 1, 32], strides = [1, 1, 1]} : vector<4x4x32xf32> to vector<4x1x32xf32>
    %348 = vector.shape_cast %347 : vector<4x1x32xf32> to vector<4x32xf32>
    %349 = tpu.concatenate %342, %344, %346, %348 in 1 : vector<4x32xf32>, vector<4x32xf32>, vector<4x32xf32>, vector<4x32xf32> -> vector<4x128xf32>
    %c0_117 = arith.constant 0 : index
    %c0_118 = arith.constant 0 : index
    %350 = vector.load %arg4[%c0_117, %c0_118] : memref<4x128xf32, #tpu.memory_space<vmem>>, vector<4x128xf32>
    tpu.vector_store %arg4[%c0_117, %c0_118], %349 {strides = array<i32>} : memref<4x128xf32, #tpu.memory_space<vmem>>, vector<4x128xf32>,
    return
  }
}

</mosaic_0001>

<llo_original>
// kernel: tpu_custom_call.1
$region0: #{tpu_custom_call.1}
  #allocation0 [shape = 'u32[]', space=smem, size = 0x4, offset = 0x4, fixed_abs, tag = 'smem constant byte address 0x4 - core index']
  #allocation1 [shape = 'u32[144,128]{1,0:T(1,128)}', space=vmem, size = 0x12000, scoped, tag = 'internal scratch']
  %s0 = inlined_call_operand.hbm [shape: f32[4,128], index: 0, kind: input, shape index: {}]
  %s1 = inlined_call_operand.vmem [shape: f32[2,8], index: 1, kind: input, shape index: {}]
  %s2 = inlined_call_operand.hbm [shape: bf16[2,160,128], index: 2, kind: input, shape index: {}]
  %s3 = inlined_call_operand.hbm [shape: f32[3,8,128], index: 3, kind: input, shape index: {}]
  %s4 = inlined_call_operand.hbm [shape: f32[4,128], index: 4, kind: output, shape index: {}]
  %s5 = sld [smem:[#allocation0]]
  $region38: #{tpu_custom_call.1} parent=0
    _
  %s7 = ssub.s32 1, %s5
  %s8 = scalar_select 0, %s7, %s5
  $region1: #{tpu_custom_call.1} parent=0
    #allocation2 [shape = 'u8[2048]{0}', space=vmem, size = 0x800, scoped, tag = 'input window, operand 0, single buffered']
    #allocation3 [shape = 's32[1]{0}', space=sflag, size = 0x4, scoped, tag = 'scoped memory for tpu_custom_call.1']
    #allocation4 [shape = 's32[1]{0}', space=sflag, size = 0x4, scoped, tag = 'scoped memory for tpu_custom_call.1']
    #allocation5 [shape = 'u8[81920]{0}', space=vmem, size = 0x14000, scoped, tag = 'input window, operand 2, single buffered']
    #allocation6 [shape = 's32[1]{0}', space=sflag, size = 0x4, scoped, tag = 'scoped memory for tpu_custom_call.1']
    #allocation7 [shape = 'u8[12288]{0}', space=vmem, size = 0x3000, scoped, tag = 'input window, operand 3, single buffered']
    #allocation8 [shape = 'u8[2048]{0}', space=vmem, size = 0x800, scoped, tag = 'output window, operand 0, single buffered']
    %9 = vsyncpa [#allocation3], 0
    %10 = vsyncpa [#allocation6], 0
    %11 = vsyncpa [#allocation4], 0
    // Predicated region
    $region2: #{tpu_custom_call.1} parent=1 // pred_check
      _
    $region3: #{tpu_custom_call.1} parent=1 // pred_check_branch
      %13 = sbr.rel (0) target = $region5
    $region4: #{tpu_custom_call.1} parent=1 // pred_region
      %s15 = ssub.s32 64, 64
      %16 = vsyncadd [#allocation3], %s15
      %s18 = sshll.u32 [#allocation2], 4
      %s19 = int_to_ptr.vmem [resolvable:$true] %s18
      %21 = dma.hbm_to_vmem [thread:$0]  %s0, 64, %s19, [#allocation3]
    $region5: #{tpu_custom_call.1} parent=1 // pred_fallthru
      _
    // Predicated region
    $region6: #{tpu_custom_call.1} parent=1 // pred_check
      _
    $region7: #{tpu_custom_call.1} parent=1 // pred_check_branch
      %23 = sbr.rel (0) target = $region9
    $region8: #{tpu_custom_call.1} parent=1 // pred_region
      _
    $region9: #{tpu_custom_call.1} parent=1 // pred_fallthru
      _
    // Predicated region
    $region10: #{tpu_custom_call.1} parent=1 // pred_check
      _
    $region11: #{tpu_custom_call.1} parent=1 // pred_check_branch
      %25 = sbr.rel (0) target = $region13
    $region12: #{tpu_custom_call.1} parent=1 // pred_region
      %s27 = ssub.s32 2560, 2560
      %28 = vsyncadd [#allocation6], %s27
      %s29 = sshll.u32 [#allocation5], 4
      %s30 = int_to_ptr.vmem [resolvable:$true] %s29
      %35 = dma.hbm_to_vmem [thread:$0]  %s2, 2560, %s30, [#allocation6], 64, 64, 4
    $region13: #{tpu_custom_call.1} parent=1 // pred_fallthru
      _
    // Predicated region
    $region14: #{tpu_custom_call.1} parent=1 // pred_check
      _
    $region15: #{tpu_custom_call.1} parent=1 // pred_check_branch
      %37 = sbr.rel (0) target = $region17
    $region16: #{tpu_custom_call.1} parent=1 // pred_region
      %s39 = ssub.s32 384, 384
      %40 = vsyncadd [#allocation6], %s39
      %s41 = sshll.u32 [#allocation7], 4
      %s42 = int_to_ptr.vmem [resolvable:$true] %s41
      %47 = dma.hbm_to_vmem [thread:$0]  %s3, 384, %s42, [#allocation6], 128, 128, 8
    $region17: #{tpu_custom_call.1} parent=1 // pred_fallthru
      _
    // Predicated region
    $region18: #{tpu_custom_call.1} parent=1 // pred_check
      _
    $region19: #{tpu_custom_call.1} parent=1 // pred_check_branch
      %49 = sbr.rel (0) target = $region21
    $region20: #{tpu_custom_call.1} parent=1 // pred_region
      %50 = dma.done [#allocation3], 64
    $region21: #{tpu_custom_call.1} parent=1 // pred_fallthru
      _
    // Predicated region
    $region22: #{tpu_custom_call.1} parent=1 // pred_check
      _
    $region23: #{tpu_custom_call.1} parent=1 // pred_check_branch
      %52 = sbr.rel (0) target = $region25
    $region24: #{tpu_custom_call.1} parent=1 // pred_region
      %53 = dma.done [#allocation6], 2560
    $region25: #{tpu_custom_call.1} parent=1 // pred_fallthru
      _
    // Predicated region
    $region26: #{tpu_custom_call.1} parent=1 // pred_check
      _
    $region27: #{tpu_custom_call.1} parent=1 // pred_check_branch
      %55 = sbr.rel (0) target = $region29
    $region28: #{tpu_custom_call.1} parent=1 // pred_region
      %56 = dma.done [#allocation6], 384
    $region29: #{tpu_custom_call.1} parent=1 // pred_fallthru
      _
    %v58 = vld [vmem:[#allocation2] sm:$0xf]
    %v61 = vunpack.c.l.s4 1966171168
    %v62 = vunpack.c.0.s8 %v61
    %v63 = vlaneseq
    %v64 = vshrl.u32 %v63, 7
    %v65 = vsub.s32 %v62, %v64
    %v66 = vrot.slane %v58, %v65
    %v67 = vcombine.high %v66, %v66
    %v69 = vunpack.c.l.s4 1966171168
    %v70 = vunpack.c.0.s8 %v69
    %v71 = vlaneseq
    %v72 = vshrl.u32 %v71, 7
    %v73 = vsub.s32 %v70, %v72
    %v74 = vrot.slane %v66, %v73
    %v76 = vunpack.c.l.s4 1966171168
    %v77 = vunpack.c.0.s8 %v76
    %v78 = vlaneseq
    %v79 = vshrl.u32 %v78, 7
    %v80 = vsub.s32 %v77, %v79
    %v81 = vrot.slane %v67, %v80
    %v82 = vcombine.high %v74, %v74
    %v83 = vcombine.high %v81, %v81
    %v88 = vlaneseq
    %v89 = vshrl.u32 %v88, 7
    %v90 = vsub.s32 0, %v89
    %v91 = vrot.slane %v74, %v90
    %v92 = vlaneseq
    %v93 = vshrl.u32 %v92, 7
    %v94 = vsub.s32 0, %v93
    %v95 = vrot.slane %v81, %v94
    %v96 = vlaneseq
    %v97 = vshrl.u32 %v96, 7
    %v98 = vsub.s32 0, %v97
    %v99 = vrot.slane %v82, %v98
    %v100 = vlaneseq
    %v101 = vshrl.u32 %v100, 7
    %v102 = vsub.s32 0, %v101
    %v103 = vrot.slane %v83, %v102
    %104 = vrot.lane.b32.xlu0 %v91, 96
    %v105 = vpop.permute.xlu0 %104
    %106 = vrot.lane.b32.xlu0 %v95, 96
    %v107 = vpop.permute.xlu0 %106
    %108 = vrot.lane.b32.xlu0 %v99, 96
    %v109 = vpop.permute.xlu0 %108
    %110 = vrot.lane.b32.xlu0 %v103, 96
    %v111 = vpop.permute.xlu0 %110
    %116 = vrot.lane.b32.xlu0 %v91, 64
    %v117 = vpop.permute.xlu0 %116
    %118 = vrot.lane.b32.xlu0 %v95, 64
    %v119 = vpop.permute.xlu0 %118
    %120 = vrot.lane.b32.xlu0 %v99, 64
    %v121 = vpop.permute.xlu0 %120
    %122 = vrot.lane.b32.xlu0 %v103, 64
    %v123 = vpop.permute.xlu0 %122
    %128 = vrot.lane.b32.xlu0 %v91, 32
    %v129 = vpop.permute.xlu0 %128
    %130 = vrot.lane.b32.xlu0 %v95, 32
    %v131 = vpop.permute.xlu0 %130
    %132 = vrot.lane.b32.xlu0 %v99, 32
    %v133 = vpop.permute.xlu0 %132
    %134 = vrot.lane.b32.xlu0 %v103, 32
    %v135 = vpop.permute.xlu0 %134
    %vm140 = vcmask 1040384
    %v141 = vsel %vm140, %v74, %v105
    %v142 = vsel %vm140, %v81, %v107
    %v143 = vsel %vm140, %v82, %v109
    %v144 = vsel %vm140, %v83, %v111
    %vm145 = vcmask 1041408
    %v146 = vsel %vm145, %v141, %v117
    %v147 = vsel %vm145, %v142, %v119
    %v148 = vsel %vm145, %v143, %v121
    %v149 = vsel %vm145, %v144, %v123
    %vm150 = vcmask 1042432
    %v151 = vsel %vm150, %v146, %v129
    %v152 = vsel %vm150, %v147, %v131
    %v153 = vsel %vm150, %v148, %v133
    %v154 = vsel %vm150, %v149, %v135
    %v155 = vld [vmem:[%s1] sm:$0x3]
    %v156 = vsub.f32 %v155, 1.0
    %v157 = vmul.f32 %v156, 1e+09
    %v160 = vunpack.c.l.s4 1966171168
    %v161 = vunpack.c.0.s8 %v160
    %v162 = vlaneseq
    %v163 = vshrl.u32 %v162, 7
    %v164 = vsub.s32 %v161, %v163
    %v165 = vrot.slane %v157, %v164
    %v166 = vcombine.high %v165, %v165
    %v168 = vunpack.c.l.s4 1966171168
    %v169 = vunpack.c.0.s8 %v168
    %v170 = vlaneseq
    %v171 = vshrl.u32 %v170, 7
    %v172 = vsub.s32 %v169, %v171
    %v173 = vrot.slane %v165, %v172
    %v175 = vunpack.c.l.s4 1966171168
    %v176 = vunpack.c.0.s8 %v175
    %v177 = vlaneseq
    %v178 = vshrl.u32 %v177, 7
    %v179 = vsub.s32 %v176, %v178
    %v180 = vrot.slane %v166, %v179
    %v181 = vld [vmem:[#allocation5] sm:$0xf]
    %v182 = vld [vmem:[#allocation5 + $0x4] sm:$0xf]
    %v183 = vld [vmem:[#allocation5 + $0x8] sm:$0xf]
    %v184 = vld [vmem:[#allocation5 + $0xc] sm:$0xf]
    %v185 = vld [vmem:[#allocation5 + $0x10] sm:$0xf]
    %v186 = vld [vmem:[#allocation5 + $0x14] sm:$0xf]
    %v187 = vld [vmem:[#allocation5 + $0x18] sm:$0xf]
    %v188 = vld [vmem:[#allocation5 + $0x1c] sm:$0xf]
    %v189 = vld [vmem:[#allocation5 + $0x20] sm:$0xf]
    %v190 = vld [vmem:[#allocation5 + $0x24] sm:$0xf]
    %v191 = vld [vmem:[#allocation5 + $0x28] sm:$0xf]
    %v192 = vld [vmem:[#allocation5 + $0x2c] sm:$0xf]
    %v193 = vld [vmem:[#allocation5 + $0x30] sm:$0xf]
    %v194 = vld [vmem:[#allocation5 + $0x34] sm:$0xf]
    %v195 = vld [vmem:[#allocation5 + $0x38] sm:$0xf]
    %v196 = vld [vmem:[#allocation5 + $0x3c] sm:$0xf]
    %v197 = vld [vmem:[#allocation5 + $0x40] sm:$0xf]
    %v198 = vld [vmem:[#allocation5 + $0x44] sm:$0xf]
    %v199 = vld [vmem:[#allocation5 + $0x48] sm:$0xf]
    %v200 = vld [vmem:[#allocation5 + $0x4c] sm:$0xf]
    %v201 = vld [vmem:[#allocation7] sm:$0x1]
    %v202 = vld [vmem:[#allocation7 + $0x1] sm:$0x1]
    %v203 = vld [vmem:[#allocation7 + $0x2] sm:$0x1]
    %v204 = vld [vmem:[#allocation7 + $0x3] sm:$0x1]
    %v205 = vld [vmem:[#allocation7 + $0x4] sm:$0x1]
    %v206 = vld [vmem:[#allocation7 + $0x5] sm:$0x1]
    %v207 = vld [vmem:[#allocation7 + $0x6] sm:$0x1]
    %v212 = vcombine.low %v151, %v152
    %v213 = vcombine.low %v153, %v154
    %vm216 = vcmask 261120
    %v217 = vsel %vm216, %v212, 0.0
    %218 = vadd.xlane.f32.xlu0 %v217
    %v219 = vpop.xlane.xlu0 %218
    %v220 = vsel %vm216, %v213, 0.0
    %221 = vadd.xlane.f32.xlu0 %v220
    %v222 = vpop.xlane.xlu0 %221
    %v223 = vrcp.pop 32.0
    %v224 = vmul.f32 %v219, %v223
    %v225 = vmul.f32 %v222, %v223
    %v229 = vunpack.c.l.s4 839922192
    %v230 = vunpack.c.0.s8 %v229
    %v231 = vlaneseq
    %v232 = vshrl.u32 %v231, 7
    %v233 = vsub.s32 %v230, %v232
    %v234 = vrot.slane %v224, %v233
    %v236 = vunpack.c.l.s4 1985246804
    %v237 = vunpack.c.0.s8 %v236
    %v238 = vlaneseq
    %v239 = vshrl.u32 %v238, 7
    %v240 = vsub.s32 %v237, %v239
    %v241 = vrot.slane %v224, %v240
    %v243 = vunpack.c.l.s4 839922192
    %v244 = vunpack.c.0.s8 %v243
    %v245 = vlaneseq
    %v246 = vshrl.u32 %v245, 7
    %v247 = vsub.s32 %v244, %v246
    %v248 = vrot.slane %v225, %v247
    %v250 = vunpack.c.l.s4 1985246804
    %v251 = vunpack.c.0.s8 %v250
    %v252 = vlaneseq
    %v253 = vshrl.u32 %v252, 7
    %v254 = vsub.s32 %v251, %v253
    %v255 = vrot.slane %v225, %v254
    %v260 = vsub.f32 %v151, %v234
    %v261 = vsub.f32 %v152, %v241
    %v262 = vsub.f32 %v153, %v248
    %v263 = vsub.f32 %v154, %v255
    %v264 = vmul.f32 %v260, %v260
    %v265 = vmul.f32 %v261, %v261
    %v266 = vmul.f32 %v262, %v262
    %v267 = vmul.f32 %v263, %v263
    %v272 = vcombine.low %v264, %v265
    %v273 = vcombine.low %v266, %v267
    %v276 = vsel %vm216, %v272, 0.0
    %277 = vadd.xlane.f32.xlu0 %v276
    %v278 = vpop.xlane.xlu0 %277
    %v279 = vsel %vm216, %v273, 0.0
    %280 = vadd.xlane.f32.xlu0 %v279
    %v281 = vpop.xlane.xlu0 %280
    %v282 = vmul.f32 %v278, 0.032258064
    %v283 = vmul.f32 %v281, 0.032258064
    %v284 = vrsqrt.pop %v282
    %v285 = vmul.f32 %v282, %v284
    %vm286 = vcmp.eq.f32.partialorder %v282, inf
    %v287 = vsel %vm286, %v282, %v285
    %vm288 = vcmp.eq.f32.partialorder %v282, 0.0
    %v289 = vand.u32 %v282, 2147483648
    %v290 = vsel %vm288, %v289, %v287
    %v291 = vrsqrt.pop %v283
    %v292 = vmul.f32 %v283, %v291
    %vm293 = vcmp.eq.f32.partialorder %v283, inf
    %v294 = vsel %vm293, %v283, %v292
    %vm295 = vcmp.eq.f32.partialorder %v283, 0.0
    %v296 = vand.u32 %v283, 2147483648
    %v297 = vsel %vm295, %v296, %v294
    %v298 = vadd.f32 %v290, 1e-06
    %v299 = vadd.f32 %v297, 1e-06
    %v300 = vrcp.pop %v298
    %v301 = vmul.f32 1.0, %v300
    %v302 = vrcp.pop %v299
    %v303 = vmul.f32 1.0, %v302
    %v304 = vlaneseq
    %v305 = vshrl.u32 %v304, 7
    %v306 = vsub.s32 0, %v305
    %v307 = vrot.slane %v204, %v306
    %v312 = vcombine.low %v260, %v261
    %v313 = vcombine.low %v262, %v263
    %v316 = vmul.f32 %v307, %v312
    %v317 = vmul.f32 %v307, %v313
    %v318 = vmul.f32 %v316, %v301
    %v319 = vmul.f32 %v317, %v303
    %v320 = vlaneseq
    %v321 = vshrl.u32 %v320, 7
    %v322 = vsub.s32 0, %v321
    %v323 = vrot.slane %v205, %v322
    %v324 = vadd.f32 %v318, %v323
    %v325 = vadd.f32 %v319, %v323
    %v326 = vpack.c.bf16 %v325, %v324
    %v331 = vunpack.c.l.b16 %v181
    %v332 = vunpack.c.l.b16 %v182
    %v333 = vunpack.c.l.b16 %v183
    %v334 = vunpack.c.l.b16 %v184
    %v335 = vpack.c.b16 %v332, %v331
    %v336 = vpack.c.b16 %v334, %v333
    %v340 = vsel %vm216, %v326, 0
    %342 = vmatprep.subr.bf16.mxu0 0
    %343 = vmatpush1.bf16.msra.mxu0 %v335
    %344 = vmatprep.subr.bf16.mxu0 0
    %345 = vmatpush1.bf16.msra.mxu0 %v336
    %346 = vmatprep.subr.bf16.mxu0 0
    %347 = vmatpush1.bf16.msra.mxu0 0
    %348 = vmatprep.subr.bf16.mxu0 0
    %349 = vmatpush1.bf16.msra.mxu0 0
    %350 = vmatprep.subr.bf16.mxu0 0
    %351 = vmatpush1.bf16.msra.mxu0 0
    %352 = vmatprep.subr.bf16.mxu0 0
    %353 = vmatpush1.bf16.msra.mxu0 0
    %354 = vmatprep.subr.bf16.mxu0 0
    %355 = vmatpush1.bf16.msra.mxu0 0
    %356 = vmatprep.subr.bf16.mxu0 0
    %357 = vmatpush1.bf16.msra.mxu0 0
    %358 = vmatprep.subr.bf16.mxu0 0
    %359 = vmatpush1.bf16.msra.mxu0 0
    %360 = vmatprep.subr.bf16.mxu0 0
    %361 = vmatpush1.bf16.msra.mxu0 0
    %362 = vmatprep.subr.bf16.mxu0 0
    %363 = vmatpush1.bf16.msra.mxu0 0
    %364 = vmatprep.subr.bf16.mxu0 0
    %365 = vmatpush1.bf16.msra.mxu0 0
    %366 = vmatprep.subr.bf16.mxu0 0
    %367 = vmatpush1.bf16.msra.mxu0 0
    %368 = vmatprep.subr.bf16.mxu0 0
    %369 = vmatpush1.bf16.msra.mxu0 0
    %370 = vmatprep.subr.bf16.mxu0 0
    %371 = vmatpush1.bf16.msra.mxu0 0
    %372 = vmatprep.subr.bf16.mxu0 0
    %373 = vmatpush1.bf16.msra.mxu0 0
    %374 = vmatprep.mubr.bf16.mxu0 0
    %375 = vmatmul.mubr.bf16.gmra.mrb[0].mxu0 %v340
    %v376 = vpop.f32.mrb[0].mxu0
    %v377 = vadd.f32 0.0, %v376
    %v378 = vpop.f32.mrb[0].mxu0
    %v379 = vpop.f32.mrb[0].mxu0
    %v380 = vadd.f32 0.0, %v379
    %v381 = vpop.f32.mrb[0].mxu0
    %382 = vdwg.mxu0
    %385 = vrot.lane.b32.xlu0 %v377, 120
    %v386 = vpop.permute.xlu0 %385
    %387 = vrot.lane.b32.xlu0 %v380, 120
    %v388 = vpop.permute.xlu0 %387
    %389 = vrot.lane.b32.xlu0 %v377, 112
    %v390 = vpop.permute.xlu0 %389
    %391 = vrot.lane.b32.xlu0 %v380, 112
    %v392 = vpop.permute.xlu0 %391
    %393 = vrot.lane.b32.xlu0 %v377, 104
    %v394 = vpop.permute.xlu0 %393
    %395 = vrot.lane.b32.xlu0 %v380, 104
    %v396 = vpop.permute.xlu0 %395
    %397 = vrot.lane.b32.xlu0 %v377, 96
    %v398 = vpop.permute.xlu0 %397
    %vm399 = vcmask 64512
    %v400 = vsel %vm399, %v377, 0
    %v402 = vsel %vm399, %v398, 0
    %404 = vmatprep.subr.mxu0 0.0
    %405 = vmatpush1.xpose.msra.mxu0 %v402
    %406 = vmatprep.subr.mxu0 0.0
    %407 = vmatpush1.xpose.msra.mxu0 0.0
    %408 = vmatprep.subr.mxu0 0.0
    %409 = vmatpush1.xpose.msra.mxu0 0.0
    %410 = vmatprep.subr.mxu0 0.0
    %411 = vmatpush1.xpose.msra.mxu0 0.0
    %412 = vmatprep.subr.mxu0 0.0
    %413 = vmatpush1.xpose.msra.mxu0 0.0
    %414 = vmatprep.subr.mxu0 0.0
    %415 = vmatpush1.xpose.msra.mxu0 0.0
    %416 = vmatprep.subr.mxu0 0.0
    %417 = vmatpush1.xpose.msra.mxu0 0.0
    %418 = vmatprep.subr.mxu0 0.0
    %419 = vmatpush1.xpose.msra.mxu0 0.0
    %420 = vmatprep.subr.mxu0 0.0
    %421 = vmatpush1.xpose.msra.mxu0 0.0
    %422 = vmatprep.subr.mxu0 0.0
    %423 = vmatpush1.xpose.msra.mxu0 0.0
    %424 = vmatprep.subr.mxu0 0.0
    %425 = vmatpush1.xpose.msra.mxu0 0.0
    %426 = vmatprep.subr.mxu0 0.0
    %427 = vmatpush1.xpose.msra.mxu0 0.0
    %428 = vmatprep.subr.mxu0 0.0
    %429 = vmatpush1.xpose.msra.mxu0 0.0
    %430 = vmatprep.subr.mxu0 0.0
    %431 = vmatpush1.xpose.msra.mxu0 0.0
    %432 = vmatprep.subr.mxu0 0.0
    %433 = vmatpush1.xpose.msra.mxu0 0.0
    %434 = vmatprep.subr.mxu0 0.0
    %435 = vmatpush1.xpose.msra.mxu0 0.0
    %436 = vmatprep.subr.mxu0 0.0
    %437 = vmatpush1.xpose.msra.mxu0 0.0
    %438 = vmatprep.subr.mxu0 0.0
    %439 = vmatpush1.xpose.msra.mxu0 0.0
    %440 = vmatprep.subr.mxu0 0.0
    %441 = vmatpush1.xpose.msra.mxu0 0.0
    %442 = vmatprep.subr.mxu0 0.0
    %443 = vmatpush1.xpose.msra.mxu0 0.0
    %444 = vmatprep.subr.mxu0 0.0
    %445 = vmatpush1.xpose.msra.mxu0 0.0
    %446 = vmatprep.subr.mxu0 0.0
    %447 = vmatpush1.xpose.msra.mxu0 0.0
    %448 = vmatprep.subr.mxu0 0.0
    %449 = vmatpush1.xpose.msra.mxu0 0.0
    %450 = vmatprep.subr.mxu0 0.0
    %451 = vmatpush1.xpose.msra.mxu0 0.0
    %452 = vmatprep.subr.mxu0 0.0
    %453 = vmatpush1.xpose.msra.mxu0 0.0
    %454 = vmatprep.subr.mxu0 0.0
    %455 = vmatpush1.xpose.msra.mxu0 0.0
    %456 = vmatprep.subr.mxu0 0.0
    %457 = vmatpush1.xpose.msra.mxu0 0.0
    %458 = vmatprep.subr.mxu0 0.0
    %459 = vmatpush1.xpose.msra.mxu0 0.0
    %460 = vmatprep.subr.mxu0 0.0
    %461 = vmatpush1.xpose.msra.mxu0 0.0
    %462 = vmatprep.subr.mxu0 0.0
    %463 = vmatpush1.xpose.msra.mxu0 0.0
    %464 = vmatprep.subr.mxu0 0.0
    %465 = vmatpush1.xpose.msra.mxu0 0.0
    %466 = vmatprep.subr.mxu0 0.0
    %467 = vmatpush1.xpose.msra.mxu0 0.0
    %468 = vmatprep.mubr.f32.mxu0 0.0
    %469 = vmatmul.mubr.f32.gmra.mrb[0].mxu0 %v400
    %v470 = vpop.f32.mrb[0].mxu0
    %v471 = vadd.f32 0.0, %v470
    %v472 = vpop.f32.mrb[0].mxu0
    %473 = vdwg.mxu0
    %474 = vrot.lane.b32.xlu0 %v386, 96
    %v475 = vpop.permute.xlu0 %474
    %v476 = vsel %vm399, %v386, 0
    %v478 = vsel %vm399, %v475, 0
    %480 = vmatprep.subr.mxu0 0.0
    %481 = vmatpush1.xpose.msra.mxu0 %v478
    %482 = vmatprep.subr.mxu0 0.0
    %483 = vmatpush1.xpose.msra.mxu0 0.0
    %484 = vmatprep.subr.mxu0 0.0
    %485 = vmatpush1.xpose.msra.mxu0 0.0
    %486 = vmatprep.subr.mxu0 0.0
    %487 = vmatpush1.xpose.msra.mxu0 0.0
    %488 = vmatprep.subr.mxu0 0.0
    %489 = vmatpush1.xpose.msra.mxu0 0.0
    %490 = vmatprep.subr.mxu0 0.0
    %491 = vmatpush1.xpose.msra.mxu0 0.0
    %492 = vmatprep.subr.mxu0 0.0
    %493 = vmatpush1.xpose.msra.mxu0 0.0
    %494 = vmatprep.subr.mxu0 0.0
    %495 = vmatpush1.xpose.msra.mxu0 0.0
    %496 = vmatprep.subr.mxu0 0.0
    %497 = vmatpush1.xpose.msra.mxu0 0.0
    %498 = vmatprep.subr.mxu0 0.0
    %499 = vmatpush1.xpose.msra.mxu0 0.0
    %500 = vmatprep.subr.mxu0 0.0
    %501 = vmatpush1.xpose.msra.mxu0 0.0
    %502 = vmatprep.subr.mxu0 0.0
    %503 = vmatpush1.xpose.msra.mxu0 0.0
    %504 = vmatprep.subr.mxu0 0.0
    %505 = vmatpush1.xpose.msra.mxu0 0.0
    %506 = vmatprep.subr.mxu0 0.0
    %507 = vmatpush1.xpose.msra.mxu0 0.0
    %508 = vmatprep.subr.mxu0 0.0
    %509 = vmatpush1.xpose.msra.mxu0 0.0
    %510 = vmatprep.subr.mxu0 0.0
    %511 = vmatpush1.xpose.msra.mxu0 0.0
    %512 = vmatprep.subr.mxu0 0.0
    %513 = vmatpush1.xpose.msra.mxu0 0.0
    %514 = vmatprep.subr.mxu0 0.0
    %515 = vmatpush1.xpose.msra.mxu0 0.0
    %516 = vmatprep.subr.mxu0 0.0
    %517 = vmatpush1.xpose.msra.mxu0 0.0
    %518 = vmatprep.subr.mxu0 0.0
    %519 = vmatpush1.xpose.msra.mxu0 0.0
    %520 = vmatprep.subr.mxu0 0.0
    %521 = vmatpush1.xpose.msra.mxu0 0.0
    %522 = vmatprep.subr.mxu0 0.0
    %523 = vmatpush1.xpose.msra.mxu0 0.0
    %524 = vmatprep.subr.mxu0 0.0
    %525 = vmatpush1.xpose.msra.mxu0 0.0
    %526 = vmatprep.subr.mxu0 0.0
    %527 = vmatpush1.xpose.msra.mxu0 0.0
    %528 = vmatprep.subr.mxu0 0.0
    %529 = vmatpush1.xpose.msra.mxu0 0.0
    %530 = vmatprep.subr.mxu0 0.0
    %531 = vmatpush1.xpose.msra.mxu0 0.0
    %532 = vmatprep.subr.mxu0 0.0
    %533 = vmatpush1.xpose.msra.mxu0 0.0
    %534 = vmatprep.subr.mxu0 0.0
    %535 = vmatpush1.xpose.msra.mxu0 0.0
    %536 = vmatprep.subr.mxu0 0.0
    %537 = vmatpush1.xpose.msra.mxu0 0.0
    %538 = vmatprep.subr.mxu0 0.0
    %539 = vmatpush1.xpose.msra.mxu0 0.0
    %540 = vmatprep.subr.mxu0 0.0
    %541 = vmatpush1.xpose.msra.mxu0 0.0
    %542 = vmatprep.subr.mxu0 0.0
    %543 = vmatpush1.xpose.msra.mxu0 0.0
    %544 = vmatprep.mubr.f32.mxu0 0.0
    %545 = vmatmul.mubr.f32.gmra.mrb[0].mxu0 %v476
    %v546 = vpop.f32.mrb[0].mxu0
    %v547 = vadd.f32 0.0, %v546
    %v548 = vpop.f32.mrb[0].mxu0
    %549 = vdwg.mxu0
    %550 = vrot.lane.b32.xlu0 %v390, 96
    %v551 = vpop.permute.xlu0 %550
    %v552 = vsel %vm399, %v390, 0
    %v554 = vsel %vm399, %v551, 0
    %556 = vmatprep.subr.mxu0 0.0
    %557 = vmatpush1.xpose.msra.mxu0 %v554
    %558 = vmatprep.subr.mxu0 0.0
    %559 = vmatpush1.xpose.msra.mxu0 0.0
    %560 = vmatprep.subr.mxu0 0.0
    %561 = vmatpush1.xpose.msra.mxu0 0.0
    %562 = vmatprep.subr.mxu0 0.0
    %563 = vmatpush1.xpose.msra.mxu0 0.0
    %564 = vmatprep.subr.mxu0 0.0
    %565 = vmatpush1.xpose.msra.mxu0 0.0
    %566 = vmatprep.subr.mxu0 0.0
    %567 = vmatpush1.xpose.msra.mxu0 0.0
    %568 = vmatprep.subr.mxu0 0.0
    %569 = vmatpush1.xpose.msra.mxu0 0.0
    %570 = vmatprep.subr.mxu0 0.0
    %571 = vmatpush1.xpose.msra.mxu0 0.0
    %572 = vmatprep.subr.mxu0 0.0
    %573 = vmatpush1.xpose.msra.mxu0 0.0
    %574 = vmatprep.subr.mxu0 0.0
    %575 = vmatpush1.xpose.msra.mxu0 0.0
    %576 = vmatprep.subr.mxu0 0.0
    %577 = vmatpush1.xpose.msra.mxu0 0.0
    %578 = vmatprep.subr.mxu0 0.0
    %579 = vmatpush1.xpose.msra.mxu0 0.0
    %580 = vmatprep.subr.mxu0 0.0
    %581 = vmatpush1.xpose.msra.mxu0 0.0
    %582 = vmatprep.subr.mxu0 0.0
    %583 = vmatpush1.xpose.msra.mxu0 0.0
    %584 = vmatprep.subr.mxu0 0.0
    %585 = vmatpush1.xpose.msra.mxu0 0.0
    %586 = vmatprep.subr.mxu0 0.0
    %587 = vmatpush1.xpose.msra.mxu0 0.0
    %588 = vmatprep.subr.mxu0 0.0
    %589 = vmatpush1.xpose.msra.mxu0 0.0
    %590 = vmatprep.subr.mxu0 0.0
    %591 = vmatpush1.xpose.msra.mxu0 0.0
    %592 = vmatprep.subr.mxu0 0.0
    %593 = vmatpush1.xpose.msra.mxu0 0.0
    %594 = vmatprep.subr.mxu0 0.0
    %595 = vmatpush1.xpose.msra.mxu0 0.0
    %596 = vmatprep.subr.mxu0 0.0
    %597 = vmatpush1.xpose.msra.mxu0 0.0
    %598 = vmatprep.subr.mxu0 0.0
    %599 = vmatpush1.xpose.msra.mxu0 0.0
    %600 = vmatprep.subr.mxu0 0.0
    %601 = vmatpush1.xpose.msra.mxu0 0.0
    %602 = vmatprep.subr.mxu0 0.0
    %603 = vmatpush1.xpose.msra.mxu0 0.0
    %604 = vmatprep.subr.mxu0 0.0
    %605 = vmatpush1.xpose.msra.mxu0 0.0
    %606 = vmatprep.subr.mxu0 0.0
    %607 = vmatpush1.xpose.msra.mxu0 0.0
    %608 = vmatprep.subr.mxu0 0.0
    %609 = vmatpush1.xpose.msra.mxu0 0.0
    %610 = vmatprep.subr.mxu0 0.0
    %611 = vmatpush1.xpose.msra.mxu0 0.0
    %612 = vmatprep.subr.mxu0 0.0
    %613 = vmatpush1.xpose.msra.mxu0 0.0
    %614 = vmatprep.subr.mxu0 0.0
    %615 = vmatpush1.xpose.msra.mxu0 0.0
    %616 = vmatprep.subr.mxu0 0.0
    %617 = vmatpush1.xpose.msra.mxu0 0.0
    %618 = vmatprep.subr.mxu0 0.0
    %619 = vmatpush1.xpose.msra.mxu0 0.0
    %620 = vmatprep.mubr.f32.mxu0 0.0
    %621 = vmatmul.mubr.f32.gmra.mrb[0].mxu0 %v552
    %v622 = vpop.f32.mrb[0].mxu0
    %v623 = vadd.f32 0.0, %v622
    %v624 = vpop.f32.mrb[0].mxu0
    %625 = vdwg.mxu0
    %626 = vrot.lane.b32.xlu0 %v394, 96
    %v627 = vpop.permute.xlu0 %626
    %v628 = vsel %vm399, %v394, 0
    %v630 = vsel %vm399, %v627, 0
    %632 = vmatprep.subr.mxu0 0.0
    %633 = vmatpush1.xpose.msra.mxu0 %v630
    %634 = vmatprep.subr.mxu0 0.0
    %635 = vmatpush1.xpose.msra.mxu0 0.0
    %636 = vmatprep.subr.mxu0 0.0
    %637 = vmatpush1.xpose.msra.mxu0 0.0
    %638 = vmatprep.subr.mxu0 0.0
    %639 = vmatpush1.xpose.msra.mxu0 0.0
    %640 = vmatprep.subr.mxu0 0.0
    %641 = vmatpush1.xpose.msra.mxu0 0.0
    %642 = vmatprep.subr.mxu0 0.0
    %643 = vmatpush1.xpose.msra.mxu0 0.0
    %644 = vmatprep.subr.mxu0 0.0
    %645 = vmatpush1.xpose.msra.mxu0 0.0
    %646 = vmatprep.subr.mxu0 0.0
    %647 = vmatpush1.xpose.msra.mxu0 0.0
    %648 = vmatprep.subr.mxu0 0.0
    %649 = vmatpush1.xpose.msra.mxu0 0.0
    %650 = vmatprep.subr.mxu0 0.0
    %651 = vmatpush1.xpose.msra.mxu0 0.0
    %652 = vmatprep.subr.mxu0 0.0
    %653 = vmatpush1.xpose.msra.mxu0 0.0
    %654 = vmatprep.subr.mxu0 0.0
    %655 = vmatpush1.xpose.msra.mxu0 0.0
    %656 = vmatprep.subr.mxu0 0.0
    %657 = vmatpush1.xpose.msra.mxu0 0.0
    %658 = vmatprep.subr.mxu0 0.0
    %659 = vmatpush1.xpose.msra.mxu0 0.0
    %660 = vmatprep.subr.mxu0 0.0
    %661 = vmatpush1.xpose.msra.mxu0 0.0
    %662 = vmatprep.subr.mxu0 0.0
    %663 = vmatpush1.xpose.msra.mxu0 0.0
    %664 = vmatprep.subr.mxu0 0.0
    %665 = vmatpush1.xpose.msra.mxu0 0.0
    %666 = vmatprep.subr.mxu0 0.0
    %667 = vmatpush1.xpose.msra.mxu0 0.0
    %668 = vmatprep.subr.mxu0 0.0
    %669 = vmatpush1.xpose.msra.mxu0 0.0
    %670 = vmatprep.subr.mxu0 0.0
    %671 = vmatpush1.xpose.msra.mxu0 0.0
    %672 = vmatprep.subr.mxu0 0.0
    %673 = vmatpush1.xpose.msra.mxu0 0.0
    %674 = vmatprep.subr.mxu0 0.0
    %675 = vmatpush1.xpose.msra.mxu0 0.0
    %676 = vmatprep.subr.mxu0 0.0
    %677 = vmatpush1.xpose.msra.mxu0 0.0
    %678 = vmatprep.subr.mxu0 0.0
    %679 = vmatpush1.xpose.msra.mxu0 0.0
    %680 = vmatprep.subr.mxu0 0.0
    %681 = vmatpush1.xpose.msra.mxu0 0.0
    %682 = vmatprep.subr.mxu0 0.0
    %683 = vmatpush1.xpose.msra.mxu0 0.0
    %684 = vmatprep.subr.mxu0 0.0
    %685 = vmatpush1.xpose.msra.mxu0 0.0
    %686 = vmatprep.subr.mxu0 0.0
    %687 = vmatpush1.xpose.msra.mxu0 0.0
    %688 = vmatprep.subr.mxu0 0.0
    %689 = vmatpush1.xpose.msra.mxu0 0.0
    %690 = vmatprep.subr.mxu0 0.0
    %691 = vmatpush1.xpose.msra.mxu0 0.0
    %692 = vmatprep.subr.mxu0 0.0
    %693 = vmatpush1.xpose.msra.mxu0 0.0
    %694 = vmatprep.subr.mxu0 0.0
    %695 = vmatpush1.xpose.msra.mxu0 0.0
    %696 = vmatprep.mubr.f32.mxu0 0.0
    %697 = vmatmul.mubr.f32.gmra.mrb[0].mxu0 %v628
    %v698 = vpop.f32.mrb[0].mxu0
    %v699 = vadd.f32 0.0, %v698
    %v700 = vpop.f32.mrb[0].mxu0
    %701 = vdwg.mxu0
    %702 = vrot.lane.b32.xlu0 %v380, 96
    %v703 = vpop.permute.xlu0 %702
    %v704 = vsel %vm399, %v380, 0
    %v706 = vsel %vm399, %v703, 0
    %708 = vmatprep.subr.mxu0 0.0
    %709 = vmatpush1.xpose.msra.mxu0 %v706
    %710 = vmatprep.subr.mxu0 0.0
    %711 = vmatpush1.xpose.msra.mxu0 0.0
    %712 = vmatprep.subr.mxu0 0.0
    %713 = vmatpush1.xpose.msra.mxu0 0.0
    %714 = vmatprep.subr.mxu0 0.0
    %715 = vmatpush1.xpose.msra.mxu0 0.0
    %716 = vmatprep.subr.mxu0 0.0
    %717 = vmatpush1.xpose.msra.mxu0 0.0
    %718 = vmatprep.subr.mxu0 0.0
    %719 = vmatpush1.xpose.msra.mxu0 0.0
    %720 = vmatprep.subr.mxu0 0.0
    %721 = vmatpush1.xpose.msra.mxu0 0.0
    %722 = vmatprep.subr.mxu0 0.0
    %723 = vmatpush1.xpose.msra.mxu0 0.0
    %724 = vmatprep.subr.mxu0 0.0
    %725 = vmatpush1.xpose.msra.mxu0 0.0
    %726 = vmatprep.subr.mxu0 0.0
    %727 = vmatpush1.xpose.msra.mxu0 0.0
    %728 = vmatprep.subr.mxu0 0.0
    %729 = vmatpush1.xpose.msra.mxu0 0.0
    %730 = vmatprep.subr.mxu0 0.0
    %731 = vmatpush1.xpose.msra.mxu0 0.0
    %732 = vmatprep.subr.mxu0 0.0
    %733 = vmatpush1.xpose.msra.mxu0 0.0
    %734 = vmatprep.subr.mxu0 0.0
    %735 = vmatpush1.xpose.msra.mxu0 0.0
    %736 = vmatprep.subr.mxu0 0.0
    %737 = vmatpush1.xpose.msra.mxu0 0.0
    %738 = vmatprep.subr.mxu0 0.0
    %739 = vmatpush1.xpose.msra.mxu0 0.0
    %740 = vmatprep.subr.mxu0 0.0
    %741 = vmatpush1.xpose.msra.mxu0 0.0
    %742 = vmatprep.subr.mxu0 0.0
    %743 = vmatpush1.xpose.msra.mxu0 0.0
    %744 = vmatprep.subr.mxu0 0.0
    %745 = vmatpush1.xpose.msra.mxu0 0.0
    %746 = vmatprep.subr.mxu0 0.0
    %747 = vmatpush1.xpose.msra.mxu0 0.0
    %748 = vmatprep.subr.mxu0 0.0
    %749 = vmatpush1.xpose.msra.mxu0 0.0
    %750 = vmatprep.subr.mxu0 0.0
    %751 = vmatpush1.xpose.msra.mxu0 0.0
    %752 = vmatprep.subr.mxu0 0.0
    %753 = vmatpush1.xpose.msra.mxu0 0.0
    %754 = vmatprep.subr.mxu0 0.0
    %755 = vmatpush1.xpose.msra.mxu0 0.0
    %756 = vmatprep.subr.mxu0 0.0
    %757 = vmatpush1.xpose.msra.mxu0 0.0
    %758 = vmatprep.subr.mxu0 0.0
    %759 = vmatpush1.xpose.msra.mxu0 0.0
    %760 = vmatprep.subr.mxu0 0.0
    %761 = vmatpush1.xpose.msra.mxu0 0.0
    %762 = vmatprep.subr.mxu0 0.0
    %763 = vmatpush1.xpose.msra.mxu0 0.0
    %764 = vmatprep.subr.mxu0 0.0
    %765 = vmatpush1.xpose.msra.mxu0 0.0
    %766 = vmatprep.subr.mxu0 0.0
    %767 = vmatpush1.xpose.msra.mxu0 0.0
    %768 = vmatprep.subr.mxu0 0.0
    %769 = vmatpush1.xpose.msra.mxu0 0.0
    %770 = vmatprep.subr.mxu0 0.0
    %771 = vmatpush1.xpose.msra.mxu0 0.0
    %772 = vmatprep.mubr.f32.mxu0 0.0
    %773 = vmatmul.mubr.f32.gmra.mrb[0].mxu0 %v704
    %v774 = vpop.f32.mrb[0].mxu0
    %v775 = vadd.f32 0.0, %v774
    %v776 = vpop.f32.mrb[0].mxu0
    %777 = vdwg.mxu0
    %778 = vrot.lane.b32.xlu0 %v388, 96
    %v779 = vpop.permute.xlu0 %778
    %v780 = vsel %vm399, %v388, 0
    %v782 = vsel %vm399, %v779, 0
    %784 = vmatprep.subr.mxu0 0.0
    %785 = vmatpush1.xpose.msra.mxu0 %v782
    %786 = vmatprep.subr.mxu0 0.0
    %787 = vmatpush1.xpose.msra.mxu0 0.0
    %788 = vmatprep.subr.mxu0 0.0
    %789 = vmatpush1.xpose.msra.mxu0 0.0
    %790 = vmatprep.subr.mxu0 0.0
    %791 = vmatpush1.xpose.msra.mxu0 0.0
    %792 = vmatprep.subr.mxu0 0.0
    %793 = vmatpush1.xpose.msra.mxu0 0.0
    %794 = vmatprep.subr.mxu0 0.0
    %795 = vmatpush1.xpose.msra.mxu0 0.0
    %796 = vmatprep.subr.mxu0 0.0
    %797 = vmatpush1.xpose.msra.mxu0 0.0
    %798 = vmatprep.subr.mxu0 0.0
    %799 = vmatpush1.xpose.msra.mxu0 0.0
    %800 = vmatprep.subr.mxu0 0.0
    %801 = vmatpush1.xpose.msra.mxu0 0.0
    %802 = vmatprep.subr.mxu0 0.0
    %803 = vmatpush1.xpose.msra.mxu0 0.0
    %804 = vmatprep.subr.mxu0 0.0
    %805 = vmatpush1.xpose.msra.mxu0 0.0
    %806 = vmatprep.subr.mxu0 0.0
    %807 = vmatpush1.xpose.msra.mxu0 0.0
    %808 = vmatprep.subr.mxu0 0.0
    %809 = vmatpush1.xpose.msra.mxu0 0.0
    %810 = vmatprep.subr.mxu0 0.0
    %811 = vmatpush1.xpose.msra.mxu0 0.0
    %812 = vmatprep.subr.mxu0 0.0
    %813 = vmatpush1.xpose.msra.mxu0 0.0
    %814 = vmatprep.subr.mxu0 0.0
    %815 = vmatpush1.xpose.msra.mxu0 0.0
    %816 = vmatprep.subr.mxu0 0.0
    %817 = vmatpush1.xpose.msra.mxu0 0.0
    %818 = vmatprep.subr.mxu0 0.0
    %819 = vmatpush1.xpose.msra.mxu0 0.0
    %820 = vmatprep.subr.mxu0 0.0
    %821 = vmatpush1.xpose.msra.mxu0 0.0
    %822 = vmatprep.subr.mxu0 0.0
    %823 = vmatpush1.xpose.msra.mxu0 0.0
    %824 = vmatprep.subr.mxu0 0.0
    %825 = vmatpush1.xpose.msra.mxu0 0.0
    %826 = vmatprep.subr.mxu0 0.0
    %827 = vmatpush1.xpose.msra.mxu0 0.0
    %828 = vmatprep.subr.mxu0 0.0
    %829 = vmatpush1.xpose.msra.mxu0 0.0
    %830 = vmatprep.subr.mxu0 0.0
    %831 = vmatpush1.xpose.msra.mxu0 0.0
    %832 = vmatprep.subr.mxu0 0.0
    %833 = vmatpush1.xpose.msra.mxu0 0.0
    %834 = vmatprep.subr.mxu0 0.0
    %835 = vmatpush1.xpose.msra.mxu0 0.0
    %836 = vmatprep.subr.mxu0 0.0
    %837 = vmatpush1.xpose.msra.mxu0 0.0
    %838 = vmatprep.subr.mxu0 0.0
    %839 = vmatpush1.xpose.msra.mxu0 0.0
    %840 = vmatprep.subr.mxu0 0.0
    %841 = vmatpush1.xpose.msra.mxu0 0.0
    %842 = vmatprep.subr.mxu0 0.0
    %843 = vmatpush1.xpose.msra.mxu0 0.0
    %844 = vmatprep.subr.mxu0 0.0
    %845 = vmatpush1.xpose.msra.mxu0 0.0
    %846 = vmatprep.subr.mxu0 0.0
    %847 = vmatpush1.xpose.msra.mxu0 0.0
    %848 = vmatprep.mubr.f32.mxu0 0.0
    %849 = vmatmul.mubr.f32.gmra.mrb[0].mxu0 %v780
    %v850 = vpop.f32.mrb[0].mxu0
    %v851 = vadd.f32 0.0, %v850
    %v852 = vpop.f32.mrb[0].mxu0
    %853 = vdwg.mxu0
    %854 = vrot.lane.b32.xlu0 %v392, 96
    %v855 = vpop.permute.xlu0 %854
    %v856 = vsel %vm399, %v392, 0
    %v858 = vsel %vm399, %v855, 0
    %860 = vmatprep.subr.mxu0 0.0
    %861 = vmatpush1.xpose.msra.mxu0 %v858
    %862 = vmatprep.subr.mxu0 0.0
    %863 = vmatpush1.xpose.msra.mxu0 0.0
    %864 = vmatprep.subr.mxu0 0.0
    %865 = vmatpush1.xpose.msra.mxu0 0.0
    %866 = vmatprep.subr.mxu0 0.0
    %867 = vmatpush1.xpose.msra.mxu0 0.0
    %868 = vmatprep.subr.mxu0 0.0
    %869 = vmatpush1.xpose.msra.mxu0 0.0
    %870 = vmatprep.subr.mxu0 0.0
    %871 = vmatpush1.xpose.msra.mxu0 0.0
    %872 = vmatprep.subr.mxu0 0.0
    %873 = vmatpush1.xpose.msra.mxu0 0.0
    %874 = vmatprep.subr.mxu0 0.0
    %875 = vmatpush1.xpose.msra.mxu0 0.0
    %876 = vmatprep.subr.mxu0 0.0
    %877 = vmatpush1.xpose.msra.mxu0 0.0
    %878 = vmatprep.subr.mxu0 0.0
    %879 = vmatpush1.xpose.msra.mxu0 0.0
    %880 = vmatprep.subr.mxu0 0.0
    %881 = vmatpush1.xpose.msra.mxu0 0.0
    %882 = vmatprep.subr.mxu0 0.0
    %883 = vmatpush1.xpose.msra.mxu0 0.0
    %884 = vmatprep.subr.mxu0 0.0
    %885 = vmatpush1.xpose.msra.mxu0 0.0
    %886 = vmatprep.subr.mxu0 0.0
    %887 = vmatpush1.xpose.msra.mxu0 0.0
    %888 = vmatprep.subr.mxu0 0.0
    %889 = vmatpush1.xpose.msra.mxu0 0.0
    %890 = vmatprep.subr.mxu0 0.0
    %891 = vmatpush1.xpose.msra.mxu0 0.0
    %892 = vmatprep.subr.mxu0 0.0
    %893 = vmatpush1.xpose.msra.mxu0 0.0
    %894 = vmatprep.subr.mxu0 0.0
    %895 = vmatpush1.xpose.msra.mxu0 0.0
    %896 = vmatprep.subr.mxu0 0.0
    %897 = vmatpush1.xpose.msra.mxu0 0.0
    %898 = vmatprep.subr.mxu0 0.0
    %899 = vmatpush1.xpose.msra.mxu0 0.0
    %900 = vmatprep.subr.mxu0 0.0
    %901 = vmatpush1.xpose.msra.mxu0 0.0
    %902 = vmatprep.subr.mxu0 0.0
    %903 = vmatpush1.xpose.msra.mxu0 0.0
    %904 = vmatprep.subr.mxu0 0.0
    %905 = vmatpush1.xpose.msra.mxu0 0.0
    %906 = vmatprep.subr.mxu0 0.0
    %907 = vmatpush1.xpose.msra.mxu0 0.0
    %908 = vmatprep.subr.mxu0 0.0
    %909 = vmatpush1.xpose.msra.mxu0 0.0
    %910 = vmatprep.subr.mxu0 0.0
    %911 = vmatpush1.xpose.msra.mxu0 0.0
    %912 = vmatprep.subr.mxu0 0.0
    %913 = vmatpush1.xpose.msra.mxu0 0.0
    %914 = vmatprep.subr.mxu0 0.0
    %915 = vmatpush1.xpose.msra.mxu0 0.0
    %916 = vmatprep.subr.mxu0 0.0
    %917 = vmatpush1.xpose.msra.mxu0 0.0
    %918 = vmatprep.subr.mxu0 0.0
    %919 = vmatpush1.xpose.msra.mxu0 0.0
    %920 = vmatprep.subr.mxu0 0.0
    %921 = vmatpush1.xpose.msra.mxu0 0.0
    %922 = vmatprep.subr.mxu0 0.0
    %923 = vmatpush1.xpose.msra.mxu0 0.0
    %924 = vmatprep.mubr.f32.mxu0 0.0
    %925 = vmatmul.mubr.f32.gmra.mrb[0].mxu0 %v856
    %v926 = vpop.f32.mrb[0].mxu0
    %v927 = vadd.f32 0.0, %v926
    %v928 = vpop.f32.mrb[0].mxu0
    %929 = vdwg.mxu0
    %930 = vrot.lane.b32.xlu0 %v396, 96
    %v931 = vpop.permute.xlu0 %930
    %v932 = vsel %vm399, %v396, 0
    %v934 = vsel %vm399, %v931, 0
    %936 = vmatprep.subr.mxu0 0.0
    %937 = vmatpush1.xpose.msra.mxu0 %v934
    %938 = vmatprep.subr.mxu0 0.0
    %939 = vmatpush1.xpose.msra.mxu0 0.0
    %940 = vmatprep.subr.mxu0 0.0
    %941 = vmatpush1.xpose.msra.mxu0 0.0
    %942 = vmatprep.subr.mxu0 0.0
    %943 = vmatpush1.xpose.msra.mxu0 0.0
    %944 = vmatprep.subr.mxu0 0.0
    %945 = vmatpush1.xpose.msra.mxu0 0.0
    %946 = vmatprep.subr.mxu0 0.0
    %947 = vmatpush1.xpose.msra.mxu0 0.0
    %948 = vmatprep.subr.mxu0 0.0
    %949 = vmatpush1.xpose.msra.mxu0 0.0
    %950 = vmatprep.subr.mxu0 0.0
    %951 = vmatpush1.xpose.msra.mxu0 0.0
    %952 = vmatprep.subr.mxu0 0.0
    %953 = vmatpush1.xpose.msra.mxu0 0.0
    %954 = vmatprep.subr.mxu0 0.0
    %955 = vmatpush1.xpose.msra.mxu0 0.0
    %956 = vmatprep.subr.mxu0 0.0
    %957 = vmatpush1.xpose.msra.mxu0 0.0
    %958 = vmatprep.subr.mxu0 0.0
    %959 = vmatpush1.xpose.msra.mxu0 0.0
    %960 = vmatprep.subr.mxu0 0.0
    %961 = vmatpush1.xpose.msra.mxu0 0.0
    %962 = vmatprep.subr.mxu0 0.0
    %963 = vmatpush1.xpose.msra.mxu0 0.0
    %964 = vmatprep.subr.mxu0 0.0
    %965 = vmatpush1.xpose.msra.mxu0 0.0
    %966 = vmatprep.subr.mxu0 0.0
    %967 = vmatpush1.xpose.msra.mxu0 0.0
    %968 = vmatprep.subr.mxu0 0.0
    %969 = vmatpush1.xpose.msra.mxu0 0.0
    %970 = vmatprep.subr.mxu0 0.0
    %971 = vmatpush1.xpose.msra.mxu0 0.0
    %972 = vmatprep.subr.mxu0 0.0
    %973 = vmatpush1.xpose.msra.mxu0 0.0
    %974 = vmatprep.subr.mxu0 0.0
    %975 = vmatpush1.xpose.msra.mxu0 0.0
    %976 = vmatprep.subr.mxu0 0.0
    %977 = vmatpush1.xpose.msra.mxu0 0.0
    %978 = vmatprep.subr.mxu0 0.0
    %979 = vmatpush1.xpose.msra.mxu0 0.0
    %980 = vmatprep.subr.mxu0 0.0
    %981 = vmatpush1.xpose.msra.mxu0 0.0
    %982 = vmatprep.subr.mxu0 0.0
    %983 = vmatpush1.xpose.msra.mxu0 0.0
    %984 = vmatprep.subr.mxu0 0.0
    %985 = vmatpush1.xpose.msra.mxu0 0.0
    %986 = vmatprep.subr.mxu0 0.0
    %987 = vmatpush1.xpose.msra.mxu0 0.0
    %988 = vmatprep.subr.mxu0 0.0
    %989 = vmatpush1.xpose.msra.mxu0 0.0
    %990 = vmatprep.subr.mxu0 0.0
    %991 = vmatpush1.xpose.msra.mxu0 0.0
    %992 = vmatprep.subr.mxu0 0.0
    %993 = vmatpush1.xpose.msra.mxu0 0.0
    %994 = vmatprep.subr.mxu0 0.0
    %995 = vmatpush1.xpose.msra.mxu0 0.0
    %996 = vmatprep.subr.mxu0 0.0
    %997 = vmatpush1.xpose.msra.mxu0 0.0
    %998 = vmatprep.subr.mxu0 0.0
    %999 = vmatpush1.xpose.msra.mxu0 0.0
    %1000 = vmatprep.mubr.f32.mxu0 0.0
    %1001 = vmatmul.mubr.f32.gmra.mrb[0].mxu0 %v932
    %v1002 = vpop.f32.mrb[0].mxu0
    %v1003 = vadd.f32 0.0, %v1002
    %v1004 = vpop.f32.mrb[0].mxu0
    %1005 = vdwg.mxu0
    %v1006 = vmul.f32 %v471, 0.35355338
    %v1007 = vmul.f32 %v547, 0.35355338
    %v1008 = vmul.f32 %v623, 0.35355338
    %v1009 = vmul.f32 %v699, 0.35355338
    %v1010 = vmul.f32 %v775, 0.35355338
    %v1011 = vmul.f32 %v851, 0.35355338
    %v1012 = vmul.f32 %v927, 0.35355338
    %v1013 = vmul.f32 %v1003, 0.35355338
    %v1014 = vlaneseq
    %v1015 = vshrl.u32 %v1014, 7
    %v1016 = vsub.s32 0, %v1015
    %v1017 = vrot.slane %v173, %v1016
    %v1018 = vlaneseq
    %v1019 = vshrl.u32 %v1018, 7
    %v1020 = vsub.s32 0, %v1019
    %v1021 = vrot.slane %v180, %v1020
    %v1024 = vadd.f32 %v1006, %v1017
    %v1025 = vadd.f32 %v1007, %v1017
    %v1026 = vadd.f32 %v1008, %v1017
    %v1027 = vadd.f32 %v1009, %v1017
    %v1028 = vadd.f32 %v1010, %v1021
    %v1029 = vadd.f32 %v1011, %v1021
    %v1030 = vadd.f32 %v1012, %v1021
    %v1031 = vadd.f32 %v1013, %v1021
    %v1032 = vsel %vm399, %v1024, -inf
    %1033 = vmax.xlane.f32.xlu0 %v1032
    %v1034 = vpop.xlane.xlu0 %1033
    %v1035 = vsel %vm399, %v1025, -inf
    %1036 = vmax.xlane.f32.xlu0 %v1035
    %v1037 = vpop.xlane.xlu0 %1036
    %v1038 = vsel %vm399, %v1026, -inf
    %1039 = vmax.xlane.f32.xlu0 %v1038
    %v1040 = vpop.xlane.xlu0 %1039
    %v1041 = vsel %vm399, %v1027, -inf
    %1042 = vmax.xlane.f32.xlu0 %v1041
    %v1043 = vpop.xlane.xlu0 %1042
    %v1044 = vsel %vm399, %v1028, -inf
    %1045 = vmax.xlane.f32.xlu0 %v1044
    %v1046 = vpop.xlane.xlu0 %1045
    %v1047 = vsel %vm399, %v1029, -inf
    %1048 = vmax.xlane.f32.xlu0 %v1047
    %v1049 = vpop.xlane.xlu0 %1048
    %v1050 = vsel %vm399, %v1030, -inf
    %1051 = vmax.xlane.f32.xlu0 %v1050
    %v1052 = vpop.xlane.xlu0 %1051
    %v1053 = vsel %vm399, %v1031, -inf
    %1054 = vmax.xlane.f32.xlu0 %v1053
    %v1055 = vpop.xlane.xlu0 %1054
    %v1056 = vsub.f32 %v1024, %v1034
    %v1057 = vsub.f32 %v1025, %v1037
    %v1058 = vsub.f32 %v1026, %v1040
    %v1059 = vsub.f32 %v1027, %v1043
    %v1060 = vsub.f32 %v1028, %v1046
    %v1061 = vsub.f32 %v1029, %v1049
    %v1062 = vsub.f32 %v1030, %v1052
    %v1063 = vsub.f32 %v1031, %v1055
    %v1064 = vmul.f32 %v1056, 1.442695
    %v1065 = vpow.pop %v1064
    %v1066 = vmul.f32 %v1057, 1.442695
    %v1067 = vpow.pop %v1066
    %v1068 = vmul.f32 %v1058, 1.442695
    %v1069 = vpow.pop %v1068
    %v1070 = vmul.f32 %v1059, 1.442695
    %v1071 = vpow.pop %v1070
    %v1072 = vmul.f32 %v1060, 1.442695
    %v1073 = vpow.pop %v1072
    %v1074 = vmul.f32 %v1061, 1.442695
    %v1075 = vpow.pop %v1074
    %v1076 = vmul.f32 %v1062, 1.442695
    %v1077 = vpow.pop %v1076
    %v1078 = vmul.f32 %v1063, 1.442695
    %v1079 = vpow.pop %v1078
    %v1080 = vsel %vm399, %v1065, 0.0
    %1081 = vadd.xlane.f32.xlu0 %v1080
    %v1082 = vpop.xlane.xlu0 %1081
    %v1083 = vsel %vm399, %v1067, 0.0
    %1084 = vadd.xlane.f32.xlu0 %v1083
    %v1085 = vpop.xlane.xlu0 %1084
    %v1086 = vsel %vm399, %v1069, 0.0
    %1087 = vadd.xlane.f32.xlu0 %v1086
    %v1088 = vpop.xlane.xlu0 %1087
    %v1089 = vsel %vm399, %v1071, 0.0
    %1090 = vadd.xlane.f32.xlu0 %v1089
    %v1091 = vpop.xlane.xlu0 %1090
    %v1092 = vsel %vm399, %v1073, 0.0
    %1093 = vadd.xlane.f32.xlu0 %v1092
    %v1094 = vpop.xlane.xlu0 %1093
    %v1095 = vsel %vm399, %v1075, 0.0
    %1096 = vadd.xlane.f32.xlu0 %v1095
    %v1097 = vpop.xlane.xlu0 %1096
    %v1098 = vsel %vm399, %v1077, 0.0
    %1099 = vadd.xlane.f32.xlu0 %v1098
    %v1100 = vpop.xlane.xlu0 %1099
    %v1101 = vsel %vm399, %v1079, 0.0
    %1102 = vadd.xlane.f32.xlu0 %v1101
    %v1103 = vpop.xlane.xlu0 %1102
    %v1104 = vrcp.pop %v1082
    %v1105 = vrcp.pop %v1085
    %v1106 = vrcp.pop %v1088
    %v1107 = vrcp.pop %v1091
    %v1108 = vrcp.pop %v1094
    %v1109 = vrcp.pop %v1097
    %v1110 = vrcp.pop %v1100
    %v1111 = vrcp.pop %v1103
    %v1112 = vmul.f32 %v1065, %v1104
    %v1113 = vmul.f32 %v1067, %v1105
    %v1114 = vmul.f32 %v1069, %v1106
    %v1115 = vmul.f32 %v1071, %v1107
    %v1116 = vmul.f32 %v1073, %v1108
    %v1117 = vmul.f32 %v1075, %v1109
    %v1118 = vmul.f32 %v1077, %v1110
    %v1119 = vmul.f32 %v1079, %v1111
    %1120 = vrot.lane.b32.xlu0 %v377, 64
    %v1121 = vpop.permute.xlu0 %1120
    %v1124 = vsel %vm399, %v1112, 0
    %1126 = vmatprep.subr.mxu0 0.0
    %1127 = vmatpush1.msra.mxu0 %v1121
    %1128 = vmatprep.subr.mxu0 0.0
    %1129 = vmatpush1.msra.mxu0 0.0
    %1130 = vmatprep.subr.mxu0 0.0
    %1131 = vmatpush1.msra.mxu0 0.0
    %1132 = vmatprep.subr.mxu0 0.0
    %1133 = vmatpush1.msra.mxu0 0.0
    %1134 = vmatprep.subr.mxu0 0.0
    %1135 = vmatpush1.msra.mxu0 0.0
    %1136 = vmatprep.subr.mxu0 0.0
    %1137 = vmatpush1.msra.mxu0 0.0
    %1138 = vmatprep.subr.mxu0 0.0
    %1139 = vmatpush1.msra.mxu0 0.0
    %1140 = vmatprep.subr.mxu0 0.0
    %1141 = vmatpush1.msra.mxu0 0.0
    %1142 = vmatprep.subr.mxu0 0.0
    %1143 = vmatpush1.msra.mxu0 0.0
    %1144 = vmatprep.subr.mxu0 0.0
    %1145 = vmatpush1.msra.mxu0 0.0
    %1146 = vmatprep.subr.mxu0 0.0
    %1147 = vmatpush1.msra.mxu0 0.0
    %1148 = vmatprep.subr.mxu0 0.0
    %1149 = vmatpush1.msra.mxu0 0.0
    %1150 = vmatprep.subr.mxu0 0.0
    %1151 = vmatpush1.msra.mxu0 0.0
    %1152 = vmatprep.subr.mxu0 0.0
    %1153 = vmatpush1.msra.mxu0 0.0
    %1154 = vmatprep.subr.mxu0 0.0
    %1155 = vmatpush1.msra.mxu0 0.0
    %1156 = vmatprep.subr.mxu0 0.0
    %1157 = vmatpush1.msra.mxu0 0.0
    %1158 = vmatprep.subr.mxu0 0.0
    %1159 = vmatpush1.msra.mxu0 0.0
    %1160 = vmatprep.subr.mxu0 0.0
    %1161 = vmatpush1.msra.mxu0 0.0
    %1162 = vmatprep.subr.mxu0 0.0
    %1163 = vmatpush1.msra.mxu0 0.0
    %1164 = vmatprep.subr.mxu0 0.0
    %1165 = vmatpush1.msra.mxu0 0.0
    %1166 = vmatprep.subr.mxu0 0.0
    %1167 = vmatpush1.msra.mxu0 0.0
    %1168 = vmatprep.subr.mxu0 0.0
    %1169 = vmatpush1.msra.mxu0 0.0
    %1170 = vmatprep.subr.mxu0 0.0
    %1171 = vmatpush1.msra.mxu0 0.0
    %1172 = vmatprep.subr.mxu0 0.0
    %1173 = vmatpush1.msra.mxu0 0.0
    %1174 = vmatprep.subr.mxu0 0.0
    %1175 = vmatpush1.msra.mxu0 0.0
    %1176 = vmatprep.subr.mxu0 0.0
    %1177 = vmatpush1.msra.mxu0 0.0
    %1178 = vmatprep.subr.mxu0 0.0
    %1179 = vmatpush1.msra.mxu0 0.0
    %1180 = vmatprep.subr.mxu0 0.0
    %1181 = vmatpush1.msra.mxu0 0.0
    %1182 = vmatprep.subr.mxu0 0.0
    %1183 = vmatpush1.msra.mxu0 0.0
    %1184 = vmatprep.subr.mxu0 0.0
    %1185 = vmatpush1.msra.mxu0 0.0
    %1186 = vmatprep.subr.mxu0 0.0
    %1187 = vmatpush1.msra.mxu0 0.0
    %1188 = vmatprep.subr.mxu0 0.0
    %1189 = vmatpush1.msra.mxu0 0.0
    %1190 = vmatprep.mubr.f32.mxu0 0.0
    %1191 = vmatmul.mubr.f32.gmra.mrb[0].mxu0 %v1124
    %v1192 = vpop.f32.mrb[0].mxu0
    %v1193 = vadd.f32 0.0, %v1192
    %v1194 = vpop.f32.mrb[0].mxu0
    %1195 = vdwg.mxu0
    %1196 = vrot.lane.b32.xlu0 %v386, 64
    %v1197 = vpop.permute.xlu0 %1196
    %v1200 = vsel %vm399, %v1113, 0
    %1202 = vmatprep.subr.mxu0 0.0
    %1203 = vmatpush1.msra.mxu0 %v1197
    %1204 = vmatprep.subr.mxu0 0.0
    %1205 = vmatpush1.msra.mxu0 0.0
    %1206 = vmatprep.subr.mxu0 0.0
    %1207 = vmatpush1.msra.mxu0 0.0
    %1208 = vmatprep.subr.mxu0 0.0
    %1209 = vmatpush1.msra.mxu0 0.0
    %1210 = vmatprep.subr.mxu0 0.0
    %1211 = vmatpush1.msra.mxu0 0.0
    %1212 = vmatprep.subr.mxu0 0.0
    %1213 = vmatpush1.msra.mxu0 0.0
    %1214 = vmatprep.subr.mxu0 0.0
    %1215 = vmatpush1.msra.mxu0 0.0
    %1216 = vmatprep.subr.mxu0 0.0
    %1217 = vmatpush1.msra.mxu0 0.0
    %1218 = vmatprep.subr.mxu0 0.0
    %1219 = vmatpush1.msra.mxu0 0.0
    %1220 = vmatprep.subr.mxu0 0.0
    %1221 = vmatpush1.msra.mxu0 0.0
    %1222 = vmatprep.subr.mxu0 0.0
    %1223 = vmatpush1.msra.mxu0 0.0
    %1224 = vmatprep.subr.mxu0 0.0
    %1225 = vmatpush1.msra.mxu0 0.0
    %1226 = vmatprep.subr.mxu0 0.0
    %1227 = vmatpush1.msra.mxu0 0.0
    %1228 = vmatprep.subr.mxu0 0.0
    %1229 = vmatpush1.msra.mxu0 0.0
    %1230 = vmatprep.subr.mxu0 0.0
    %1231 = vmatpush1.msra.mxu0 0.0
    %1232 = vmatprep.subr.mxu0 0.0
    %1233 = vmatpush1.msra.mxu0 0.0
    %1234 = vmatprep.subr.mxu0 0.0
    %1235 = vmatpush1.msra.mxu0 0.0
    %1236 = vmatprep.subr.mxu0 0.0
    %1237 = vmatpush1.msra.mxu0 0.0
    %1238 = vmatprep.subr.mxu0 0.0
    %1239 = vmatpush1.msra.mxu0 0.0
    %1240 = vmatprep.subr.mxu0 0.0
    %1241 = vmatpush1.msra.mxu0 0.0
    %1242 = vmatprep.subr.mxu0 0.0
    %1243 = vmatpush1.msra.mxu0 0.0
    %1244 = vmatprep.subr.mxu0 0.0
    %1245 = vmatpush1.msra.mxu0 0.0
    %1246 = vmatprep.subr.mxu0 0.0
    %1247 = vmatpush1.msra.mxu0 0.0
    %1248 = vmatprep.subr.mxu0 0.0
    %1249 = vmatpush1.msra.mxu0 0.0
    %1250 = vmatprep.subr.mxu0 0.0
    %1251 = vmatpush1.msra.mxu0 0.0
    %1252 = vmatprep.subr.mxu0 0.0
    %1253 = vmatpush1.msra.mxu0 0.0
    %1254 = vmatprep.subr.mxu0 0.0
    %1255 = vmatpush1.msra.mxu0 0.0
    %1256 = vmatprep.subr.mxu0 0.0
    %1257 = vmatpush1.msra.mxu0 0.0
    %1258 = vmatprep.subr.mxu0 0.0
    %1259 = vmatpush1.msra.mxu0 0.0
    %1260 = vmatprep.subr.mxu0 0.0
    %1261 = vmatpush1.msra.mxu0 0.0
    %1262 = vmatprep.subr.mxu0 0.0
    %1263 = vmatpush1.msra.mxu0 0.0
    %1264 = vmatprep.subr.mxu0 0.0
    %1265 = vmatpush1.msra.mxu0 0.0
    %1266 = vmatprep.mubr.f32.mxu0 0.0
    %1267 = vmatmul.mubr.f32.gmra.mrb[0].mxu0 %v1200
    %v1268 = vpop.f32.mrb[0].mxu0
    %v1269 = vadd.f32 0.0, %v1268
    %v1270 = vpop.f32.mrb[0].mxu0
    %1271 = vdwg.mxu0
    %1272 = vrot.lane.b32.xlu0 %v390, 64
    %v1273 = vpop.permute.xlu0 %1272
    %v1276 = vsel %vm399, %v1114, 0
    %1278 = vmatprep.subr.mxu0 0.0
    %1279 = vmatpush1.msra.mxu0 %v1273
    %1280 = vmatprep.subr.mxu0 0.0
    %1281 = vmatpush1.msra.mxu0 0.0
    %1282 = vmatprep.subr.mxu0 0.0
    %1283 = vmatpush1.msra.mxu0 0.0
    %1284 = vmatprep.subr.mxu0 0.0
    %1285 = vmatpush1.msra.mxu0 0.0
    %1286 = vmatprep.subr.mxu0 0.0
    %1287 = vmatpush1.msra.mxu0 0.0
    %1288 = vmatprep.subr.mxu0 0.0
    %1289 = vmatpush1.msra.mxu0 0.0
    %1290 = vmatprep.subr.mxu0 0.0
    %1291 = vmatpush1.msra.mxu0 0.0
    %1292 = vmatprep.subr.mxu0 0.0
    %1293 = vmatpush1.msra.mxu0 0.0
    %1294 = vmatprep.subr.mxu0 0.0
    %1295 = vmatpush1.msra.mxu0 0.0
    %1296 = vmatprep.subr.mxu0 0.0
    %1297 = vmatpush1.msra.mxu0 0.0
    %1298 = vmatprep.subr.mxu0 0.0
    %1299 = vmatpush1.msra.mxu0 0.0
    %1300 = vmatprep.subr.mxu0 0.0
    %1301 = vmatpush1.msra.mxu0 0.0
    %1302 = vmatprep.subr.mxu0 0.0
    %1303 = vmatpush1.msra.mxu0 0.0
    %1304 = vmatprep.subr.mxu0 0.0
    %1305 = vmatpush1.msra.mxu0 0.0
    %1306 = vmatprep.subr.mxu0 0.0
    %1307 = vmatpush1.msra.mxu0 0.0
    %1308 = vmatprep.subr.mxu0 0.0
    %1309 = vmatpush1.msra.mxu0 0.0
    %1310 = vmatprep.subr.mxu0 0.0
    %1311 = vmatpush1.msra.mxu0 0.0
    %1312 = vmatprep.subr.mxu0 0.0
    %1313 = vmatpush1.msra.mxu0 0.0
    %1314 = vmatprep.subr.mxu0 0.0
    %1315 = vmatpush1.msra.mxu0 0.0
    %1316 = vmatprep.subr.mxu0 0.0
    %1317 = vmatpush1.msra.mxu0 0.0
    %1318 = vmatprep.subr.mxu0 0.0
    %1319 = vmatpush1.msra.mxu0 0.0
    %1320 = vmatprep.subr.mxu0 0.0
    %1321 = vmatpush1.msra.mxu0 0.0
    %1322 = vmatprep.subr.mxu0 0.0
    %1323 = vmatpush1.msra.mxu0 0.0
    %1324 = vmatprep.subr.mxu0 0.0
    %1325 = vmatpush1.msra.mxu0 0.0
    %1326 = vmatprep.subr.mxu0 0.0
    %1327 = vmatpush1.msra.mxu0 0.0
    %1328 = vmatprep.subr.mxu0 0.0
    %1329 = vmatpush1.msra.mxu0 0.0
    %1330 = vmatprep.subr.mxu0 0.0
    %1331 = vmatpush1.msra.mxu0 0.0
    %1332 = vmatprep.subr.mxu0 0.0
    %1333 = vmatpush1.msra.mxu0 0.0
    %1334 = vmatprep.subr.mxu0 0.0
    %1335 = vmatpush1.msra.mxu0 0.0
    %1336 = vmatprep.subr.mxu0 0.0
    %1337 = vmatpush1.msra.mxu0 0.0
    %1338 = vmatprep.subr.mxu0 0.0
    %1339 = vmatpush1.msra.mxu0 0.0
    %1340 = vmatprep.subr.mxu0 0.0
    %1341 = vmatpush1.msra.mxu0 0.0
    %1342 = vmatprep.mubr.f32.mxu0 0.0
    %1343 = vmatmul.mubr.f32.gmra.mrb[0].mxu0 %v1276
    %v1344 = vpop.f32.mrb[0].mxu0
    %v1345 = vadd.f32 0.0, %v1344
    %v1346 = vpop.f32.mrb[0].mxu0
    %1347 = vdwg.mxu0
    %1348 = vrot.lane.b32.xlu0 %v394, 64
    %v1349 = vpop.permute.xlu0 %1348
    %v1352 = vsel %vm399, %v1115, 0
    %1354 = vmatprep.subr.mxu0 0.0
    %1355 = vmatpush1.msra.mxu0 %v1349
    %1356 = vmatprep.subr.mxu0 0.0
    %1357 = vmatpush1.msra.mxu0 0.0
    %1358 = vmatprep.subr.mxu0 0.0
    %1359 = vmatpush1.msra.mxu0 0.0
    %1360 = vmatprep.subr.mxu0 0.0
    %1361 = vmatpush1.msra.mxu0 0.0
    %1362 = vmatprep.subr.mxu0 0.0
    %1363 = vmatpush1.msra.mxu0 0.0
    %1364 = vmatprep.subr.mxu0 0.0
    %1365 = vmatpush1.msra.mxu0 0.0
    %1366 = vmatprep.subr.mxu0 0.0
    %1367 = vmatpush1.msra.mxu0 0.0
    %1368 = vmatprep.subr.mxu0 0.0
    %1369 = vmatpush1.msra.mxu0 0.0
    %1370 = vmatprep.subr.mxu0 0.0
    %1371 = vmatpush1.msra.mxu0 0.0
    %1372 = vmatprep.subr.mxu0 0.0
    %1373 = vmatpush1.msra.mxu0 0.0
    %1374 = vmatprep.subr.mxu0 0.0
    %1375 = vmatpush1.msra.mxu0 0.0
    %1376 = vmatprep.subr.mxu0 0.0
    %1377 = vmatpush1.msra.mxu0 0.0
    %1378 = vmatprep.subr.mxu0 0.0
    %1379 = vmatpush1.msra.mxu0 0.0
    %1380 = vmatprep.subr.mxu0 0.0
    %1381 = vmatpush1.msra.mxu0 0.0
    %1382 = vmatprep.subr.mxu0 0.0
    %1383 = vmatpush1.msra.mxu0 0.0
    %1384 = vmatprep.subr.mxu0 0.0
    %1385 = vmatpush1.msra.mxu0 0.0
    %1386 = vmatprep.subr.mxu0 0.0
    %1387 = vmatpush1.msra.mxu0 0.0
    %1388 = vmatprep.subr.mxu0 0.0
    %1389 = vmatpush1.msra.mxu0 0.0
    %1390 = vmatprep.subr.mxu0 0.0
    %1391 = vmatpush1.msra.mxu0 0.0
    %1392 = vmatprep.subr.mxu0 0.0
    %1393 = vmatpush1.msra.mxu0 0.0
    %1394 = vmatprep.subr.mxu0 0.0
    %1395 = vmatpush1.msra.mxu0 0.0
    %1396 = vmatprep.subr.mxu0 0.0
    %1397 = vmatpush1.msra.mxu0 0.0
    %1398 = vmatprep.subr.mxu0 0.0
    %1399 = vmatpush1.msra.mxu0 0.0
    %1400 = vmatprep.subr.mxu0 0.0
    %1401 = vmatpush1.msra.mxu0 0.0
    %1402 = vmatprep.subr.mxu0 0.0
    %1403 = vmatpush1.msra.mxu0 0.0
    %1404 = vmatprep.subr.mxu0 0.0
    %1405 = vmatpush1.msra.mxu0 0.0
    %1406 = vmatprep.subr.mxu0 0.0
    %1407 = vmatpush1.msra.mxu0 0.0
    %1408 = vmatprep.subr.mxu0 0.0
    %1409 = vmatpush1.msra.mxu0 0.0
    %1410 = vmatprep.subr.mxu0 0.0
    %1411 = vmatpush1.msra.mxu0 0.0
    %1412 = vmatprep.subr.mxu0 0.0
    %1413 = vmatpush1.msra.mxu0 0.0
    %1414 = vmatprep.subr.mxu0 0.0
    %1415 = vmatpush1.msra.mxu0 0.0
    %1416 = vmatprep.subr.mxu0 0.0
    %1417 = vmatpush1.msra.mxu0 0.0
    %1418 = vmatprep.mubr.f32.mxu0 0.0
    %1419 = vmatmul.mubr.f32.gmra.mrb[0].mxu0 %v1352
    %v1420 = vpop.f32.mrb[0].mxu0
    %v1421 = vadd.f32 0.0, %v1420
    %v1422 = vpop.f32.mrb[0].mxu0
    %1423 = vdwg.mxu0
    %1424 = vrot.lane.b32.xlu0 %v380, 64
    %v1425 = vpop.permute.xlu0 %1424
    %v1428 = vsel %vm399, %v1116, 0
    %1430 = vmatprep.subr.mxu0 0.0
    %1431 = vmatpush1.msra.mxu0 %v1425
    %1432 = vmatprep.subr.mxu0 0.0
    %1433 = vmatpush1.msra.mxu0 0.0
    %1434 = vmatprep.subr.mxu0 0.0
    %1435 = vmatpush1.msra.mxu0 0.0
    %1436 = vmatprep.subr.mxu0 0.0
    %1437 = vmatpush1.msra.mxu0 0.0
    %1438 = vmatprep.subr.mxu0 0.0
    %1439 = vmatpush1.msra.mxu0 0.0
    %1440 = vmatprep.subr.mxu0 0.0
    %1441 = vmatpush1.msra.mxu0 0.0
    %1442 = vmatprep.subr.mxu0 0.0
    %1443 = vmatpush1.msra.mxu0 0.0
    %1444 = vmatprep.subr.mxu0 0.0
    %1445 = vmatpush1.msra.mxu0 0.0
    %1446 = vmatprep.subr.mxu0 0.0
    %1447 = vmatpush1.msra.mxu0 0.0
    %1448 = vmatprep.subr.mxu0 0.0
    %1449 = vmatpush1.msra.mxu0 0.0
    %1450 = vmatprep.subr.mxu0 0.0
    %1451 = vmatpush1.msra.mxu0 0.0
    %1452 = vmatprep.subr.mxu0 0.0
    %1453 = vmatpush1.msra.mxu0 0.0
    %1454 = vmatprep.subr.mxu0 0.0
    %1455 = vmatpush1.msra.mxu0 0.0
    %1456 = vmatprep.subr.mxu0 0.0
    %1457 = vmatpush1.msra.mxu0 0.0
    %1458 = vmatprep.subr.mxu0 0.0
    %1459 = vmatpush1.msra.mxu0 0.0
    %1460 = vmatprep.subr.mxu0 0.0
    %1461 = vmatpush1.msra.mxu0 0.0
    %1462 = vmatprep.subr.mxu0 0.0
    %1463 = vmatpush1.msra.mxu0 0.0
    %1464 = vmatprep.subr.mxu0 0.0
    %1465 = vmatpush1.msra.mxu0 0.0
    %1466 = vmatprep.subr.mxu0 0.0
    %1467 = vmatpush1.msra.mxu0 0.0
    %1468 = vmatprep.subr.mxu0 0.0
    %1469 = vmatpush1.msra.mxu0 0.0
    %1470 = vmatprep.subr.mxu0 0.0
    %1471 = vmatpush1.msra.mxu0 0.0
    %1472 = vmatprep.subr.mxu0 0.0
    %1473 = vmatpush1.msra.mxu0 0.0
    %1474 = vmatprep.subr.mxu0 0.0
    %1475 = vmatpush1.msra.mxu0 0.0
    %1476 = vmatprep.subr.mxu0 0.0
    %1477 = vmatpush1.msra.mxu0 0.0
    %1478 = vmatprep.subr.mxu0 0.0
    %1479 = vmatpush1.msra.mxu0 0.0
    %1480 = vmatprep.subr.mxu0 0.0
    %1481 = vmatpush1.msra.mxu0 0.0
    %1482 = vmatprep.subr.mxu0 0.0
    %1483 = vmatpush1.msra.mxu0 0.0
    %1484 = vmatprep.subr.mxu0 0.0
    %1485 = vmatpush1.msra.mxu0 0.0
    %1486 = vmatprep.subr.mxu0 0.0
    %1487 = vmatpush1.msra.mxu0 0.0
    %1488 = vmatprep.subr.mxu0 0.0
    %1489 = vmatpush1.msra.mxu0 0.0
    %1490 = vmatprep.subr.mxu0 0.0
    %1491 = vmatpush1.msra.mxu0 0.0
    %1492 = vmatprep.subr.mxu0 0.0
    %1493 = vmatpush1.msra.mxu0 0.0
    %1494 = vmatprep.mubr.f32.mxu0 0.0
    %1495 = vmatmul.mubr.f32.gmra.mrb[0].mxu0 %v1428
    %v1496 = vpop.f32.mrb[0].mxu0
    %v1497 = vadd.f32 0.0, %v1496
    %v1498 = vpop.f32.mrb[0].mxu0
    %1499 = vdwg.mxu0
    %1500 = vrot.lane.b32.xlu0 %v388, 64
    %v1501 = vpop.permute.xlu0 %1500
    %v1504 = vsel %vm399, %v1117, 0
    %1506 = vmatprep.subr.mxu0 0.0
    %1507 = vmatpush1.msra.mxu0 %v1501
    %1508 = vmatprep.subr.mxu0 0.0
    %1509 = vmatpush1.msra.mxu0 0.0
    %1510 = vmatprep.subr.mxu0 0.0
    %1511 = vmatpush1.msra.mxu0 0.0
    %1512 = vmatprep.subr.mxu0 0.0
    %1513 = vmatpush1.msra.mxu0 0.0
    %1514 = vmatprep.subr.mxu0 0.0
    %1515 = vmatpush1.msra.mxu0 0.0
    %1516 = vmatprep.subr.mxu0 0.0
    %1517 = vmatpush1.msra.mxu0 0.0
    %1518 = vmatprep.subr.mxu0 0.0
    %1519 = vmatpush1.msra.mxu0 0.0
    %1520 = vmatprep.subr.mxu0 0.0
    %1521 = vmatpush1.msra.mxu0 0.0
    %1522 = vmatprep.subr.mxu0 0.0
    %1523 = vmatpush1.msra.mxu0 0.0
    %1524 = vmatprep.subr.mxu0 0.0
    %1525 = vmatpush1.msra.mxu0 0.0
    %1526 = vmatprep.subr.mxu0 0.0
    %1527 = vmatpush1.msra.mxu0 0.0
    %1528 = vmatprep.subr.mxu0 0.0
    %1529 = vmatpush1.msra.mxu0 0.0
    %1530 = vmatprep.subr.mxu0 0.0
    %1531 = vmatpush1.msra.mxu0 0.0
    %1532 = vmatprep.subr.mxu0 0.0
    %1533 = vmatpush1.msra.mxu0 0.0
    %1534 = vmatprep.subr.mxu0 0.0
    %1535 = vmatpush1.msra.mxu0 0.0
    %1536 = vmatprep.subr.mxu0 0.0
    %1537 = vmatpush1.msra.mxu0 0.0
    %1538 = vmatprep.subr.mxu0 0.0
    %1539 = vmatpush1.msra.mxu0 0.0
    %1540 = vmatprep.subr.mxu0 0.0
    %1541 = vmatpush1.msra.mxu0 0.0
    %1542 = vmatprep.subr.mxu0 0.0
    %1543 = vmatpush1.msra.mxu0 0.0
    %1544 = vmatprep.subr.mxu0 0.0
    %1545 = vmatpush1.msra.mxu0 0.0
    %1546 = vmatprep.subr.mxu0 0.0
    %1547 = vmatpush1.msra.mxu0 0.0
    %1548 = vmatprep.subr.mxu0 0.0
    %1549 = vmatpush1.msra.mxu0 0.0
    %1550 = vmatprep.subr.mxu0 0.0
    %1551 = vmatpush1.msra.mxu0 0.0
    %1552 = vmatprep.subr.mxu0 0.0
    %1553 = vmatpush1.msra.mxu0 0.0
    %1554 = vmatprep.subr.mxu0 0.0
    %1555 = vmatpush1.msra.mxu0 0.0
    %1556 = vmatprep.subr.mxu0 0.0
    %1557 = vmatpush1.msra.mxu0 0.0
    %1558 = vmatprep.subr.mxu0 0.0
    %1559 = vmatpush1.msra.mxu0 0.0
    %1560 = vmatprep.subr.mxu0 0.0
    %1561 = vmatpush1.msra.mxu0 0.0
    %1562 = vmatprep.subr.mxu0 0.0
    %1563 = vmatpush1.msra.mxu0 0.0
    %1564 = vmatprep.subr.mxu0 0.0
    %1565 = vmatpush1.msra.mxu0 0.0
    %1566 = vmatprep.subr.mxu0 0.0
    %1567 = vmatpush1.msra.mxu0 0.0
    %1568 = vmatprep.subr.mxu0 0.0
    %1569 = vmatpush1.msra.mxu0 0.0
    %1570 = vmatprep.mubr.f32.mxu0 0.0
    %1571 = vmatmul.mubr.f32.gmra.mrb[0].mxu0 %v1504
    %v1572 = vpop.f32.mrb[0].mxu0
    %v1573 = vadd.f32 0.0, %v1572
    %v1574 = vpop.f32.mrb[0].mxu0
    %1575 = vdwg.mxu0
    %1576 = vrot.lane.b32.xlu0 %v392, 64
    %v1577 = vpop.permute.xlu0 %1576
    %v1580 = vsel %vm399, %v1118, 0
    %1582 = vmatprep.subr.mxu0 0.0
    %1583 = vmatpush1.msra.mxu0 %v1577
    %1584 = vmatprep.subr.mxu0 0.0
    %1585 = vmatpush1.msra.mxu0 0.0
    %1586 = vmatprep.subr.mxu0 0.0
    %1587 = vmatpush1.msra.mxu0 0.0
    %1588 = vmatprep.subr.mxu0 0.0
    %1589 = vmatpush1.msra.mxu0 0.0
    %1590 = vmatprep.subr.mxu0 0.0
    %1591 = vmatpush1.msra.mxu0 0.0
    %1592 = vmatprep.subr.mxu0 0.0
    %1593 = vmatpush1.msra.mxu0 0.0
    %1594 = vmatprep.subr.mxu0 0.0
    %1595 = vmatpush1.msra.mxu0 0.0
    %1596 = vmatprep.subr.mxu0 0.0
    %1597 = vmatpush1.msra.mxu0 0.0
    %1598 = vmatprep.subr.mxu0 0.0
    %1599 = vmatpush1.msra.mxu0 0.0
    %1600 = vmatprep.subr.mxu0 0.0
    %1601 = vmatpush1.msra.mxu0 0.0
    %1602 = vmatprep.subr.mxu0 0.0
    %1603 = vmatpush1.msra.mxu0 0.0
    %1604 = vmatprep.subr.mxu0 0.0
    %1605 = vmatpush1.msra.mxu0 0.0
    %1606 = vmatprep.subr.mxu0 0.0
    %1607 = vmatpush1.msra.mxu0 0.0
    %1608 = vmatprep.subr.mxu0 0.0
    %1609 = vmatpush1.msra.mxu0 0.0
    %1610 = vmatprep.subr.mxu0 0.0
    %1611 = vmatpush1.msra.mxu0 0.0
    %1612 = vmatprep.subr.mxu0 0.0
    %1613 = vmatpush1.msra.mxu0 0.0
    %1614 = vmatprep.subr.mxu0 0.0
    %1615 = vmatpush1.msra.mxu0 0.0
    %1616 = vmatprep.subr.mxu0 0.0
    %1617 = vmatpush1.msra.mxu0 0.0
    %1618 = vmatprep.subr.mxu0 0.0
    %1619 = vmatpush1.msra.mxu0 0.0
    %1620 = vmatprep.subr.mxu0 0.0
    %1621 = vmatpush1.msra.mxu0 0.0
    %1622 = vmatprep.subr.mxu0 0.0
    %1623 = vmatpush1.msra.mxu0 0.0
    %1624 = vmatprep.subr.mxu0 0.0
    %1625 = vmatpush1.msra.mxu0 0.0
    %1626 = vmatprep.subr.mxu0 0.0
    %1627 = vmatpush1.msra.mxu0 0.0
    %1628 = vmatprep.subr.mxu0 0.0
    %1629 = vmatpush1.msra.mxu0 0.0
    %1630 = vmatprep.subr.mxu0 0.0
    %1631 = vmatpush1.msra.mxu0 0.0
    %1632 = vmatprep.subr.mxu0 0.0
    %1633 = vmatpush1.msra.mxu0 0.0
    %1634 = vmatprep.subr.mxu0 0.0
    %1635 = vmatpush1.msra.mxu0 0.0
    %1636 = vmatprep.subr.mxu0 0.0
    %1637 = vmatpush1.msra.mxu0 0.0
    %1638 = vmatprep.subr.mxu0 0.0
    %1639 = vmatpush1.msra.mxu0 0.0
    %1640 = vmatprep.subr.mxu0 0.0
    %1641 = vmatpush1.msra.mxu0 0.0
    %1642 = vmatprep.subr.mxu0 0.0
    %1643 = vmatpush1.msra.mxu0 0.0
    %1644 = vmatprep.subr.mxu0 0.0
    %1645 = vmatpush1.msra.mxu0 0.0
    %1646 = vmatprep.mubr.f32.mxu0 0.0
    %1647 = vmatmul.mubr.f32.gmra.mrb[0].mxu0 %v1580
    %v1648 = vpop.f32.mrb[0].mxu0
    %v1649 = vadd.f32 0.0, %v1648
    %v1650 = vpop.f32.mrb[0].mxu0
    %1651 = vdwg.mxu0
    %1652 = vrot.lane.b32.xlu0 %v396, 64
    %v1653 = vpop.permute.xlu0 %1652
    %v1656 = vsel %vm399, %v1119, 0
    %1658 = vmatprep.subr.mxu0 0.0
    %1659 = vmatpush1.msra.mxu0 %v1653
    %1660 = vmatprep.subr.mxu0 0.0
    %1661 = vmatpush1.msra.mxu0 0.0
    %1662 = vmatprep.subr.mxu0 0.0
    %1663 = vmatpush1.msra.mxu0 0.0
    %1664 = vmatprep.subr.mxu0 0.0
    %1665 = vmatpush1.msra.mxu0 0.0
    %1666 = vmatprep.subr.mxu0 0.0
    %1667 = vmatpush1.msra.mxu0 0.0
    %1668 = vmatprep.subr.mxu0 0.0
    %1669 = vmatpush1.msra.mxu0 0.0
    %1670 = vmatprep.subr.mxu0 0.0
    %1671 = vmatpush1.msra.mxu0 0.0
    %1672 = vmatprep.subr.mxu0 0.0
    %1673 = vmatpush1.msra.mxu0 0.0
    %1674 = vmatprep.subr.mxu0 0.0
    %1675 = vmatpush1.msra.mxu0 0.0
    %1676 = vmatprep.subr.mxu0 0.0
    %1677 = vmatpush1.msra.mxu0 0.0
    %1678 = vmatprep.subr.mxu0 0.0
    %1679 = vmatpush1.msra.mxu0 0.0
    %1680 = vmatprep.subr.mxu0 0.0
    %1681 = vmatpush1.msra.mxu0 0.0
    %1682 = vmatprep.subr.mxu0 0.0
    %1683 = vmatpush1.msra.mxu0 0.0
    %1684 = vmatprep.subr.mxu0 0.0
    %1685 = vmatpush1.msra.mxu0 0.0
    %1686 = vmatprep.subr.mxu0 0.0
    %1687 = vmatpush1.msra.mxu0 0.0
    %1688 = vmatprep.subr.mxu0 0.0
    %1689 = vmatpush1.msra.mxu0 0.0
    %1690 = vmatprep.subr.mxu0 0.0
    %1691 = vmatpush1.msra.mxu0 0.0
    %1692 = vmatprep.subr.mxu0 0.0
    %1693 = vmatpush1.msra.mxu0 0.0
    %1694 = vmatprep.subr.mxu0 0.0
    %1695 = vmatpush1.msra.mxu0 0.0
    %1696 = vmatprep.subr.mxu0 0.0
    %1697 = vmatpush1.msra.mxu0 0.0
    %1698 = vmatprep.subr.mxu0 0.0
    %1699 = vmatpush1.msra.mxu0 0.0
    %1700 = vmatprep.subr.mxu0 0.0
    %1701 = vmatpush1.msra.mxu0 0.0
    %1702 = vmatprep.subr.mxu0 0.0
    %1703 = vmatpush1.msra.mxu0 0.0
    %1704 = vmatprep.subr.mxu0 0.0
    %1705 = vmatpush1.msra.mxu0 0.0
    %1706 = vmatprep.subr.mxu0 0.0
    %1707 = vmatpush1.msra.mxu0 0.0
    %1708 = vmatprep.subr.mxu0 0.0
    %1709 = vmatpush1.msra.mxu0 0.0
    %1710 = vmatprep.subr.mxu0 0.0
    %1711 = vmatpush1.msra.mxu0 0.0
    %1712 = vmatprep.subr.mxu0 0.0
    %1713 = vmatpush1.msra.mxu0 0.0
    %1714 = vmatprep.subr.mxu0 0.0
    %1715 = vmatpush1.msra.mxu0 0.0
    %1716 = vmatprep.subr.mxu0 0.0
    %1717 = vmatpush1.msra.mxu0 0.0
    %1718 = vmatprep.subr.mxu0 0.0
    %1719 = vmatpush1.msra.mxu0 0.0
    %1720 = vmatprep.subr.mxu0 0.0
    %1721 = vmatpush1.msra.mxu0 0.0
    %1722 = vmatprep.mubr.f32.mxu0 0.0
    %1723 = vmatmul.mubr.f32.gmra.mrb[0].mxu0 %v1656
    %v1724 = vpop.f32.mrb[0].mxu0
    %v1725 = vadd.f32 0.0, %v1724
    %v1726 = vpop.f32.mrb[0].mxu0
    %1727 = vdwg.mxu0
    %1730 = vrot.lane.b32.xlu0 %v1269, 8
    %v1731 = vpop.permute.xlu0 %1730
    %1732 = vrot.lane.b32.xlu0 %v1573, 8
    %v1733 = vpop.permute.xlu0 %1732
    %1738 = vrot.lane.b32.xlu0 %v1345, 16
    %v1739 = vpop.permute.xlu0 %1738
    %1740 = vrot.lane.b32.xlu0 %v1649, 16
    %v1741 = vpop.permute.xlu0 %1740
    %1746 = vrot.lane.b32.xlu0 %v1421, 24
    %v1747 = vpop.permute.xlu0 %1746
    %1748 = vrot.lane.b32.xlu0 %v1725, 24
    %v1749 = vpop.permute.xlu0 %1748
    %v1752 = vsel %vm399, %v1193, %v1731
    %v1753 = vsel %vm399, %v1497, %v1733
    %vm1754 = vcmask 130048
    %v1755 = vsel %vm1754, %v1752, %v1739
    %v1756 = vsel %vm1754, %v1753, %v1741
    %vm1757 = vcmask 195584
    %v1758 = vsel %vm1757, %v1755, %v1747
    %v1759 = vsel %vm1757, %v1756, %v1749
    %v1760 = vpack.c.bf16 %v1759, %v1758
    %v1761 = vlaneseq
    %v1762 = vshrl.u32 %v1761, 7
    %v1763 = vsub.s32 0, %v1762
    %v1764 = vrot.slane %v201, %v1763
    %v1769 = vunpack.c.l.b16 %v185
    %v1770 = vunpack.c.l.b16 %v186
    %v1771 = vunpack.c.l.b16 %v187
    %v1772 = vunpack.c.l.b16 %v188
    %v1773 = vpack.c.b16 %v1770, %v1769
    %v1774 = vpack.c.b16 %v1772, %v1771
    %v1778 = vsel %vm216, %v1760, 0
    %1780 = vmatprep.subr.bf16.mxu0 0
    %1781 = vmatpush1.bf16.msra.mxu0 %v1773
    %1782 = vmatprep.subr.bf16.mxu0 0
    %1783 = vmatpush1.bf16.msra.mxu0 %v1774
    %1784 = vmatprep.subr.bf16.mxu0 0
    %1785 = vmatpush1.bf16.msra.mxu0 0
    %1786 = vmatprep.subr.bf16.mxu0 0
    %1787 = vmatpush1.bf16.msra.mxu0 0
    %1788 = vmatprep.subr.bf16.mxu0 0
    %1789 = vmatpush1.bf16.msra.mxu0 0
    %1790 = vmatprep.subr.bf16.mxu0 0
    %1791 = vmatpush1.bf16.msra.mxu0 0
    %1792 = vmatprep.subr.bf16.mxu0 0
    %1793 = vmatpush1.bf16.msra.mxu0 0
    %1794 = vmatprep.subr.bf16.mxu0 0
    %1795 = vmatpush1.bf16.msra.mxu0 0
    %1796 = vmatprep.subr.bf16.mxu0 0
    %1797 = vmatpush1.bf16.msra.mxu0 0
    %1798 = vmatprep.subr.bf16.mxu0 0
    %1799 = vmatpush1.bf16.msra.mxu0 0
    %1800 = vmatprep.subr.bf16.mxu0 0
    %1801 = vmatpush1.bf16.msra.mxu0 0
    %1802 = vmatprep.subr.bf16.mxu0 0
    %1803 = vmatpush1.bf16.msra.mxu0 0
    %1804 = vmatprep.subr.bf16.mxu0 0
    %1805 = vmatpush1.bf16.msra.mxu0 0
    %1806 = vmatprep.subr.bf16.mxu0 0
    %1807 = vmatpush1.bf16.msra.mxu0 0
    %1808 = vmatprep.subr.bf16.mxu0 0
    %1809 = vmatpush1.bf16.msra.mxu0 0
    %1810 = vmatprep.subr.bf16.mxu0 0
    %1811 = vmatpush1.bf16.msra.mxu0 0
    %1812 = vmatprep.mubr.bf16.mxu0 0
    %1813 = vmatmul.mubr.bf16.gmra.mrb[0].mxu0 %v1778
    %v1814 = vpop.f32.mrb[0].mxu0
    %v1815 = vadd.f32 %v1764, %v1814
    %v1816 = vpop.f32.mrb[0].mxu0
    %v1817 = vpop.f32.mrb[0].mxu0
    %v1818 = vadd.f32 %v1764, %v1817
    %v1819 = vpop.f32.mrb[0].mxu0
    %1820 = vdwg.mxu0
    %v1823 = vcombine.high %v1815, %v1815
    %v1824 = vcombine.high %v1818, %v1818
    %v1827 = vadd.f32 %v151, %v1815
    %v1828 = vadd.f32 %v152, %v1823
    %v1829 = vadd.f32 %v153, %v1818
    %v1830 = vadd.f32 %v154, %v1824
    %v1835 = vcombine.low %v1827, %v1828
    %v1836 = vcombine.low %v1829, %v1830
    %v1839 = vsel %vm216, %v1835, 0.0
    %1840 = vadd.xlane.f32.xlu0 %v1839
    %v1841 = vpop.xlane.xlu0 %1840
    %v1842 = vsel %vm216, %v1836, 0.0
    %1843 = vadd.xlane.f32.xlu0 %v1842
    %v1844 = vpop.xlane.xlu0 %1843
    %v1845 = vmul.f32 %v1841, %v223
    %v1846 = vmul.f32 %v1844, %v223
    %v1850 = vunpack.c.l.s4 839922192
    %v1851 = vunpack.c.0.s8 %v1850
    %v1852 = vlaneseq
    %v1853 = vshrl.u32 %v1852, 7
    %v1854 = vsub.s32 %v1851, %v1853
    %v1855 = vrot.slane %v1845, %v1854
    %v1857 = vunpack.c.l.s4 1985246804
    %v1858 = vunpack.c.0.s8 %v1857
    %v1859 = vlaneseq
    %v1860 = vshrl.u32 %v1859, 7
    %v1861 = vsub.s32 %v1858, %v1860
    %v1862 = vrot.slane %v1845, %v1861
    %v1864 = vunpack.c.l.s4 839922192
    %v1865 = vunpack.c.0.s8 %v1864
    %v1866 = vlaneseq
    %v1867 = vshrl.u32 %v1866, 7
    %v1868 = vsub.s32 %v1865, %v1867
    %v1869 = vrot.slane %v1846, %v1868
    %v1871 = vunpack.c.l.s4 1985246804
    %v1872 = vunpack.c.0.s8 %v1871
    %v1873 = vlaneseq
    %v1874 = vshrl.u32 %v1873, 7
    %v1875 = vsub.s32 %v1872, %v1874
    %v1876 = vrot.slane %v1846, %v1875
    %v1881 = vsub.f32 %v1827, %v1855
    %v1882 = vsub.f32 %v1828, %v1862
    %v1883 = vsub.f32 %v1829, %v1869
    %v1884 = vsub.f32 %v1830, %v1876
    %v1885 = vmul.f32 %v1881, %v1881
    %v1886 = vmul.f32 %v1882, %v1882
    %v1887 = vmul.f32 %v1883, %v1883
    %v1888 = vmul.f32 %v1884, %v1884
    %v1893 = vcombine.low %v1885, %v1886
    %v1894 = vcombine.low %v1887, %v1888
    %v1897 = vsel %vm216, %v1893, 0.0
    %1898 = vadd.xlane.f32.xlu0 %v1897
    %v1899 = vpop.xlane.xlu0 %1898
    %v1900 = vsel %vm216, %v1894, 0.0
    %1901 = vadd.xlane.f32.xlu0 %v1900
    %v1902 = vpop.xlane.xlu0 %1901
    %v1903 = vmul.f32 %v1899, 0.032258064
    %v1904 = vmul.f32 %v1902, 0.032258064
    %v1905 = vrsqrt.pop %v1903
    %v1906 = vmul.f32 %v1903, %v1905
    %vm1907 = vcmp.eq.f32.partialorder %v1903, inf
    %v1908 = vsel %vm1907, %v1903, %v1906
    %vm1909 = vcmp.eq.f32.partialorder %v1903, 0.0
    %v1910 = vand.u32 %v1903, 2147483648
    %v1911 = vsel %vm1909, %v1910, %v1908
    %v1912 = vrsqrt.pop %v1904
    %v1913 = vmul.f32 %v1904, %v1912
    %vm1914 = vcmp.eq.f32.partialorder %v1904, inf
    %v1915 = vsel %vm1914, %v1904, %v1913
    %vm1916 = vcmp.eq.f32.partialorder %v1904, 0.0
    %v1917 = vand.u32 %v1904, 2147483648
    %v1918 = vsel %vm1916, %v1917, %v1915
    %v1919 = vadd.f32 %v1911, 1e-06
    %v1920 = vadd.f32 %v1918, 1e-06
    %v1921 = vrcp.pop %v1919
    %v1922 = vmul.f32 1.0, %v1921
    %v1923 = vrcp.pop %v1920
    %v1924 = vmul.f32 1.0, %v1923
    %v1925 = vlaneseq
    %v1926 = vshrl.u32 %v1925, 7
    %v1927 = vsub.s32 0, %v1926
    %v1928 = vrot.slane %v206, %v1927
    %v1933 = vcombine.low %v1881, %v1882
    %v1934 = vcombine.low %v1883, %v1884
    %v1937 = vmul.f32 %v1928, %v1933
    %v1938 = vmul.f32 %v1928, %v1934
    %v1939 = vmul.f32 %v1937, %v1922
    %v1940 = vmul.f32 %v1938, %v1924
    %v1941 = vlaneseq
    %v1942 = vshrl.u32 %v1941, 7
    %v1943 = vsub.s32 0, %v1942
    %v1944 = vrot.slane %v207, %v1943
    %v1945 = vadd.f32 %v1939, %v1944
    %v1946 = vadd.f32 %v1940, %v1944
    %v1947 = vpack.c.bf16 %v1946, %v1945
    %v1948 = vlaneseq
    %v1949 = vshrl.u32 %v1948, 7
    %v1950 = vsub.s32 0, %v1949
    %v1951 = vrot.slane %v202, %v1950
    %v1956 = vunpack.c.l.b16 %v189
    %v1957 = vunpack.c.l.b16 %v190
    %v1958 = vunpack.c.l.b16 %v191
    %v1959 = vunpack.c.l.b16 %v192
    %v1960 = vpack.c.b16 %v1957, %v1956
    %v1961 = vpack.c.b16 %v1959, %v1958
    %v1965 = vsel %vm216, %v1947, 0
    %1967 = vmatprep.subr.bf16.mxu0 0
    %1968 = vmatpush1.bf16.msra.mxu0 %v1960
    %1969 = vmatprep.subr.bf16.mxu0 0
    %1970 = vmatpush1.bf16.msra.mxu0 %v1961
    %1971 = vmatprep.subr.bf16.mxu0 0
    %1972 = vmatpush1.bf16.msra.mxu0 0
    %1973 = vmatprep.subr.bf16.mxu0 0
    %1974 = vmatpush1.bf16.msra.mxu0 0
    %1975 = vmatprep.subr.bf16.mxu0 0
    %1976 = vmatpush1.bf16.msra.mxu0 0
    %1977 = vmatprep.subr.bf16.mxu0 0
    %1978 = vmatpush1.bf16.msra.mxu0 0
    %1979 = vmatprep.subr.bf16.mxu0 0
    %1980 = vmatpush1.bf16.msra.mxu0 0
    %1981 = vmatprep.subr.bf16.mxu0 0
    %1982 = vmatpush1.bf16.msra.mxu0 0
    %1983 = vmatprep.subr.bf16.mxu0 0
    %1984 = vmatpush1.bf16.msra.mxu0 0
    %1985 = vmatprep.subr.bf16.mxu0 0
    %1986 = vmatpush1.bf16.msra.mxu0 0
    %1987 = vmatprep.subr.bf16.mxu0 0
    %1988 = vmatpush1.bf16.msra.mxu0 0
    %1989 = vmatprep.subr.bf16.mxu0 0
    %1990 = vmatpush1.bf16.msra.mxu0 0
    %1991 = vmatprep.subr.bf16.mxu0 0
    %1992 = vmatpush1.bf16.msra.mxu0 0
    %1993 = vmatprep.subr.bf16.mxu0 0
    %1994 = vmatpush1.bf16.msra.mxu0 0
    %1995 = vmatprep.subr.bf16.mxu0 0
    %1996 = vmatpush1.bf16.msra.mxu0 0
    %1997 = vmatprep.subr.bf16.mxu0 0
    %1998 = vmatpush1.bf16.msra.mxu0 0
    %1999 = vmatprep.mubr.bf16.mxu0 0
    %2000 = vmatmul.mubr.bf16.gmra.mrb[0].mxu0 %v1965
    %v2001 = vpop.f32.mrb[0].mxu0
    %v2002 = vadd.f32 %v1951, %v2001
    %v2003 = vpop.f32.mrb[0].mxu0
    %v2004 = vpop.f32.mrb[0].mxu0
    %v2005 = vadd.f32 %v1951, %v2004
    %v2006 = vpop.f32.mrb[0].mxu0
    %2007 = vdwg.mxu0
    %v2008 = vmax.f32 %v2002, 0.0
    %v2009 = vmax.f32 %v2005, 0.0
    %v2010 = vpack.c.bf16 %v2009, %v2008
    %v2011 = vlaneseq
    %v2012 = vshrl.u32 %v2011, 7
    %v2013 = vsub.s32 0, %v2012
    %v2014 = vrot.slane %v203, %v2013
    %v2023 = vunpack.c.l.b16 %v193
    %v2024 = vunpack.c.l.b16 %v194
    %v2025 = vunpack.c.l.b16 %v195
    %v2026 = vunpack.c.l.b16 %v196
    %v2027 = vunpack.c.l.b16 %v197
    %v2028 = vunpack.c.l.b16 %v198
    %v2029 = vunpack.c.l.b16 %v199
    %v2030 = vunpack.c.l.b16 %v200
    %v2031 = vpack.c.b16 %v2024, %v2023
    %v2032 = vpack.c.b16 %v2026, %v2025
    %v2033 = vpack.c.b16 %v2028, %v2027
    %v2034 = vpack.c.b16 %v2030, %v2029
    %vm2039 = vcmask 523264
    %v2041 = vsel %vm2039, %v2010, 0
    %2043 = vmatprep.subr.bf16.mxu0 0
    %2044 = vmatpush1.bf16.msra.mxu0 %v2031
    %2045 = vmatprep.subr.bf16.mxu0 0
    %2046 = vmatpush1.bf16.msra.mxu0 %v2032
    %2047 = vmatprep.subr.bf16.mxu0 0
    %2048 = vmatpush1.bf16.msra.mxu0 %v2033
    %2049 = vmatprep.subr.bf16.mxu0 0
    %2050 = vmatpush1.bf16.msra.mxu0 %v2034
    %2051 = vmatprep.subr.bf16.mxu0 0
    %2052 = vmatpush1.bf16.msra.mxu0 0
    %2053 = vmatprep.subr.bf16.mxu0 0
    %2054 = vmatpush1.bf16.msra.mxu0 0
    %2055 = vmatprep.subr.bf16.mxu0 0
    %2056 = vmatpush1.bf16.msra.mxu0 0
    %2057 = vmatprep.subr.bf16.mxu0 0
    %2058 = vmatpush1.bf16.msra.mxu0 0
    %2059 = vmatprep.subr.bf16.mxu0 0
    %2060 = vmatpush1.bf16.msra.mxu0 0
    %2061 = vmatprep.subr.bf16.mxu0 0
    %2062 = vmatpush1.bf16.msra.mxu0 0
    %2063 = vmatprep.subr.bf16.mxu0 0
    %2064 = vmatpush1.bf16.msra.mxu0 0
    %2065 = vmatprep.subr.bf16.mxu0 0
    %2066 = vmatpush1.bf16.msra.mxu0 0
    %2067 = vmatprep.subr.bf16.mxu0 0
    %2068 = vmatpush1.bf16.msra.mxu0 0
    %2069 = vmatprep.subr.bf16.mxu0 0
    %2070 = vmatpush1.bf16.msra.mxu0 0
    %2071 = vmatprep.subr.bf16.mxu0 0
    %2072 = vmatpush1.bf16.msra.mxu0 0
    %2073 = vmatprep.subr.bf16.mxu0 0
    %2074 = vmatpush1.bf16.msra.mxu0 0
    %2075 = vmatprep.mubr.bf16.mxu0 0
    %2076 = vmatmul.mubr.bf16.gmra.mrb[0].mxu0 %v2041
    %v2077 = vpop.f32.mrb[0].mxu0
    %v2078 = vadd.f32 %v2014, %v2077
    %v2079 = vpop.f32.mrb[0].mxu0
    %v2080 = vpop.f32.mrb[0].mxu0
    %v2081 = vadd.f32 %v2014, %v2080
    %v2082 = vpop.f32.mrb[0].mxu0
    %2083 = vdwg.mxu0
    %v2086 = vcombine.high %v2078, %v2078
    %v2087 = vcombine.high %v2081, %v2081
    %v2090 = vadd.f32 %v1827, %v2078
    %v2091 = vadd.f32 %v1828, %v2086
    %v2092 = vadd.f32 %v1829, %v2081
    %v2093 = vadd.f32 %v1830, %v2087
    %s2094 = scalar_lea.vmem [#allocation5], 80
    %v2095 = vld [vmem:[%s2094] sm:$0xf]
    %v2096 = vld [vmem:[%s2094 + $0x4] sm:$0xf]
    %v2097 = vld [vmem:[%s2094 + $0x8] sm:$0xf]
    %v2098 = vld [vmem:[%s2094 + $0xc] sm:$0xf]
    %v2099 = vld [vmem:[%s2094 + $0x10] sm:$0xf]
    %v2100 = vld [vmem:[%s2094 + $0x14] sm:$0xf]
    %v2101 = vld [vmem:[%s2094 + $0x18] sm:$0xf]
    %v2102 = vld [vmem:[%s2094 + $0x1c] sm:$0xf]
    %v2103 = vld [vmem:[%s2094 + $0x20] sm:$0xf]
    %v2104 = vld [vmem:[%s2094 + $0x24] sm:$0xf]
    %v2105 = vld [vmem:[%s2094 + $0x28] sm:$0xf]
    %v2106 = vld [vmem:[%s2094 + $0x2c] sm:$0xf]
    %v2107 = vld [vmem:[%s2094 + $0x30] sm:$0xf]
    %v2108 = vld [vmem:[%s2094 + $0x34] sm:$0xf]
    %v2109 = vld [vmem:[%s2094 + $0x38] sm:$0xf]
    %v2110 = vld [vmem:[%s2094 + $0x3c] sm:$0xf]
    %v2111 = vld [vmem:[%s2094 + $0x40] sm:$0xf]
    %v2112 = vld [vmem:[%s2094 + $0x44] sm:$0xf]
    %v2113 = vld [vmem:[%s2094 + $0x48] sm:$0xf]
    %v2114 = vld [vmem:[%s2094 + $0x4c] sm:$0xf]
    %s2115 = scalar_lea.vmem [#allocation7], 8
    %v2116 = vld [vmem:[%s2115] sm:$0x1]
    %v2117 = vld [vmem:[%s2115 + $0x1] sm:$0x1]
    %v2118 = vld [vmem:[%s2115 + $0x2] sm:$0x1]
    %v2119 = vld [vmem:[%s2115 + $0x3] sm:$0x1]
    %v2120 = vld [vmem:[%s2115 + $0x4] sm:$0x1]
    %v2121 = vld [vmem:[%s2115 + $0x5] sm:$0x1]
    %v2122 = vld [vmem:[%s2115 + $0x6] sm:$0x1]
    %v2127 = vcombine.low %v2090, %v2091
    %v2128 = vcombine.low %v2092, %v2093
    %v2131 = vsel %vm216, %v2127, 0.0
    %2132 = vadd.xlane.f32.xlu0 %v2131
    %v2133 = vpop.xlane.xlu0 %2132
    %v2134 = vsel %vm216, %v2128, 0.0
    %2135 = vadd.xlane.f32.xlu0 %v2134
    %v2136 = vpop.xlane.xlu0 %2135
    %v2137 = vmul.f32 %v2133, %v223
    %v2138 = vmul.f32 %v2136, %v223
    %v2142 = vunpack.c.l.s4 839922192
    %v2143 = vunpack.c.0.s8 %v2142
    %v2144 = vlaneseq
    %v2145 = vshrl.u32 %v2144, 7
    %v2146 = vsub.s32 %v2143, %v2145
    %v2147 = vrot.slane %v2137, %v2146
    %v2149 = vunpack.c.l.s4 1985246804
    %v2150 = vunpack.c.0.s8 %v2149
    %v2151 = vlaneseq
    %v2152 = vshrl.u32 %v2151, 7
    %v2153 = vsub.s32 %v2150, %v2152
    %v2154 = vrot.slane %v2137, %v2153
    %v2156 = vunpack.c.l.s4 839922192
    %v2157 = vunpack.c.0.s8 %v2156
    %v2158 = vlaneseq
    %v2159 = vshrl.u32 %v2158, 7
    %v2160 = vsub.s32 %v2157, %v2159
    %v2161 = vrot.slane %v2138, %v2160
    %v2163 = vunpack.c.l.s4 1985246804
    %v2164 = vunpack.c.0.s8 %v2163
    %v2165 = vlaneseq
    %v2166 = vshrl.u32 %v2165, 7
    %v2167 = vsub.s32 %v2164, %v2166
    %v2168 = vrot.slane %v2138, %v2167
    %v2173 = vsub.f32 %v2090, %v2147
    %v2174 = vsub.f32 %v2091, %v2154
    %v2175 = vsub.f32 %v2092, %v2161
    %v2176 = vsub.f32 %v2093, %v2168
    %v2177 = vmul.f32 %v2173, %v2173
    %v2178 = vmul.f32 %v2174, %v2174
    %v2179 = vmul.f32 %v2175, %v2175
    %v2180 = vmul.f32 %v2176, %v2176
    %v2185 = vcombine.low %v2177, %v2178
    %v2186 = vcombine.low %v2179, %v2180
    %v2189 = vsel %vm216, %v2185, 0.0
    %2190 = vadd.xlane.f32.xlu0 %v2189
    %v2191 = vpop.xlane.xlu0 %2190
    %v2192 = vsel %vm216, %v2186, 0.0
    %2193 = vadd.xlane.f32.xlu0 %v2192
    %v2194 = vpop.xlane.xlu0 %2193
    %v2195 = vmul.f32 %v2191, 0.032258064
    %v2196 = vmul.f32 %v2194, 0.032258064
    %v2197 = vrsqrt.pop %v2195
    %v2198 = vmul.f32 %v2195, %v2197
    %vm2199 = vcmp.eq.f32.partialorder %v2195, inf
    %v2200 = vsel %vm2199, %v2195, %v2198
    %vm2201 = vcmp.eq.f32.partialorder %v2195, 0.0
    %v2202 = vand.u32 %v2195, 2147483648
    %v2203 = vsel %vm2201, %v2202, %v2200
    %v2204 = vrsqrt.pop %v2196
    %v2205 = vmul.f32 %v2196, %v2204
    %vm2206 = vcmp.eq.f32.partialorder %v2196, inf
    %v2207 = vsel %vm2206, %v2196, %v2205
    %vm2208 = vcmp.eq.f32.partialorder %v2196, 0.0
    %v2209 = vand.u32 %v2196, 2147483648
    %v2210 = vsel %vm2208, %v2209, %v2207
    %v2211 = vadd.f32 %v2203, 1e-06
    %v2212 = vadd.f32 %v2210, 1e-06
    %v2213 = vrcp.pop %v2211
    %v2214 = vmul.f32 1.0, %v2213
    %v2215 = vrcp.pop %v2212
    %v2216 = vmul.f32 1.0, %v2215
    %v2217 = vlaneseq
    %v2218 = vshrl.u32 %v2217, 7
    %v2219 = vsub.s32 0, %v2218
    %v2220 = vrot.slane %v2119, %v2219
    %v2225 = vcombine.low %v2173, %v2174
    %v2226 = vcombine.low %v2175, %v2176
    %v2229 = vmul.f32 %v2220, %v2225
    %v2230 = vmul.f32 %v2220, %v2226
    %v2231 = vmul.f32 %v2229, %v2214
    %v2232 = vmul.f32 %v2230, %v2216
    %v2233 = vlaneseq
    %v2234 = vshrl.u32 %v2233, 7
    %v2235 = vsub.s32 0, %v2234
    %v2236 = vrot.slane %v2120, %v2235
    %v2237 = vadd.f32 %v2231, %v2236
    %v2238 = vadd.f32 %v2232, %v2236
    %v2239 = vpack.c.bf16 %v2238, %v2237
    %v2244 = vunpack.c.l.b16 %v2095
    %v2245 = vunpack.c.l.b16 %v2096
    %v2246 = vunpack.c.l.b16 %v2097
    %v2247 = vunpack.c.l.b16 %v2098
    %v2248 = vpack.c.b16 %v2245, %v2244
    %v2249 = vpack.c.b16 %v2247, %v2246
    %v2253 = vsel %vm216, %v2239, 0
    %2255 = vmatprep.subr.bf16.mxu0 0
    %2256 = vmatpush1.bf16.msra.mxu0 %v2248
    %2257 = vmatprep.subr.bf16.mxu0 0
    %2258 = vmatpush1.bf16.msra.mxu0 %v2249
    %2259 = vmatprep.subr.bf16.mxu0 0
    %2260 = vmatpush1.bf16.msra.mxu0 0
    %2261 = vmatprep.subr.bf16.mxu0 0
    %2262 = vmatpush1.bf16.msra.mxu0 0
    %2263 = vmatprep.subr.bf16.mxu0 0
    %2264 = vmatpush1.bf16.msra.mxu0 0
    %2265 = vmatprep.subr.bf16.mxu0 0
    %2266 = vmatpush1.bf16.msra.mxu0 0
    %2267 = vmatprep.subr.bf16.mxu0 0
    %2268 = vmatpush1.bf16.msra.mxu0 0
    %2269 = vmatprep.subr.bf16.mxu0 0
    %2270 = vmatpush1.bf16.msra.mxu0 0
    %2271 = vmatprep.subr.bf16.mxu0 0
    %2272 = vmatpush1.bf16.msra.mxu0 0
    %2273 = vmatprep.subr.bf16.mxu0 0
    %2274 = vmatpush1.bf16.msra.mxu0 0
    %2275 = vmatprep.subr.bf16.mxu0 0
    %2276 = vmatpush1.bf16.msra.mxu0 0
    %2277 = vmatprep.subr.bf16.mxu0 0
    %2278 = vmatpush1.bf16.msra.mxu0 0
    %2279 = vmatprep.subr.bf16.mxu0 0
    %2280 = vmatpush1.bf16.msra.mxu0 0
    %2281 = vmatprep.subr.bf16.mxu0 0
    %2282 = vmatpush1.bf16.msra.mxu0 0
    %2283 = vmatprep.subr.bf16.mxu0 0
    %2284 = vmatpush1.bf16.msra.mxu0 0
    %2285 = vmatprep.subr.bf16.mxu0 0
    %2286 = vmatpush1.bf16.msra.mxu0 0
    %2287 = vmatprep.mubr.bf16.mxu0 0
    %2288 = vmatmul.mubr.bf16.gmra.mrb[0].mxu0 %v2253
    %v2289 = vpop.f32.mrb[0].mxu0
    %v2290 = vadd.f32 0.0, %v2289
    %v2291 = vpop.f32.mrb[0].mxu0
    %v2292 = vpop.f32.mrb[0].mxu0
    %v2293 = vadd.f32 0.0, %v2292
    %v2294 = vpop.f32.mrb[0].mxu0
    %2295 = vdwg.mxu0
    %2298 = vrot.lane.b32.xlu0 %v2290, 120
    %v2299 = vpop.permute.xlu0 %2298
    %2300 = vrot.lane.b32.xlu0 %v2293, 120
    %v2301 = vpop.permute.xlu0 %2300
    %2302 = vrot.lane.b32.xlu0 %v2290, 112
    %v2303 = vpop.permute.xlu0 %2302
    %2304 = vrot.lane.b32.xlu0 %v2293, 112
    %v2305 = vpop.permute.xlu0 %2304
    %2306 = vrot.lane.b32.xlu0 %v2290, 104
    %v2307 = vpop.permute.xlu0 %2306
    %2308 = vrot.lane.b32.xlu0 %v2293, 104
    %v2309 = vpop.permute.xlu0 %2308
    %2310 = vrot.lane.b32.xlu0 %v2290, 96
    %v2311 = vpop.permute.xlu0 %2310
    %v2312 = vsel %vm399, %v2290, 0
    %v2314 = vsel %vm399, %v2311, 0
    %2316 = vmatprep.subr.mxu0 0.0
    %2317 = vmatpush1.xpose.msra.mxu0 %v2314
    %2318 = vmatprep.subr.mxu0 0.0
    %2319 = vmatpush1.xpose.msra.mxu0 0.0
    %2320 = vmatprep.subr.mxu0 0.0
    %2321 = vmatpush1.xpose.msra.mxu0 0.0
    %2322 = vmatprep.subr.mxu0 0.0
    %2323 = vmatpush1.xpose.msra.mxu0 0.0
    %2324 = vmatprep.subr.mxu0 0.0
    %2325 = vmatpush1.xpose.msra.mxu0 0.0
    %2326 = vmatprep.subr.mxu0 0.0
    %2327 = vmatpush1.xpose.msra.mxu0 0.0
    %2328 = vmatprep.subr.mxu0 0.0
    %2329 = vmatpush1.xpose.msra.mxu0 0.0
    %2330 = vmatprep.subr.mxu0 0.0
    %2331 = vmatpush1.xpose.msra.mxu0 0.0
    %2332 = vmatprep.subr.mxu0 0.0
    %2333 = vmatpush1.xpose.msra.mxu0 0.0
    %2334 = vmatprep.subr.mxu0 0.0
    %2335 = vmatpush1.xpose.msra.mxu0 0.0
    %2336 = vmatprep.subr.mxu0 0.0
    %2337 = vmatpush1.xpose.msra.mxu0 0.0
    %2338 = vmatprep.subr.mxu0 0.0
    %2339 = vmatpush1.xpose.msra.mxu0 0.0
    %2340 = vmatprep.subr.mxu0 0.0
    %2341 = vmatpush1.xpose.msra.mxu0 0.0
    %2342 = vmatprep.subr.mxu0 0.0
    %2343 = vmatpush1.xpose.msra.mxu0 0.0
    %2344 = vmatprep.subr.mxu0 0.0
    %2345 = vmatpush1.xpose.msra.mxu0 0.0
    %2346 = vmatprep.subr.mxu0 0.0
    %2347 = vmatpush1.xpose.msra.mxu0 0.0
    %2348 = vmatprep.subr.mxu0 0.0
    %2349 = vmatpush1.xpose.msra.mxu0 0.0
    %2350 = vmatprep.subr.mxu0 0.0
    %2351 = vmatpush1.xpose.msra.mxu0 0.0
    %2352 = vmatprep.subr.mxu0 0.0
    %2353 = vmatpush1.xpose.msra.mxu0 0.0
    %2354 = vmatprep.subr.mxu0 0.0
    %2355 = vmatpush1.xpose.msra.mxu0 0.0
    %2356 = vmatprep.subr.mxu0 0.0
    %2357 = vmatpush1.xpose.msra.mxu0 0.0
    %2358 = vmatprep.subr.mxu0 0.0
    %2359 = vmatpush1.xpose.msra.mxu0 0.0
    %2360 = vmatprep.subr.mxu0 0.0
    %2361 = vmatpush1.xpose.msra.mxu0 0.0
    %2362 = vmatprep.subr.mxu0 0.0
    %2363 = vmatpush1.xpose.msra.mxu0 0.0
    %2364 = vmatprep.subr.mxu0 0.0
    %2365 = vmatpush1.xpose.msra.mxu0 0.0
    %2366 = vmatprep.subr.mxu0 0.0
    %2367 = vmatpush1.xpose.msra.mxu0 0.0
    %2368 = vmatprep.subr.mxu0 0.0
    %2369 = vmatpush1.xpose.msra.mxu0 0.0
    %2370 = vmatprep.subr.mxu0 0.0
    %2371 = vmatpush1.xpose.msra.mxu0 0.0
    %2372 = vmatprep.subr.mxu0 0.0
    %2373 = vmatpush1.xpose.msra.mxu0 0.0
    %2374 = vmatprep.subr.mxu0 0.0
    %2375 = vmatpush1.xpose.msra.mxu0 0.0
    %2376 = vmatprep.subr.mxu0 0.0
    %2377 = vmatpush1.xpose.msra.mxu0 0.0
    %2378 = vmatprep.subr.mxu0 0.0
    %2379 = vmatpush1.xpose.msra.mxu0 0.0
    %2380 = vmatprep.mubr.f32.mxu0 0.0
    %2381 = vmatmul.mubr.f32.gmra.mrb[0].mxu0 %v2312
    %v2382 = vpop.f32.mrb[0].mxu0
    %v2383 = vadd.f32 0.0, %v2382
    %v2384 = vpop.f32.mrb[0].mxu0
    %2385 = vdwg.mxu0
    %2386 = vrot.lane.b32.xlu0 %v2299, 96
    %v2387 = vpop.permute.xlu0 %2386
    %v2388 = vsel %vm399, %v2299, 0
    %v2390 = vsel %vm399, %v2387, 0
    %2392 = vmatprep.subr.mxu0 0.0
    %2393 = vmatpush1.xpose.msra.mxu0 %v2390
    %2394 = vmatprep.subr.mxu0 0.0
    %2395 = vmatpush1.xpose.msra.mxu0 0.0
    %2396 = vmatprep.subr.mxu0 0.0
    %2397 = vmatpush1.xpose.msra.mxu0 0.0
    %2398 = vmatprep.subr.mxu0 0.0
    %2399 = vmatpush1.xpose.msra.mxu0 0.0
    %2400 = vmatprep.subr.mxu0 0.0
    %2401 = vmatpush1.xpose.msra.mxu0 0.0
    %2402 = vmatprep.subr.mxu0 0.0
    %2403 = vmatpush1.xpose.msra.mxu0 0.0
    %2404 = vmatprep.subr.mxu0 0.0
    %2405 = vmatpush1.xpose.msra.mxu0 0.0
    %2406 = vmatprep.subr.mxu0 0.0
    %2407 = vmatpush1.xpose.msra.mxu0 0.0
    %2408 = vmatprep.subr.mxu0 0.0
    %2409 = vmatpush1.xpose.msra.mxu0 0.0
    %2410 = vmatprep.subr.mxu0 0.0
    %2411 = vmatpush1.xpose.msra.mxu0 0.0
    %2412 = vmatprep.subr.mxu0 0.0
    %2413 = vmatpush1.xpose.msra.mxu0 0.0
    %2414 = vmatprep.subr.mxu0 0.0
    %2415 = vmatpush1.xpose.msra.mxu0 0.0
    %2416 = vmatprep.subr.mxu0 0.0
    %2417 = vmatpush1.xpose.msra.mxu0 0.0
    %2418 = vmatprep.subr.mxu0 0.0
    %2419 = vmatpush1.xpose.msra.mxu0 0.0
    %2420 = vmatprep.subr.mxu0 0.0
    %2421 = vmatpush1.xpose.msra.mxu0 0.0
    %2422 = vmatprep.subr.mxu0 0.0
    %2423 = vmatpush1.xpose.msra.mxu0 0.0
    %2424 = vmatprep.subr.mxu0 0.0
    %2425 = vmatpush1.xpose.msra.mxu0 0.0
    %2426 = vmatprep.subr.mxu0 0.0
    %2427 = vmatpush1.xpose.msra.mxu0 0.0
    %2428 = vmatprep.subr.mxu0 0.0
    %2429 = vmatpush1.xpose.msra.mxu0 0.0
    %2430 = vmatprep.subr.mxu0 0.0
    %2431 = vmatpush1.xpose.msra.mxu0 0.0
    %2432 = vmatprep.subr.mxu0 0.0
    %2433 = vmatpush1.xpose.msra.mxu0 0.0
    %2434 = vmatprep.subr.mxu0 0.0
    %2435 = vmatpush1.xpose.msra.mxu0 0.0
    %2436 = vmatprep.subr.mxu0 0.0
    %2437 = vmatpush1.xpose.msra.mxu0 0.0
    %2438 = vmatprep.subr.mxu0 0.0
    %2439 = vmatpush1.xpose.msra.mxu0 0.0
    %2440 = vmatprep.subr.mxu0 0.0
    %2441 = vmatpush1.xpose.msra.mxu0 0.0
    %2442 = vmatprep.subr.mxu0 0.0
    %2443 = vmatpush1.xpose.msra.mxu0 0.0
    %2444 = vmatprep.subr.mxu0 0.0
    %2445 = vmatpush1.xpose.msra.mxu0 0.0
    %2446 = vmatprep.subr.mxu0 0.0
    %2447 = vmatpush1.xpose.msra.mxu0 0.0
    %2448 = vmatprep.subr.mxu0 0.0
    %2449 = vmatpush1.xpose.msra.mxu0 0.0
    %2450 = vmatprep.subr.mxu0 0.0
    %2451 = vmatpush1.xpose.msra.mxu0 0.0
    %2452 = vmatprep.subr.mxu0 0.0
    %2453 = vmatpush1.xpose.msra.mxu0 0.0
    %2454 = vmatprep.subr.mxu0 0.0
    %2455 = vmatpush1.xpose.msra.mxu0 0.0
    %2456 = vmatprep.mubr.f32.mxu0 0.0
    %2457 = vmatmul.mubr.f32.gmra.mrb[0].mxu0 %v2388
    %v2458 = vpop.f32.mrb[0].mxu0
    %v2459 = vadd.f32 0.0, %v2458
    %v2460 = vpop.f32.mrb[0].mxu0
    %2461 = vdwg.mxu0
    %2462 = vrot.lane.b32.xlu0 %v2303, 96
    %v2463 = vpop.permute.xlu0 %2462
    %v2464 = vsel %vm399, %v2303, 0
    %v2466 = vsel %vm399, %v2463, 0
    %2468 = vmatprep.subr.mxu0 0.0
    %2469 = vmatpush1.xpose.msra.mxu0 %v2466
    %2470 = vmatprep.subr.mxu0 0.0
    %2471 = vmatpush1.xpose.msra.mxu0 0.0
    %2472 = vmatprep.subr.mxu0 0.0
    %2473 = vmatpush1.xpose.msra.mxu0 0.0
    %2474 = vmatprep.subr.mxu0 0.0
    %2475 = vmatpush1.xpose.msra.mxu0 0.0
    %2476 = vmatprep.subr.mxu0 0.0
    %2477 = vmatpush1.xpose.msra.mxu0 0.0
    %2478 = vmatprep.subr.mxu0 0.0
    %2479 = vmatpush1.xpose.msra.mxu0 0.0
    %2480 = vmatprep.subr.mxu0 0.0
    %2481 = vmatpush1.xpose.msra.mxu0 0.0
    %2482 = vmatprep.subr.mxu0 0.0
    %2483 = vmatpush1.xpose.msra.mxu0 0.0
    %2484 = vmatprep.subr.mxu0 0.0
    %2485 = vmatpush1.xpose.msra.mxu0 0.0
    %2486 = vmatprep.subr.mxu0 0.0
    %2487 = vmatpush1.xpose.msra.mxu0 0.0
    %2488 = vmatprep.subr.mxu0 0.0
    %2489 = vmatpush1.xpose.msra.mxu0 0.0
    %2490 = vmatprep.subr.mxu0 0.0
    %2491 = vmatpush1.xpose.msra.mxu0 0.0
    %2492 = vmatprep.subr.mxu0 0.0
    %2493 = vmatpush1.xpose.msra.mxu0 0.0
    %2494 = vmatprep.subr.mxu0 0.0
    %2495 = vmatpush1.xpose.msra.mxu0 0.0
    %2496 = vmatprep.subr.mxu0 0.0
    %2497 = vmatpush1.xpose.msra.mxu0 0.0
    %2498 = vmatprep.subr.mxu0 0.0
    %2499 = vmatpush1.xpose.msra.mxu0 0.0
    %2500 = vmatprep.subr.mxu0 0.0
    %2501 = vmatpush1.xpose.msra.mxu0 0.0
    %2502 = vmatprep.subr.mxu0 0.0
    %2503 = vmatpush1.xpose.msra.mxu0 0.0
    %2504 = vmatprep.subr.mxu0 0.0
    %2505 = vmatpush1.xpose.msra.mxu0 0.0
    %2506 = vmatprep.subr.mxu0 0.0
    %2507 = vmatpush1.xpose.msra.mxu0 0.0
    %2508 = vmatprep.subr.mxu0 0.0
    %2509 = vmatpush1.xpose.msra.mxu0 0.0
    %2510 = vmatprep.subr.mxu0 0.0
    %2511 = vmatpush1.xpose.msra.mxu0 0.0
    %2512 = vmatprep.subr.mxu0 0.0
    %2513 = vmatpush1.xpose.msra.mxu0 0.0
    %2514 = vmatprep.subr.mxu0 0.0
    %2515 = vmatpush1.xpose.msra.mxu0 0.0
    %2516 = vmatprep.subr.mxu0 0.0
    %2517 = vmatpush1.xpose.msra.mxu0 0.0
    %2518 = vmatprep.subr.mxu0 0.0
    %2519 = vmatpush1.xpose.msra.mxu0 0.0
    %2520 = vmatprep.subr.mxu0 0.0
    %2521 = vmatpush1.xpose.msra.mxu0 0.0
    %2522 = vmatprep.subr.mxu0 0.0
    %2523 = vmatpush1.xpose.msra.mxu0 0.0
    %2524 = vmatprep.subr.mxu0 0.0
    %2525 = vmatpush1.xpose.msra.mxu0 0.0
    %2526 = vmatprep.subr.mxu0 0.0
    %2527 = vmatpush1.xpose.msra.mxu0 0.0
    %2528 = vmatprep.subr.mxu0 0.0
    %2529 = vmatpush1.xpose.msra.mxu0 0.0
    %2530 = vmatprep.subr.mxu0 0.0
    %2531 = vmatpush1.xpose.msra.mxu0 0.0
    %2532 = vmatprep.mubr.f32.mxu0 0.0
    %2533 = vmatmul.mubr.f32.gmra.mrb[0].mxu0 %v2464
    %v2534 = vpop.f32.mrb[0].mxu0
    %v2535 = vadd.f32 0.0, %v2534
    %v2536 = vpop.f32.mrb[0].mxu0
    %2537 = vdwg.mxu0
    %2538 = vrot.lane.b32.xlu0 %v2307, 96
    %v2539 = vpop.permute.xlu0 %2538
    %v2540 = vsel %vm399, %v2307, 0
    %v2542 = vsel %vm399, %v2539, 0
    %2544 = vmatprep.subr.mxu0 0.0
    %2545 = vmatpush1.xpose.msra.mxu0 %v2542
    %2546 = vmatprep.subr.mxu0 0.0
    %2547 = vmatpush1.xpose.msra.mxu0 0.0
    %2548 = vmatprep.subr.mxu0 0.0
    %2549 = vmatpush1.xpose.msra.mxu0 0.0
    %2550 = vmatprep.subr.mxu0 0.0
    %2551 = vmatpush1.xpose.msra.mxu0 0.0
    %2552 = vmatprep.subr.mxu0 0.0
    %2553 = vmatpush1.xpose.msra.mxu0 0.0
    %2554 = vmatprep.subr.mxu0 0.0
    %2555 = vmatpush1.xpose.msra.mxu0 0.0
    %2556 = vmatprep.subr.mxu0 0.0
    %2557 = vmatpush1.xpose.msra.mxu0 0.0
    %2558 = vmatprep.subr.mxu0 0.0
    %2559 = vmatpush1.xpose.msra.mxu0 0.0
    %2560 = vmatprep.subr.mxu0 0.0
    %2561 = vmatpush1.xpose.msra.mxu0 0.0
    %2562 = vmatprep.subr.mxu0 0.0
    %2563 = vmatpush1.xpose.msra.mxu0 0.0
    %2564 = vmatprep.subr.mxu0 0.0
    %2565 = vmatpush1.xpose.msra.mxu0 0.0
    %2566 = vmatprep.subr.mxu0 0.0
    %2567 = vmatpush1.xpose.msra.mxu0 0.0
    %2568 = vmatprep.subr.mxu0 0.0
    %2569 = vmatpush1.xpose.msra.mxu0 0.0
    %2570 = vmatprep.subr.mxu0 0.0
    %2571 = vmatpush1.xpose.msra.mxu0 0.0
    %2572 = vmatprep.subr.mxu0 0.0
    %2573 = vmatpush1.xpose.msra.mxu0 0.0
    %2574 = vmatprep.subr.mxu0 0.0
    %2575 = vmatpush1.xpose.msra.mxu0 0.0
    %2576 = vmatprep.subr.mxu0 0.0
    %2577 = vmatpush1.xpose.msra.mxu0 0.0
    %2578 = vmatprep.subr.mxu0 0.0
    %2579 = vmatpush1.xpose.msra.mxu0 0.0
    %2580 = vmatprep.subr.mxu0 0.0
    %2581 = vmatpush1.xpose.msra.mxu0 0.0
    %2582 = vmatprep.subr.mxu0 0.0
    %2583 = vmatpush1.xpose.msra.mxu0 0.0
    %2584 = vmatprep.subr.mxu0 0.0
    %2585 = vmatpush1.xpose.msra.mxu0 0.0
    %2586 = vmatprep.subr.mxu0 0.0
    %2587 = vmatpush1.xpose.msra.mxu0 0.0
    %2588 = vmatprep.subr.mxu0 0.0
    %2589 = vmatpush1.xpose.msra.mxu0 0.0
    %2590 = vmatprep.subr.mxu0 0.0
    %2591 = vmatpush1.xpose.msra.mxu0 0.0
    %2592 = vmatprep.subr.mxu0 0.0
    %2593 = vmatpush1.xpose.msra.mxu0 0.0
    %2594 = vmatprep.subr.mxu0 0.0
    %2595 = vmatpush1.xpose.msra.mxu0 0.0
    %2596 = vmatprep.subr.mxu0 0.0
    %2597 = vmatpush1.xpose.msra.mxu0 0.0
    %2598 = vmatprep.subr.mxu0 0.0
    %2599 = vmatpush1.xpose.msra.mxu0 0.0
    %2600 = vmatprep.subr.mxu0 0.0
    %2601 = vmatpush1.xpose.msra.mxu0 0.0
    %2602 = vmatprep.subr.mxu0 0.0
    %2603 = vmatpush1.xpose.msra.mxu0 0.0
    %2604 = vmatprep.subr.mxu0 0.0
    %2605 = vmatpush1.xpose.msra.mxu0 0.0
    %2606 = vmatprep.subr.mxu0 0.0
    %2607 = vmatpush1.xpose.msra.mxu0 0.0
    %2608 = vmatprep.mubr.f32.mxu0 0.0
    %2609 = vmatmul.mubr.f32.gmra.mrb[0].mxu0 %v2540
    %v2610 = vpop.f32.mrb[0].mxu0
    %v2611 = vadd.f32 0.0, %v2610
    %v2612 = vpop.f32.mrb[0].mxu0
    %2613 = vdwg.mxu0
    %2614 = vrot.lane.b32.xlu0 %v2293, 96
    %v2615 = vpop.permute.xlu0 %2614
    %v2616 = vsel %vm399, %v2293, 0
    %v2618 = vsel %vm399, %v2615, 0
    %2620 = vmatprep.subr.mxu0 0.0
    %2621 = vmatpush1.xpose.msra.mxu0 %v2618
    %2622 = vmatprep.subr.mxu0 0.0
    %2623 = vmatpush1.xpose.msra.mxu0 0.0
    %2624 = vmatprep.subr.mxu0 0.0
    %2625 = vmatpush1.xpose.msra.mxu0 0.0
    %2626 = vmatprep.subr.mxu0 0.0
    %2627 = vmatpush1.xpose.msra.mxu0 0.0
    %2628 = vmatprep.subr.mxu0 0.0
    %2629 = vmatpush1.xpose.msra.mxu0 0.0
    %2630 = vmatprep.subr.mxu0 0.0
    %2631 = vmatpush1.xpose.msra.mxu0 0.0
    %2632 = vmatprep.subr.mxu0 0.0
    %2633 = vmatpush1.xpose.msra.mxu0 0.0
    %2634 = vmatprep.subr.mxu0 0.0
    %2635 = vmatpush1.xpose.msra.mxu0 0.0
    %2636 = vmatprep.subr.mxu0 0.0
    %2637 = vmatpush1.xpose.msra.mxu0 0.0
    %2638 = vmatprep.subr.mxu0 0.0
    %2639 = vmatpush1.xpose.msra.mxu0 0.0
    %2640 = vmatprep.subr.mxu0 0.0
    %2641 = vmatpush1.xpose.msra.mxu0 0.0
    %2642 = vmatprep.subr.mxu0 0.0
    %2643 = vmatpush1.xpose.msra.mxu0 0.0
    %2644 = vmatprep.subr.mxu0 0.0
    %2645 = vmatpush1.xpose.msra.mxu0 0.0
    %2646 = vmatprep.subr.mxu0 0.0
    %2647 = vmatpush1.xpose.msra.mxu0 0.0
    %2648 = vmatprep.subr.mxu0 0.0
    %2649 = vmatpush1.xpose.msra.mxu0 0.0
    %2650 = vmatprep.subr.mxu0 0.0
    %2651 = vmatpush1.xpose.msra.mxu0 0.0
    %2652 = vmatprep.subr.mxu0 0.0
    %2653 = vmatpush1.xpose.msra.mxu0 0.0
    %2654 = vmatprep.subr.mxu0 0.0
    %2655 = vmatpush1.xpose.msra.mxu0 0.0
    %2656 = vmatprep.subr.mxu0 0.0
    %2657 = vmatpush1.xpose.msra.mxu0 0.0
    %2658 = vmatprep.subr.mxu0 0.0
    %2659 = vmatpush1.xpose.msra.mxu0 0.0
    %2660 = vmatprep.subr.mxu0 0.0
    %2661 = vmatpush1.xpose.msra.mxu0 0.0
    %2662 = vmatprep.subr.mxu0 0.0
    %2663 = vmatpush1.xpose.msra.mxu0 0.0
    %2664 = vmatprep.subr.mxu0 0.0
    %2665 = vmatpush1.xpose.msra.mxu0 0.0
    %2666 = vmatprep.subr.mxu0 0.0
    %2667 = vmatpush1.xpose.msra.mxu0 0.0
    %2668 = vmatprep.subr.mxu0 0.0
    %2669 = vmatpush1.xpose.msra.mxu0 0.0
    %2670 = vmatprep.subr.mxu0 0.0
    %2671 = vmatpush1.xpose.msra.mxu0 0.0
    %2672 = vmatprep.subr.mxu0 0.0
    %2673 = vmatpush1.xpose.msra.mxu0 0.0
    %2674 = vmatprep.subr.mxu0 0.0
    %2675 = vmatpush1.xpose.msra.mxu0 0.0
    %2676 = vmatprep.subr.mxu0 0.0
    %2677 = vmatpush1.xpose.msra.mxu0 0.0
    %2678 = vmatprep.subr.mxu0 0.0
    %2679 = vmatpush1.xpose.msra.mxu0 0.0
    %2680 = vmatprep.subr.mxu0 0.0
    %2681 = vmatpush1.xpose.msra.mxu0 0.0
    %2682 = vmatprep.subr.mxu0 0.0
    %2683 = vmatpush1.xpose.msra.mxu0 0.0
    %2684 = vmatprep.mubr.f32.mxu0 0.0
    %2685 = vmatmul.mubr.f32.gmra.mrb[0].mxu0 %v2616
    %v2686 = vpop.f32.mrb[0].mxu0
    %v2687 = vadd.f32 0.0, %v2686
    %v2688 = vpop.f32.mrb[0].mxu0
    %2689 = vdwg.mxu0
    %2690 = vrot.lane.b32.xlu0 %v2301, 96
    %v2691 = vpop.permute.xlu0 %2690
    %v2692 = vsel %vm399, %v2301, 0
    %v2694 = vsel %vm399, %v2691, 0
    %2696 = vmatprep.subr.mxu0 0.0
    %2697 = vmatpush1.xpose.msra.mxu0 %v2694
    %2698 = vmatprep.subr.mxu0 0.0
    %2699 = vmatpush1.xpose.msra.mxu0 0.0
    %2700 = vmatprep.subr.mxu0 0.0
    %2701 = vmatpush1.xpose.msra.mxu0 0.0
    %2702 = vmatprep.subr.mxu0 0.0
    %2703 = vmatpush1.xpose.msra.mxu0 0.0
    %2704 = vmatprep.subr.mxu0 0.0
    %2705 = vmatpush1.xpose.msra.mxu0 0.0
    %2706 = vmatprep.subr.mxu0 0.0
    %2707 = vmatpush1.xpose.msra.mxu0 0.0
    %2708 = vmatprep.subr.mxu0 0.0
    %2709 = vmatpush1.xpose.msra.mxu0 0.0
    %2710 = vmatprep.subr.mxu0 0.0
    %2711 = vmatpush1.xpose.msra.mxu0 0.0
    %2712 = vmatprep.subr.mxu0 0.0
    %2713 = vmatpush1.xpose.msra.mxu0 0.0
    %2714 = vmatprep.subr.mxu0 0.0
    %2715 = vmatpush1.xpose.msra.mxu0 0.0
    %2716 = vmatprep.subr.mxu0 0.0
    %2717 = vmatpush1.xpose.msra.mxu0 0.0
    %2718 = vmatprep.subr.mxu0 0.0
    %2719 = vmatpush1.xpose.msra.mxu0 0.0
    %2720 = vmatprep.subr.mxu0 0.0
    %2721 = vmatpush1.xpose.msra.mxu0 0.0
    %2722 = vmatprep.subr.mxu0 0.0
    %2723 = vmatpush1.xpose.msra.mxu0 0.0
    %2724 = vmatprep.subr.mxu0 0.0
    %2725 = vmatpush1.xpose.msra.mxu0 0.0
    %2726 = vmatprep.subr.mxu0 0.0
    %2727 = vmatpush1.xpose.msra.mxu0 0.0
    %2728 = vmatprep.subr.mxu0 0.0
    %2729 = vmatpush1.xpose.msra.mxu0 0.0
    %2730 = vmatprep.subr.mxu0 0.0
    %2731 = vmatpush1.xpose.msra.mxu0 0.0
    %2732 = vmatprep.subr.mxu0 0.0
    %2733 = vmatpush1.xpose.msra.mxu0 0.0
    %2734 = vmatprep.subr.mxu0 0.0
    %2735 = vmatpush1.xpose.msra.mxu0 0.0
    %2736 = vmatprep.subr.mxu0 0.0
    %2737 = vmatpush1.xpose.msra.mxu0 0.0
    %2738 = vmatprep.subr.mxu0 0.0
    %2739 = vmatpush1.xpose.msra.mxu0 0.0
    %2740 = vmatprep.subr.mxu0 0.0
    %2741 = vmatpush1.xpose.msra.mxu0 0.0
    %2742 = vmatprep.subr.mxu0 0.0
    %2743 = vmatpush1.xpose.msra.mxu0 0.0
    %2744 = vmatprep.subr.mxu0 0.0
    %2745 = vmatpush1.xpose.msra.mxu0 0.0
    %2746 = vmatprep.subr.mxu0 0.0
    %2747 = vmatpush1.xpose.msra.mxu0 0.0
    %2748 = vmatprep.subr.mxu0 0.0
    %2749 = vmatpush1.xpose.msra.mxu0 0.0
    %2750 = vmatprep.subr.mxu0 0.0
    %2751 = vmatpush1.xpose.msra.mxu0 0.0
    %2752 = vmatprep.subr.mxu0 0.0
    %2753 = vmatpush1.xpose.msra.mxu0 0.0
    %2754 = vmatprep.subr.mxu0 0.0
    %2755 = vmatpush1.xpose.msra.mxu0 0.0
    %2756 = vmatprep.subr.mxu0 0.0
    %2757 = vmatpush1.xpose.msra.mxu0 0.0
    %2758 = vmatprep.subr.mxu0 0.0
    %2759 = vmatpush1.xpose.msra.mxu0 0.0
    %2760 = vmatprep.mubr.f32.mxu0 0.0
    %2761 = vmatmul.mubr.f32.gmra.mrb[0].mxu0 %v2692
    %v2762 = vpop.f32.mrb[0].mxu0
    %v2763 = vadd.f32 0.0, %v2762
    %v2764 = vpop.f32.mrb[0].mxu0
    %2765 = vdwg.mxu0
    %2766 = vrot.lane.b32.xlu0 %v2305, 96
    %v2767 = vpop.permute.xlu0 %2766
    %v2768 = vsel %vm399, %v2305, 0
    %v2770 = vsel %vm399, %v2767, 0
    %2772 = vmatprep.subr.mxu0 0.0
    %2773 = vmatpush1.xpose.msra.mxu0 %v2770
    %2774 = vmatprep.subr.mxu0 0.0
    %2775 = vmatpush1.xpose.msra.mxu0 0.0
    %2776 = vmatprep.subr.mxu0 0.0
    %2777 = vmatpush1.xpose.msra.mxu0 0.0
    %2778 = vmatprep.subr.mxu0 0.0
    %2779 = vmatpush1.xpose.msra.mxu0 0.0
    %2780 = vmatprep.subr.mxu0 0.0
    %2781 = vmatpush1.xpose.msra.mxu0 0.0
    %2782 = vmatprep.subr.mxu0 0.0
    %2783 = vmatpush1.xpose.msra.mxu0 0.0
    %2784 = vmatprep.subr.mxu0 0.0
    %2785 = vmatpush1.xpose.msra.mxu0 0.0
    %2786 = vmatprep.subr.mxu0 0.0
    %2787 = vmatpush1.xpose.msra.mxu0 0.0
    %2788 = vmatprep.subr.mxu0 0.0
    %2789 = vmatpush1.xpose.msra.mxu0 0.0
    %2790 = vmatprep.subr.mxu0 0.0
    %2791 = vmatpush1.xpose.msra.mxu0 0.0
    %2792 = vmatprep.subr.mxu0 0.0
    %2793 = vmatpush1.xpose.msra.mxu0 0.0
    %2794 = vmatprep.subr.mxu0 0.0
    %2795 = vmatpush1.xpose.msra.mxu0 0.0
    %2796 = vmatprep.subr.mxu0 0.0
    %2797 = vmatpush1.xpose.msra.mxu0 0.0
    %2798 = vmatprep.subr.mxu0 0.0
    %2799 = vmatpush1.xpose.msra.mxu0 0.0
    %2800 = vmatprep.subr.mxu0 0.0
    %2801 = vmatpush1.xpose.msra.mxu0 0.0
    %2802 = vmatprep.subr.mxu0 0.0
    %2803 = vmatpush1.xpose.msra.mxu0 0.0
    %2804 = vmatprep.subr.mxu0 0.0
    %2805 = vmatpush1.xpose.msra.mxu0 0.0
    %2806 = vmatprep.subr.mxu0 0.0
    %2807 = vmatpush1.xpose.msra.mxu0 0.0
    %2808 = vmatprep.subr.mxu0 0.0
    %2809 = vmatpush1.xpose.msra.mxu0 0.0
    %2810 = vmatprep.subr.mxu0 0.0
    %2811 = vmatpush1.xpose.msra.mxu0 0.0
    %2812 = vmatprep.subr.mxu0 0.0
    %2813 = vmatpush1.xpose.msra.mxu0 0.0
    %2814 = vmatprep.subr.mxu0 0.0
    %2815 = vmatpush1.xpose.msra.mxu0 0.0
    %2816 = vmatprep.subr.mxu0 0.0
    %2817 = vmatpush1.xpose.msra.mxu0 0.0
    %2818 = vmatprep.subr.mxu0 0.0
    %2819 = vmatpush1.xpose.msra.mxu0 0.0
    %2820 = vmatprep.subr.mxu0 0.0
    %2821 = vmatpush1.xpose.msra.mxu0 0.0
    %2822 = vmatprep.subr.mxu0 0.0
    %2823 = vmatpush1.xpose.msra.mxu0 0.0
    %2824 = vmatprep.subr.mxu0 0.0
    %2825 = vmatpush1.xpose.msra.mxu0 0.0
    %2826 = vmatprep.subr.mxu0 0.0
    %2827 = vmatpush1.xpose.msra.mxu0 0.0
    %2828 = vmatprep.subr.mxu0 0.0
    %2829 = vmatpush1.xpose.msra.mxu0 0.0
    %2830 = vmatprep.subr.mxu0 0.0
    %2831 = vmatpush1.xpose.msra.mxu0 0.0
    %2832 = vmatprep.subr.mxu0 0.0
    %2833 = vmatpush1.xpose.msra.mxu0 0.0
    %2834 = vmatprep.subr.mxu0 0.0
    %2835 = vmatpush1.xpose.msra.mxu0 0.0
    %2836 = vmatprep.mubr.f32.mxu0 0.0
    %2837 = vmatmul.mubr.f32.gmra.mrb[0].mxu0 %v2768
    %v2838 = vpop.f32.mrb[0].mxu0
    %v2839 = vadd.f32 0.0, %v2838
    %v2840 = vpop.f32.mrb[0].mxu0
    %2841 = vdwg.mxu0
    %2842 = vrot.lane.b32.xlu0 %v2309, 96
    %v2843 = vpop.permute.xlu0 %2842
    %v2844 = vsel %vm399, %v2309, 0
    %v2846 = vsel %vm399, %v2843, 0
    %2848 = vmatprep.subr.mxu0 0.0
    %2849 = vmatpush1.xpose.msra.mxu0 %v2846
    %2850 = vmatprep.subr.mxu0 0.0
    %2851 = vmatpush1.xpose.msra.mxu0 0.0
    %2852 = vmatprep.subr.mxu0 0.0
    %2853 = vmatpush1.xpose.msra.mxu0 0.0
    %2854 = vmatprep.subr.mxu0 0.0
    %2855 = vmatpush1.xpose.msra.mxu0 0.0
    %2856 = vmatprep.subr.mxu0 0.0
    %2857 = vmatpush1.xpose.msra.mxu0 0.0
    %2858 = vmatprep.subr.mxu0 0.0
    %2859 = vmatpush1.xpose.msra.mxu0 0.0
    %2860 = vmatprep.subr.mxu0 0.0
    %2861 = vmatpush1.xpose.msra.mxu0 0.0
    %2862 = vmatprep.subr.mxu0 0.0
    %2863 = vmatpush1.xpose.msra.mxu0 0.0
    %2864 = vmatprep.subr.mxu0 0.0
    %2865 = vmatpush1.xpose.msra.mxu0 0.0
    %2866 = vmatprep.subr.mxu0 0.0
    %2867 = vmatpush1.xpose.msra.mxu0 0.0
    %2868 = vmatprep.subr.mxu0 0.0
    %2869 = vmatpush1.xpose.msra.mxu0 0.0
    %2870 = vmatprep.subr.mxu0 0.0
    %2871 = vmatpush1.xpose.msra.mxu0 0.0
    %2872 = vmatprep.subr.mxu0 0.0
    %2873 = vmatpush1.xpose.msra.mxu0 0.0
    %2874 = vmatprep.subr.mxu0 0.0
    %2875 = vmatpush1.xpose.msra.mxu0 0.0
    %2876 = vmatprep.subr.mxu0 0.0
    %2877 = vmatpush1.xpose.msra.mxu0 0.0
    %2878 = vmatprep.subr.mxu0 0.0
    %2879 = vmatpush1.xpose.msra.mxu0 0.0
    %2880 = vmatprep.subr.mxu0 0.0
    %2881 = vmatpush1.xpose.msra.mxu0 0.0
    %2882 = vmatprep.subr.mxu0 0.0
    %2883 = vmatpush1.xpose.msra.mxu0 0.0
    %2884 = vmatprep.subr.mxu0 0.0
    %2885 = vmatpush1.xpose.msra.mxu0 0.0
    %2886 = vmatprep.subr.mxu0 0.0
    %2887 = vmatpush1.xpose.msra.mxu0 0.0
    %2888 = vmatprep.subr.mxu0 0.0
    %2889 = vmatpush1.xpose.msra.mxu0 0.0
    %2890 = vmatprep.subr.mxu0 0.0
    %2891 = vmatpush1.xpose.msra.mxu0 0.0
    %2892 = vmatprep.subr.mxu0 0.0
    %2893 = vmatpush1.xpose.msra.mxu0 0.0
    %2894 = vmatprep.subr.mxu0 0.0
    %2895 = vmatpush1.xpose.msra.mxu0 0.0
    %2896 = vmatprep.subr.mxu0 0.0
    %2897 = vmatpush1.xpose.msra.mxu0 0.0
    %2898 = vmatprep.subr.mxu0 0.0
    %2899 = vmatpush1.xpose.msra.mxu0 0.0
    %2900 = vmatprep.subr.mxu0 0.0
    %2901 = vmatpush1.xpose.msra.mxu0 0.0
    %2902 = vmatprep.subr.mxu0 0.0
    %2903 = vmatpush1.xpose.msra.mxu0 0.0
    %2904 = vmatprep.subr.mxu0 0.0
    %2905 = vmatpush1.xpose.msra.mxu0 0.0
    %2906 = vmatprep.subr.mxu0 0.0
    %2907 = vmatpush1.xpose.msra.mxu0 0.0
    %2908 = vmatprep.subr.mxu0 0.0
    %2909 = vmatpush1.xpose.msra.mxu0 0.0
    %2910 = vmatprep.subr.mxu0 0.0
    %2911 = vmatpush1.xpose.msra.mxu0 0.0
    %2912 = vmatprep.mubr.f32.mxu0 0.0
    %2913 = vmatmul.mubr.f32.gmra.mrb[0].mxu0 %v2844
    %v2914 = vpop.f32.mrb[0].mxu0
    %v2915 = vadd.f32 0.0, %v2914
    %v2916 = vpop.f32.mrb[0].mxu0
    %2917 = vdwg.mxu0
    %v2918 = vmul.f32 %v2383, 0.35355338
    %v2919 = vmul.f32 %v2459, 0.35355338
    %v2920 = vmul.f32 %v2535, 0.35355338
    %v2921 = vmul.f32 %v2611, 0.35355338
    %v2922 = vmul.f32 %v2687, 0.35355338
    %v2923 = vmul.f32 %v2763, 0.35355338
    %v2924 = vmul.f32 %v2839, 0.35355338
    %v2925 = vmul.f32 %v2915, 0.35355338
    %v2926 = vadd.f32 %v2918, %v1017
    %v2927 = vadd.f32 %v2919, %v1017
    %v2928 = vadd.f32 %v2920, %v1017
    %v2929 = vadd.f32 %v2921, %v1017
    %v2930 = vadd.f32 %v2922, %v1021
    %v2931 = vadd.f32 %v2923, %v1021
    %v2932 = vadd.f32 %v2924, %v1021
    %v2933 = vadd.f32 %v2925, %v1021
    %v2934 = vsel %vm399, %v2926, -inf
    %2935 = vmax.xlane.f32.xlu0 %v2934
    %v2936 = vpop.xlane.xlu0 %2935
    %v2937 = vsel %vm399, %v2927, -inf
    %2938 = vmax.xlane.f32.xlu0 %v2937
    %v2939 = vpop.xlane.xlu0 %2938
    %v2940 = vsel %vm399, %v2928, -inf
    %2941 = vmax.xlane.f32.xlu0 %v2940
    %v2942 = vpop.xlane.xlu0 %2941
    %v2943 = vsel %vm399, %v2929, -inf
    %2944 = vmax.xlane.f32.xlu0 %v2943
    %v2945 = vpop.xlane.xlu0 %2944
    %v2946 = vsel %vm399, %v2930, -inf
    %2947 = vmax.xlane.f32.xlu0 %v2946
    %v2948 = vpop.xlane.xlu0 %2947
    %v2949 = vsel %vm399, %v2931, -inf
    %2950 = vmax.xlane.f32.xlu0 %v2949
    %v2951 = vpop.xlane.xlu0 %2950
    %v2952 = vsel %vm399, %v2932, -inf
    %2953 = vmax.xlane.f32.xlu0 %v2952
    %v2954 = vpop.xlane.xlu0 %2953
    %v2955 = vsel %vm399, %v2933, -inf
    %2956 = vmax.xlane.f32.xlu0 %v2955
    %v2957 = vpop.xlane.xlu0 %2956
    %v2958 = vsub.f32 %v2926, %v2936
    %v2959 = vsub.f32 %v2927, %v2939
    %v2960 = vsub.f32 %v2928, %v2942
    %v2961 = vsub.f32 %v2929, %v2945
    %v2962 = vsub.f32 %v2930, %v2948
    %v2963 = vsub.f32 %v2931, %v2951
    %v2964 = vsub.f32 %v2932, %v2954
    %v2965 = vsub.f32 %v2933, %v2957
    %v2966 = vmul.f32 %v2958, 1.442695
    %v2967 = vpow.pop %v2966
    %v2968 = vmul.f32 %v2959, 1.442695
    %v2969 = vpow.pop %v2968
    %v2970 = vmul.f32 %v2960, 1.442695
    %v2971 = vpow.pop %v2970
    %v2972 = vmul.f32 %v2961, 1.442695
    %v2973 = vpow.pop %v2972
    %v2974 = vmul.f32 %v2962, 1.442695
    %v2975 = vpow.pop %v2974
    %v2976 = vmul.f32 %v2963, 1.442695
    %v2977 = vpow.pop %v2976
    %v2978 = vmul.f32 %v2964, 1.442695
    %v2979 = vpow.pop %v2978
    %v2980 = vmul.f32 %v2965, 1.442695
    %v2981 = vpow.pop %v2980
    %v2982 = vsel %vm399, %v2967, 0.0
    %2983 = vadd.xlane.f32.xlu0 %v2982
    %v2984 = vpop.xlane.xlu0 %2983
    %v2985 = vsel %vm399, %v2969, 0.0
    %2986 = vadd.xlane.f32.xlu0 %v2985
    %v2987 = vpop.xlane.xlu0 %2986
    %v2988 = vsel %vm399, %v2971, 0.0
    %2989 = vadd.xlane.f32.xlu0 %v2988
    %v2990 = vpop.xlane.xlu0 %2989
    %v2991 = vsel %vm399, %v2973, 0.0
    %2992 = vadd.xlane.f32.xlu0 %v2991
    %v2993 = vpop.xlane.xlu0 %2992
    %v2994 = vsel %vm399, %v2975, 0.0
    %2995 = vadd.xlane.f32.xlu0 %v2994
    %v2996 = vpop.xlane.xlu0 %2995
    %v2997 = vsel %vm399, %v2977, 0.0
    %2998 = vadd.xlane.f32.xlu0 %v2997
    %v2999 = vpop.xlane.xlu0 %2998
    %v3000 = vsel %vm399, %v2979, 0.0
    %3001 = vadd.xlane.f32.xlu0 %v3000
    %v3002 = vpop.xlane.xlu0 %3001
    %v3003 = vsel %vm399, %v2981, 0.0
    %3004 = vadd.xlane.f32.xlu0 %v3003
    %v3005 = vpop.xlane.xlu0 %3004
    %v3006 = vrcp.pop %v2984
    %v3007 = vrcp.pop %v2987
    %v3008 = vrcp.pop %v2990
    %v3009 = vrcp.pop %v2993
    %v3010 = vrcp.pop %v2996
    %v3011 = vrcp.pop %v2999
    %v3012 = vrcp.pop %v3002
    %v3013 = vrcp.pop %v3005
    %v3014 = vmul.f32 %v2967, %v3006
    %v3015 = vmul.f32 %v2969, %v3007
    %v3016 = vmul.f32 %v2971, %v3008
    %v3017 = vmul.f32 %v2973, %v3009
    %v3018 = vmul.f32 %v2975, %v3010
    %v3019 = vmul.f32 %v2977, %v3011
    %v3020 = vmul.f32 %v2979, %v3012
    %v3021 = vmul.f32 %v2981, %v3013
    %3022 = vrot.lane.b32.xlu0 %v2290, 64
    %v3023 = vpop.permute.xlu0 %3022
    %v3026 = vsel %vm399, %v3014, 0
    %3028 = vmatprep.subr.mxu0 0.0
    %3029 = vmatpush1.msra.mxu0 %v3023
    %3030 = vmatprep.subr.mxu0 0.0
    %3031 = vmatpush1.msra.mxu0 0.0
    %3032 = vmatprep.subr.mxu0 0.0
    %3033 = vmatpush1.msra.mxu0 0.0
    %3034 = vmatprep.subr.mxu0 0.0
    %3035 = vmatpush1.msra.mxu0 0.0
    %3036 = vmatprep.subr.mxu0 0.0
    %3037 = vmatpush1.msra.mxu0 0.0
    %3038 = vmatprep.subr.mxu0 0.0
    %3039 = vmatpush1.msra.mxu0 0.0
    %3040 = vmatprep.subr.mxu0 0.0
    %3041 = vmatpush1.msra.mxu0 0.0
    %3042 = vmatprep.subr.mxu0 0.0
    %3043 = vmatpush1.msra.mxu0 0.0
    %3044 = vmatprep.subr.mxu0 0.0
    %3045 = vmatpush1.msra.mxu0 0.0
    %3046 = vmatprep.subr.mxu0 0.0
    %3047 = vmatpush1.msra.mxu0 0.0
    %3048 = vmatprep.subr.mxu0 0.0
    %3049 = vmatpush1.msra.mxu0 0.0
    %3050 = vmatprep.subr.mxu0 0.0
    %3051 = vmatpush1.msra.mxu0 0.0
    %3052 = vmatprep.subr.mxu0 0.0
    %3053 = vmatpush1.msra.mxu0 0.0
    %3054 = vmatprep.subr.mxu0 0.0
    %3055 = vmatpush1.msra.mxu0 0.0
    %3056 = vmatprep.subr.mxu0 0.0
    %3057 = vmatpush1.msra.mxu0 0.0
    %3058 = vmatprep.subr.mxu0 0.0
    %3059 = vmatpush1.msra.mxu0 0.0
    %3060 = vmatprep.subr.mxu0 0.0
    %3061 = vmatpush1.msra.mxu0 0.0
    %3062 = vmatprep.subr.mxu0 0.0
    %3063 = vmatpush1.msra.mxu0 0.0
    %3064 = vmatprep.subr.mxu0 0.0
    %3065 = vmatpush1.msra.mxu0 0.0
    %3066 = vmatprep.subr.mxu0 0.0
    %3067 = vmatpush1.msra.mxu0 0.0
    %3068 = vmatprep.subr.mxu0 0.0
    %3069 = vmatpush1.msra.mxu0 0.0
    %3070 = vmatprep.subr.mxu0 0.0
    %3071 = vmatpush1.msra.mxu0 0.0
    %3072 = vmatprep.subr.mxu0 0.0
    %3073 = vmatpush1.msra.mxu0 0.0
    %3074 = vmatprep.subr.mxu0 0.0
    %3075 = vmatpush1.msra.mxu0 0.0
    %3076 = vmatprep.subr.mxu0 0.0
    %3077 = vmatpush1.msra.mxu0 0.0
    %3078 = vmatprep.subr.mxu0 0.0
    %3079 = vmatpush1.msra.mxu0 0.0
    %3080 = vmatprep.subr.mxu0 0.0
    %3081 = vmatpush1.msra.mxu0 0.0
    %3082 = vmatprep.subr.mxu0 0.0
    %3083 = vmatpush1.msra.mxu0 0.0
    %3084 = vmatprep.subr.mxu0 0.0
    %3085 = vmatpush1.msra.mxu0 0.0
    %3086 = vmatprep.subr.mxu0 0.0
    %3087 = vmatpush1.msra.mxu0 0.0
    %3088 = vmatprep.subr.mxu0 0.0
    %3089 = vmatpush1.msra.mxu0 0.0
    %3090 = vmatprep.subr.mxu0 0.0
    %3091 = vmatpush1.msra.mxu0 0.0
    %3092 = vmatprep.mubr.f32.mxu0 0.0
    %3093 = vmatmul.mubr.f32.gmra.mrb[0].mxu0 %v3026
    %v3094 = vpop.f32.mrb[0].mxu0
    %v3095 = vadd.f32 0.0, %v3094
    %v3096 = vpop.f32.mrb[0].mxu0
    %3097 = vdwg.mxu0
    %3098 = vrot.lane.b32.xlu0 %v2299, 64
    %v3099 = vpop.permute.xlu0 %3098
    %v3102 = vsel %vm399, %v3015, 0
    %3104 = vmatprep.subr.mxu0 0.0
    %3105 = vmatpush1.msra.mxu0 %v3099
    %3106 = vmatprep.subr.mxu0 0.0
    %3107 = vmatpush1.msra.mxu0 0.0
    %3108 = vmatprep.subr.mxu0 0.0
    %3109 = vmatpush1.msra.mxu0 0.0
    %3110 = vmatprep.subr.mxu0 0.0
    %3111 = vmatpush1.msra.mxu0 0.0
    %3112 = vmatprep.subr.mxu0 0.0
    %3113 = vmatpush1.msra.mxu0 0.0
    %3114 = vmatprep.subr.mxu0 0.0
    %3115 = vmatpush1.msra.mxu0 0.0
    %3116 = vmatprep.subr.mxu0 0.0
    %3117 = vmatpush1.msra.mxu0 0.0
    %3118 = vmatprep.subr.mxu0 0.0
    %3119 = vmatpush1.msra.mxu0 0.0
    %3120 = vmatprep.subr.mxu0 0.0
    %3121 = vmatpush1.msra.mxu0 0.0
    %3122 = vmatprep.subr.mxu0 0.0
    %3123 = vmatpush1.msra.mxu0 0.0
    %3124 = vmatprep.subr.mxu0 0.0
    %3125 = vmatpush1.msra.mxu0 0.0
    %3126 = vmatprep.subr.mxu0 0.0
    %3127 = vmatpush1.msra.mxu0 0.0
    %3128 = vmatprep.subr.mxu0 0.0
    %3129 = vmatpush1.msra.mxu0 0.0
    %3130 = vmatprep.subr.mxu0 0.0
    %3131 = vmatpush1.msra.mxu0 0.0
    %3132 = vmatprep.subr.mxu0 0.0
    %3133 = vmatpush1.msra.mxu0 0.0
    %3134 = vmatprep.subr.mxu0 0.0
    %3135 = vmatpush1.msra.mxu0 0.0
    %3136 = vmatprep.subr.mxu0 0.0
    %3137 = vmatpush1.msra.mxu0 0.0
    %3138 = vmatprep.subr.mxu0 0.0
    %3139 = vmatpush1.msra.mxu0 0.0
    %3140 = vmatprep.subr.mxu0 0.0
    %3141 = vmatpush1.msra.mxu0 0.0
    %3142 = vmatprep.subr.mxu0 0.0
    %3143 = vmatpush1.msra.mxu0 0.0
    %3144 = vmatprep.subr.mxu0 0.0
    %3145 = vmatpush1.msra.mxu0 0.0
    %3146 = vmatprep.subr.mxu0 0.0
    %3147 = vmatpush1.msra.mxu0 0.0
    %3148 = vmatprep.subr.mxu0 0.0
    %3149 = vmatpush1.msra.mxu0 0.0
    %3150 = vmatprep.subr.mxu0 0.0
    %3151 = vmatpush1.msra.mxu0 0.0
    %3152 = vmatprep.subr.mxu0 0.0
    %3153 = vmatpush1.msra.mxu0 0.0
    %3154 = vmatprep.subr.mxu0 0.0
    %3155 = vmatpush1.msra.mxu0 0.0
    %3156 = vmatprep.subr.mxu0 0.0
    %3157 = vmatpush1.msra.mxu0 0.0
    %3158 = vmatprep.subr.mxu0 0.0
    %3159 = vmatpush1.msra.mxu0 0.0
    %3160 = vmatprep.subr.mxu0 0.0
    %3161 = vmatpush1.msra.mxu0 0.0
    %3162 = vmatprep.subr.mxu0 0.0
    %3163 = vmatpush1.msra.mxu0 0.0
    %3164 = vmatprep.subr.mxu0 0.0
    %3165 = vmatpush1.msra.mxu0 0.0
    %3166 = vmatprep.subr.mxu0 0.0
    %3167 = vmatpush1.msra.mxu0 0.0
    %3168 = vmatprep.mubr.f32.mxu0 0.0
    %3169 = vmatmul.mubr.f32.gmra.mrb[0].mxu0 %v3102
    %v3170 = vpop.f32.mrb[0].mxu0
    %v3171 = vadd.f32 0.0, %v3170
    %v3172 = vpop.f32.mrb[0].mxu0
    %3173 = vdwg.mxu0
    %3174 = vrot.lane.b32.xlu0 %v2303, 64
    %v3175 = vpop.permute.xlu0 %3174
    %v3178 = vsel %vm399, %v3016, 0
    %3180 = vmatprep.subr.mxu0 0.0
    %3181 = vmatpush1.msra.mxu0 %v3175
    %3182 = vmatprep.subr.mxu0 0.0
    %3183 = vmatpush1.msra.mxu0 0.0
    %3184 = vmatprep.subr.mxu0 0.0
    %3185 = vmatpush1.msra.mxu0 0.0
    %3186 = vmatprep.subr.mxu0 0.0
    %3187 = vmatpush1.msra.mxu0 0.0
    %3188 = vmatprep.subr.mxu0 0.0
    %3189 = vmatpush1.msra.mxu0 0.0
    %3190 = vmatprep.subr.mxu0 0.0
    %3191 = vmatpush1.msra.mxu0 0.0
    %3192 = vmatprep.subr.mxu0 0.0
    %3193 = vmatpush1.msra.mxu0 0.0
    %3194 = vmatprep.subr.mxu0 0.0
    %3195 = vmatpush1.msra.mxu0 0.0
    %3196 = vmatprep.subr.mxu0 0.0
    %3197 = vmatpush1.msra.mxu0 0.0
    %3198 = vmatprep.subr.mxu0 0.0
    %3199 = vmatpush1.msra.mxu0 0.0
    %3200 = vmatprep.subr.mxu0 0.0
    %3201 = vmatpush1.msra.mxu0 0.0
    %3202 = vmatprep.subr.mxu0 0.0
    %3203 = vmatpush1.msra.mxu0 0.0
    %3204 = vmatprep.subr.mxu0 0.0
    %3205 = vmatpush1.msra.mxu0 0.0
    %3206 = vmatprep.subr.mxu0 0.0
    %3207 = vmatpush1.msra.mxu0 0.0
    %3208 = vmatprep.subr.mxu0 0.0
    %3209 = vmatpush1.msra.mxu0 0.0
    %3210 = vmatprep.subr.mxu0 0.0
    %3211 = vmatpush1.msra.mxu0 0.0
    %3212 = vmatprep.subr.mxu0 0.0
    %3213 = vmatpush1.msra.mxu0 0.0
    %3214 = vmatprep.subr.mxu0 0.0
    %3215 = vmatpush1.msra.mxu0 0.0
    %3216 = vmatprep.subr.mxu0 0.0
    %3217 = vmatpush1.msra.mxu0 0.0
    %3218 = vmatprep.subr.mxu0 0.0
    %3219 = vmatpush1.msra.mxu0 0.0
    %3220 = vmatprep.subr.mxu0 0.0
    %3221 = vmatpush1.msra.mxu0 0.0
    %3222 = vmatprep.subr.mxu0 0.0
    %3223 = vmatpush1.msra.mxu0 0.0
    %3224 = vmatprep.subr.mxu0 0.0
    %3225 = vmatpush1.msra.mxu0 0.0
    %3226 = vmatprep.subr.mxu0 0.0
    %3227 = vmatpush1.msra.mxu0 0.0
    %3228 = vmatprep.subr.mxu0 0.0
    %3229 = vmatpush1.msra.mxu0 0.0
    %3230 = vmatprep.subr.mxu0 0.0
    %3231 = vmatpush1.msra.mxu0 0.0
    %3232 = vmatprep.subr.mxu0 0.0
    %3233 = vmatpush1.msra.mxu0 0.0
    %3234 = vmatprep.subr.mxu0 0.0
    %3235 = vmatpush1.msra.mxu0 0.0
    %3236 = vmatprep.subr.mxu0 0.0
    %3237 = vmatpush1.msra.mxu0 0.0
    %3238 = vmatprep.subr.mxu0 0.0
    %3239 = vmatpush1.msra.mxu0 0.0
    %3240 = vmatprep.subr.mxu0 0.0
    %3241 = vmatpush1.msra.mxu0 0.0
    %3242 = vmatprep.subr.mxu0 0.0
    %3243 = vmatpush1.msra.mxu0 0.0
    %3244 = vmatprep.mubr.f32.mxu0 0.0
    %3245 = vmatmul.mubr.f32.gmra.mrb[0].mxu0 %v3178
    %v3246 = vpop.f32.mrb[0].mxu0
    %v3247 = vadd.f32 0.0, %v3246
    %v3248 = vpop.f32.mrb[0].mxu0
    %3249 = vdwg.mxu0
    %3250 = vrot.lane.b32.xlu0 %v2307, 64
    %v3251 = vpop.permute.xlu0 %3250
    %v3254 = vsel %vm399, %v3017, 0
    %3256 = vmatprep.subr.mxu0 0.0
    %3257 = vmatpush1.msra.mxu0 %v3251
    %3258 = vmatprep.subr.mxu0 0.0
    %3259 = vmatpush1.msra.mxu0 0.0
    %3260 = vmatprep.subr.mxu0 0.0
    %3261 = vmatpush1.msra.mxu0 0.0
    %3262 = vmatprep.subr.mxu0 0.0
    %3263 = vmatpush1.msra.mxu0 0.0
    %3264 = vmatprep.subr.mxu0 0.0
    %3265 = vmatpush1.msra.mxu0 0.0
    %3266 = vmatprep.subr.mxu0 0.0
    %3267 = vmatpush1.msra.mxu0 0.0
    %3268 = vmatprep.subr.mxu0 0.0
    %3269 = vmatpush1.msra.mxu0 0.0
    %3270 = vmatprep.subr.mxu0 0.0
    %3271 = vmatpush1.msra.mxu0 0.0
    %3272 = vmatprep.subr.mxu0 0.0
    %3273 = vmatpush1.msra.mxu0 0.0
    %3274 = vmatprep.subr.mxu0 0.0
    %3275 = vmatpush1.msra.mxu0 0.0
    %3276 = vmatprep.subr.mxu0 0.0
    %3277 = vmatpush1.msra.mxu0 0.0
    %3278 = vmatprep.subr.mxu0 0.0
    %3279 = vmatpush1.msra.mxu0 0.0
    %3280 = vmatprep.subr.mxu0 0.0
    %3281 = vmatpush1.msra.mxu0 0.0
    %3282 = vmatprep.subr.mxu0 0.0
    %3283 = vmatpush1.msra.mxu0 0.0
    %3284 = vmatprep.subr.mxu0 0.0
    %3285 = vmatpush1.msra.mxu0 0.0
    %3286 = vmatprep.subr.mxu0 0.0
    %3287 = vmatpush1.msra.mxu0 0.0
    %3288 = vmatprep.subr.mxu0 0.0
    %3289 = vmatpush1.msra.mxu0 0.0
    %3290 = vmatprep.subr.mxu0 0.0
    %3291 = vmatpush1.msra.mxu0 0.0
    %3292 = vmatprep.subr.mxu0 0.0
    %3293 = vmatpush1.msra.mxu0 0.0
    %3294 = vmatprep.subr.mxu0 0.0
    %3295 = vmatpush1.msra.mxu0 0.0
    %3296 = vmatprep.subr.mxu0 0.0
    %3297 = vmatpush1.msra.mxu0 0.0
    %3298 = vmatprep.subr.mxu0 0.0
    %3299 = vmatpush1.msra.mxu0 0.0
    %3300 = vmatprep.subr.mxu0 0.0
    %3301 = vmatpush1.msra.mxu0 0.0
    %3302 = vmatprep.subr.mxu0 0.0
    %3303 = vmatpush1.msra.mxu0 0.0
    %3304 = vmatprep.subr.mxu0 0.0
    %3305 = vmatpush1.msra.mxu0 0.0
    %3306 = vmatprep.subr.mxu0 0.0
    %3307 = vmatpush1.msra.mxu0 0.0
    %3308 = vmatprep.subr.mxu0 0.0
    %3309 = vmatpush1.msra.mxu0 0.0
    %3310 = vmatprep.subr.mxu0 0.0
    %3311 = vmatpush1.msra.mxu0 0.0
    %3312 = vmatprep.subr.mxu0 0.0
    %3313 = vmatpush1.msra.mxu0 0.0
    %3314 = vmatprep.subr.mxu0 0.0
    %3315 = vmatpush1.msra.mxu0 0.0
    %3316 = vmatprep.subr.mxu0 0.0
    %3317 = vmatpush1.msra.mxu0 0.0
    %3318 = vmatprep.subr.mxu0 0.0
    %3319 = vmatpush1.msra.mxu0 0.0
    %3320 = vmatprep.mubr.f32.mxu0 0.0
    %3321 = vmatmul.mubr.f32.gmra.mrb[0].mxu0 %v3254
    %v3322 = vpop.f32.mrb[0].mxu0
    %v3323 = vadd.f32 0.0, %v3322
    %v3324 = vpop.f32.mrb[0].mxu0
    %3325 = vdwg.mxu0
    %3326 = vrot.lane.b32.xlu0 %v2293, 64
    %v3327 = vpop.permute.xlu0 %3326
    %v3330 = vsel %vm399, %v3018, 0
    %3332 = vmatprep.subr.mxu0 0.0
    %3333 = vmatpush1.msra.mxu0 %v3327
    %3334 = vmatprep.subr.mxu0 0.0
    %3335 = vmatpush1.msra.mxu0 0.0
    %3336 = vmatprep.subr.mxu0 0.0
    %3337 = vmatpush1.msra.mxu0 0.0
    %3338 = vmatprep.subr.mxu0 0.0
    %3339 = vmatpush1.msra.mxu0 0.0
    %3340 = vmatprep.subr.mxu0 0.0
    %3341 = vmatpush1.msra.mxu0 0.0
    %3342 = vmatprep.subr.mxu0 0.0
    %3343 = vmatpush1.msra.mxu0 0.0
    %3344 = vmatprep.subr.mxu0 0.0
    %3345 = vmatpush1.msra.mxu0 0.0
    %3346 = vmatprep.subr.mxu0 0.0
    %3347 = vmatpush1.msra.mxu0 0.0
    %3348 = vmatprep.subr.mxu0 0.0
    %3349 = vmatpush1.msra.mxu0 0.0
    %3350 = vmatprep.subr.mxu0 0.0
    %3351 = vmatpush1.msra.mxu0 0.0
    %3352 = vmatprep.subr.mxu0 0.0
    %3353 = vmatpush1.msra.mxu0 0.0
    %3354 = vmatprep.subr.mxu0 0.0
    %3355 = vmatpush1.msra.mxu0 0.0
    %3356 = vmatprep.subr.mxu0 0.0
    %3357 = vmatpush1.msra.mxu0 0.0
    %3358 = vmatprep.subr.mxu0 0.0
    %3359 = vmatpush1.msra.mxu0 0.0
    %3360 = vmatprep.subr.mxu0 0.0
    %3361 = vmatpush1.msra.mxu0 0.0
    %3362 = vmatprep.subr.mxu0 0.0
    %3363 = vmatpush1.msra.mxu0 0.0
    %3364 = vmatprep.subr.mxu0 0.0
    %3365 = vmatpush1.msra.mxu0 0.0
    %3366 = vmatprep.subr.mxu0 0.0
    %3367 = vmatpush1.msra.mxu0 0.0
    %3368 = vmatprep.subr.mxu0 0.0
    %3369 = vmatpush1.msra.mxu0 0.0
    %3370 = vmatprep.subr.mxu0 0.0
    %3371 = vmatpush1.msra.mxu0 0.0
    %3372 = vmatprep.subr.mxu0 0.0
    %3373 = vmatpush1.msra.mxu0 0.0
    %3374 = vmatprep.subr.mxu0 0.0
    %3375 = vmatpush1.msra.mxu0 0.0
    %3376 = vmatprep.subr.mxu0 0.0
    %3377 = vmatpush1.msra.mxu0 0.0
    %3378 = vmatprep.subr.mxu0 0.0
    %3379 = vmatpush1.msra.mxu0 0.0
    %3380 = vmatprep.subr.mxu0 0.0
    %3381 = vmatpush1.msra.mxu0 0.0
    %3382 = vmatprep.subr.mxu0 0.0
    %3383 = vmatpush1.msra.mxu0 0.0
    %3384 = vmatprep.subr.mxu0 0.0
    %3385 = vmatpush1.msra.mxu0 0.0
    %3386 = vmatprep.subr.mxu0 0.0
    %3387 = vmatpush1.msra.mxu0 0.0
    %3388 = vmatprep.subr.mxu0 0.0
    %3389 = vmatpush1.msra.mxu0 0.0
    %3390 = vmatprep.subr.mxu0 0.0
    %3391 = vmatpush1.msra.mxu0 0.0
    %3392 = vmatprep.subr.mxu0 0.0
    %3393 = vmatpush1.msra.mxu0 0.0
    %3394 = vmatprep.subr.mxu0 0.0
    %3395 = vmatpush1.msra.mxu0 0.0
    %3396 = vmatprep.mubr.f32.mxu0 0.0
    %3397 = vmatmul.mubr.f32.gmra.mrb[0].mxu0 %v3330
    %v3398 = vpop.f32.mrb[0].mxu0
    %v3399 = vadd.f32 0.0, %v3398
    %v3400 = vpop.f32.mrb[0].mxu0
    %3401 = vdwg.mxu0
    %3402 = vrot.lane.b32.xlu0 %v2301, 64
    %v3403 = vpop.permute.xlu0 %3402
    %v3406 = vsel %vm399, %v3019, 0
    %3408 = vmatprep.subr.mxu0 0.0
    %3409 = vmatpush1.msra.mxu0 %v3403
    %3410 = vmatprep.subr.mxu0 0.0
    %3411 = vmatpush1.msra.mxu0 0.0
    %3412 = vmatprep.subr.mxu0 0.0
    %3413 = vmatpush1.msra.mxu0 0.0
    %3414 = vmatprep.subr.mxu0 0.0
    %3415 = vmatpush1.msra.mxu0 0.0
    %3416 = vmatprep.subr.mxu0 0.0
    %3417 = vmatpush1.msra.mxu0 0.0
    %3418 = vmatprep.subr.mxu0 0.0
    %3419 = vmatpush1.msra.mxu0 0.0
    %3420 = vmatprep.subr.mxu0 0.0
    %3421 = vmatpush1.msra.mxu0 0.0
    %3422 = vmatprep.subr.mxu0 0.0
    %3423 = vmatpush1.msra.mxu0 0.0
    %3424 = vmatprep.subr.mxu0 0.0
    %3425 = vmatpush1.msra.mxu0 0.0
    %3426 = vmatprep.subr.mxu0 0.0
    %3427 = vmatpush1.msra.mxu0 0.0
    %3428 = vmatprep.subr.mxu0 0.0
    %3429 = vmatpush1.msra.mxu0 0.0
    %3430 = vmatprep.subr.mxu0 0.0
    %3431 = vmatpush1.msra.mxu0 0.0
    %3432 = vmatprep.subr.mxu0 0.0
    %3433 = vmatpush1.msra.mxu0 0.0
    %3434 = vmatprep.subr.mxu0 0.0
    %3435 = vmatpush1.msra.mxu0 0.0
    %3436 = vmatprep.subr.mxu0 0.0
    %3437 = vmatpush1.msra.mxu0 0.0
    %3438 = vmatprep.subr.mxu0 0.0
    %3439 = vmatpush1.msra.mxu0 0.0
    %3440 = vmatprep.subr.mxu0 0.0
    %3441 = vmatpush1.msra.mxu0 0.0
    %3442 = vmatprep.subr.mxu0 0.0
    %3443 = vmatpush1.msra.mxu0 0.0
    %3444 = vmatprep.subr.mxu0 0.0
    %3445 = vmatpush1.msra.mxu0 0.0
    %3446 = vmatprep.subr.mxu0 0.0
    %3447 = vmatpush1.msra.mxu0 0.0
    %3448 = vmatprep.subr.mxu0 0.0
    %3449 = vmatpush1.msra.mxu0 0.0
    %3450 = vmatprep.subr.mxu0 0.0
    %3451 = vmatpush1.msra.mxu0 0.0
    %3452 = vmatprep.subr.mxu0 0.0
    %3453 = vmatpush1.msra.mxu0 0.0
    %3454 = vmatprep.subr.mxu0 0.0
    %3455 = vmatpush1.msra.mxu0 0.0
    %3456 = vmatprep.subr.mxu0 0.0
    %3457 = vmatpush1.msra.mxu0 0.0
    %3458 = vmatprep.subr.mxu0 0.0
    %3459 = vmatpush1.msra.mxu0 0.0
    %3460 = vmatprep.subr.mxu0 0.0
    %3461 = vmatpush1.msra.mxu0 0.0
    %3462 = vmatprep.subr.mxu0 0.0
    %3463 = vmatpush1.msra.mxu0 0.0
    %3464 = vmatprep.subr.mxu0 0.0
    %3465 = vmatpush1.msra.mxu0 0.0
    %3466 = vmatprep.subr.mxu0 0.0
    %3467 = vmatpush1.msra.mxu0 0.0
    %3468 = vmatprep.subr.mxu0 0.0
    %3469 = vmatpush1.msra.mxu0 0.0
    %3470 = vmatprep.subr.mxu0 0.0
    %3471 = vmatpush1.msra.mxu0 0.0
    %3472 = vmatprep.mubr.f32.mxu0 0.0
    %3473 = vmatmul.mubr.f32.gmra.mrb[0].mxu0 %v3406
    %v3474 = vpop.f32.mrb[0].mxu0
    %v3475 = vadd.f32 0.0, %v3474
    %v3476 = vpop.f32.mrb[0].mxu0
    %3477 = vdwg.mxu0
    %3478 = vrot.lane.b32.xlu0 %v2305, 64
    %v3479 = vpop.permute.xlu0 %3478
    %v3482 = vsel %vm399, %v3020, 0
    %3484 = vmatprep.subr.mxu0 0.0
    %3485 = vmatpush1.msra.mxu0 %v3479
    %3486 = vmatprep.subr.mxu0 0.0
    %3487 = vmatpush1.msra.mxu0 0.0
    %3488 = vmatprep.subr.mxu0 0.0
    %3489 = vmatpush1.msra.mxu0 0.0
    %3490 = vmatprep.subr.mxu0 0.0
    %3491 = vmatpush1.msra.mxu0 0.0
    %3492 = vmatprep.subr.mxu0 0.0
    %3493 = vmatpush1.msra.mxu0 0.0
    %3494 = vmatprep.subr.mxu0 0.0
    %3495 = vmatpush1.msra.mxu0 0.0
    %3496 = vmatprep.subr.mxu0 0.0
    %3497 = vmatpush1.msra.mxu0 0.0
    %3498 = vmatprep.subr.mxu0 0.0
    %3499 = vmatpush1.msra.mxu0 0.0
    %3500 = vmatprep.subr.mxu0 0.0
    %3501 = vmatpush1.msra.mxu0 0.0
    %3502 = vmatprep.subr.mxu0 0.0
    %3503 = vmatpush1.msra.mxu0 0.0
    %3504 = vmatprep.subr.mxu0 0.0
    %3505 = vmatpush1.msra.mxu0 0.0
    %3506 = vmatprep.subr.mxu0 0.0
    %3507 = vmatpush1.msra.mxu0 0.0
    %3508 = vmatprep.subr.mxu0 0.0
    %3509 = vmatpush1.msra.mxu0 0.0
    %3510 = vmatprep.subr.mxu0 0.0
    %3511 = vmatpush1.msra.mxu0 0.0
    %3512 = vmatprep.subr.mxu0 0.0
    %3513 = vmatpush1.msra.mxu0 0.0
    %3514 = vmatprep.subr.mxu0 0.0
    %3515 = vmatpush1.msra.mxu0 0.0
    %3516 = vmatprep.subr.mxu0 0.0
    %3517 = vmatpush1.msra.mxu0 0.0
    %3518 = vmatprep.subr.mxu0 0.0
    %3519 = vmatpush1.msra.mxu0 0.0
    %3520 = vmatprep.subr.mxu0 0.0
    %3521 = vmatpush1.msra.mxu0 0.0
    %3522 = vmatprep.subr.mxu0 0.0
    %3523 = vmatpush1.msra.mxu0 0.0
    %3524 = vmatprep.subr.mxu0 0.0
    %3525 = vmatpush1.msra.mxu0 0.0
    %3526 = vmatprep.subr.mxu0 0.0
    %3527 = vmatpush1.msra.mxu0 0.0
    %3528 = vmatprep.subr.mxu0 0.0
    %3529 = vmatpush1.msra.mxu0 0.0
    %3530 = vmatprep.subr.mxu0 0.0
    %3531 = vmatpush1.msra.mxu0 0.0
    %3532 = vmatprep.subr.mxu0 0.0
    %3533 = vmatpush1.msra.mxu0 0.0
    %3534 = vmatprep.subr.mxu0 0.0
    %3535 = vmatpush1.msra.mxu0 0.0
    %3536 = vmatprep.subr.mxu0 0.0
    %3537 = vmatpush1.msra.mxu0 0.0
    %3538 = vmatprep.subr.mxu0 0.0
    %3539 = vmatpush1.msra.mxu0 0.0
    %3540 = vmatprep.subr.mxu0 0.0
    %3541 = vmatpush1.msra.mxu0 0.0
    %3542 = vmatprep.subr.mxu0 0.0
    %3543 = vmatpush1.msra.mxu0 0.0
    %3544 = vmatprep.subr.mxu0 0.0
    %3545 = vmatpush1.msra.mxu0 0.0
    %3546 = vmatprep.subr.mxu0 0.0
    %3547 = vmatpush1.msra.mxu0 0.0
    %3548 = vmatprep.mubr.f32.mxu0 0.0
    %3549 = vmatmul.mubr.f32.gmra.mrb[0].mxu0 %v3482
    %v3550 = vpop.f32.mrb[0].mxu0
    %v3551 = vadd.f32 0.0, %v3550
    %v3552 = vpop.f32.mrb[0].mxu0
    %3553 = vdwg.mxu0
    %3554 = vrot.lane.b32.xlu0 %v2309, 64
    %v3555 = vpop.permute.xlu0 %3554
    %v3558 = vsel %vm399, %v3021, 0
    %3560 = vmatprep.subr.mxu0 0.0
    %3561 = vmatpush1.msra.mxu0 %v3555
    %3562 = vmatprep.subr.mxu0 0.0
    %3563 = vmatpush1.msra.mxu0 0.0
    %3564 = vmatprep.subr.mxu0 0.0
    %3565 = vmatpush1.msra.mxu0 0.0
    %3566 = vmatprep.subr.mxu0 0.0
    %3567 = vmatpush1.msra.mxu0 0.0
    %3568 = vmatprep.subr.mxu0 0.0
    %3569 = vmatpush1.msra.mxu0 0.0
    %3570 = vmatprep.subr.mxu0 0.0
    %3571 = vmatpush1.msra.mxu0 0.0
    %3572 = vmatprep.subr.mxu0 0.0
    %3573 = vmatpush1.msra.mxu0 0.0
    %3574 = vmatprep.subr.mxu0 0.0
    %3575 = vmatpush1.msra.mxu0 0.0
    %3576 = vmatprep.subr.mxu0 0.0
    %3577 = vmatpush1.msra.mxu0 0.0
    %3578 = vmatprep.subr.mxu0 0.0
    %3579 = vmatpush1.msra.mxu0 0.0
    %3580 = vmatprep.subr.mxu0 0.0
    %3581 = vmatpush1.msra.mxu0 0.0
    %3582 = vmatprep.subr.mxu0 0.0
    %3583 = vmatpush1.msra.mxu0 0.0
    %3584 = vmatprep.subr.mxu0 0.0
    %3585 = vmatpush1.msra.mxu0 0.0
    %3586 = vmatprep.subr.mxu0 0.0
    %3587 = vmatpush1.msra.mxu0 0.0
    %3588 = vmatprep.subr.mxu0 0.0
    %3589 = vmatpush1.msra.mxu0 0.0
    %3590 = vmatprep.subr.mxu0 0.0
    %3591 = vmatpush1.msra.mxu0 0.0
    %3592 = vmatprep.subr.mxu0 0.0
    %3593 = vmatpush1.msra.mxu0 0.0
    %3594 = vmatprep.subr.mxu0 0.0
    %3595 = vmatpush1.msra.mxu0 0.0
    %3596 = vmatprep.subr.mxu0 0.0
    %3597 = vmatpush1.msra.mxu0 0.0
    %3598 = vmatprep.subr.mxu0 0.0
    %3599 = vmatpush1.msra.mxu0 0.0
    %3600 = vmatprep.subr.mxu0 0.0
    %3601 = vmatpush1.msra.mxu0 0.0
    %3602 = vmatprep.subr.mxu0 0.0
    %3603 = vmatpush1.msra.mxu0 0.0
    %3604 = vmatprep.subr.mxu0 0.0
    %3605 = vmatpush1.msra.mxu0 0.0
    %3606 = vmatprep.subr.mxu0 0.0
    %3607 = vmatpush1.msra.mxu0 0.0
    %3608 = vmatprep.subr.mxu0 0.0
    %3609 = vmatpush1.msra.mxu0 0.0
    %3610 = vmatprep.subr.mxu0 0.0
    %3611 = vmatpush1.msra.mxu0 0.0
    %3612 = vmatprep.subr.mxu0 0.0
    %3613 = vmatpush1.msra.mxu0 0.0
    %3614 = vmatprep.subr.mxu0 0.0
    %3615 = vmatpush1.msra.mxu0 0.0
    %3616 = vmatprep.subr.mxu0 0.0
    %3617 = vmatpush1.msra.mxu0 0.0
    %3618 = vmatprep.subr.mxu0 0.0
    %3619 = vmatpush1.msra.mxu0 0.0
    %3620 = vmatprep.subr.mxu0 0.0
    %3621 = vmatpush1.msra.mxu0 0.0
    %3622 = vmatprep.subr.mxu0 0.0
    %3623 = vmatpush1.msra.mxu0 0.0
    %3624 = vmatprep.mubr.f32.mxu0 0.0
    %3625 = vmatmul.mubr.f32.gmra.mrb[0].mxu0 %v3558
    %v3626 = vpop.f32.mrb[0].mxu0
    %v3627 = vadd.f32 0.0, %v3626
    %v3628 = vpop.f32.mrb[0].mxu0
    %3629 = vdwg.mxu0
    %3632 = vrot.lane.b32.xlu0 %v3171, 8
    %v3633 = vpop.permute.xlu0 %3632
    %3634 = vrot.lane.b32.xlu0 %v3475, 8
    %v3635 = vpop.permute.xlu0 %3634
    %3640 = vrot.lane.b32.xlu0 %v3247, 16
    %v3641 = vpop.permute.xlu0 %3640
    %3642 = vrot.lane.b32.xlu0 %v3551, 16
    %v3643 = vpop.permute.xlu0 %3642
    %3648 = vrot.lane.b32.xlu0 %v3323, 24
    %v3649 = vpop.permute.xlu0 %3648
    %3650 = vrot.lane.b32.xlu0 %v3627, 24
    %v3651 = vpop.permute.xlu0 %3650
    %v3654 = vsel %vm399, %v3095, %v3633
    %v3655 = vsel %vm399, %v3399, %v3635
    %v3656 = vsel %vm1754, %v3654, %v3641
    %v3657 = vsel %vm1754, %v3655, %v3643
    %v3658 = vsel %vm1757, %v3656, %v3649
    %v3659 = vsel %vm1757, %v3657, %v3651
    %v3660 = vpack.c.bf16 %v3659, %v3658
    %v3661 = vlaneseq
    %v3662 = vshrl.u32 %v3661, 7
    %v3663 = vsub.s32 0, %v3662
    %v3664 = vrot.slane %v2116, %v3663
    %v3669 = vunpack.c.l.b16 %v2099
    %v3670 = vunpack.c.l.b16 %v2100
    %v3671 = vunpack.c.l.b16 %v2101
    %v3672 = vunpack.c.l.b16 %v2102
    %v3673 = vpack.c.b16 %v3670, %v3669
    %v3674 = vpack.c.b16 %v3672, %v3671
    %v3678 = vsel %vm216, %v3660, 0
    %3680 = vmatprep.subr.bf16.mxu0 0
    %3681 = vmatpush1.bf16.msra.mxu0 %v3673
    %3682 = vmatprep.subr.bf16.mxu0 0
    %3683 = vmatpush1.bf16.msra.mxu0 %v3674
    %3684 = vmatprep.subr.bf16.mxu0 0
    %3685 = vmatpush1.bf16.msra.mxu0 0
    %3686 = vmatprep.subr.bf16.mxu0 0
    %3687 = vmatpush1.bf16.msra.mxu0 0
    %3688 = vmatprep.subr.bf16.mxu0 0
    %3689 = vmatpush1.bf16.msra.mxu0 0
    %3690 = vmatprep.subr.bf16.mxu0 0
    %3691 = vmatpush1.bf16.msra.mxu0 0
    %3692 = vmatprep.subr.bf16.mxu0 0
    %3693 = vmatpush1.bf16.msra.mxu0 0
    %3694 = vmatprep.subr.bf16.mxu0 0
    %3695 = vmatpush1.bf16.msra.mxu0 0
    %3696 = vmatprep.subr.bf16.mxu0 0
    %3697 = vmatpush1.bf16.msra.mxu0 0
    %3698 = vmatprep.subr.bf16.mxu0 0
    %3699 = vmatpush1.bf16.msra.mxu0 0
    %3700 = vmatprep.subr.bf16.mxu0 0
    %3701 = vmatpush1.bf16.msra.mxu0 0
    %3702 = vmatprep.subr.bf16.mxu0 0
    %3703 = vmatpush1.bf16.msra.mxu0 0
    %3704 = vmatprep.subr.bf16.mxu0 0
    %3705 = vmatpush1.bf16.msra.mxu0 0
    %3706 = vmatprep.subr.bf16.mxu0 0
    %3707 = vmatpush1.bf16.msra.mxu0 0
    %3708 = vmatprep.subr.bf16.mxu0 0
    %3709 = vmatpush1.bf16.msra.mxu0 0
    %3710 = vmatprep.subr.bf16.mxu0 0
    %3711 = vmatpush1.bf16.msra.mxu0 0
    %3712 = vmatprep.mubr.bf16.mxu0 0
    %3713 = vmatmul.mubr.bf16.gmra.mrb[0].mxu0 %v3678
    %v3714 = vpop.f32.mrb[0].mxu0
    %v3715 = vadd.f32 %v3664, %v3714
    %v3716 = vpop.f32.mrb[0].mxu0
    %v3717 = vpop.f32.mrb[0].mxu0
    %v3718 = vadd.f32 %v3664, %v3717
    %v3719 = vpop.f32.mrb[0].mxu0
    %3720 = vdwg.mxu0
    %v3723 = vcombine.high %v3715, %v3715
    %v3724 = vcombine.high %v3718, %v3718
    %v3727 = vadd.f32 %v2090, %v3715
    %v3728 = vadd.f32 %v2091, %v3723
    %v3729 = vadd.f32 %v2092, %v3718
    %v3730 = vadd.f32 %v2093, %v3724
    %v3735 = vcombine.low %v3727, %v3728
    %v3736 = vcombine.low %v3729, %v3730
    %v3739 = vsel %vm216, %v3735, 0.0
    %3740 = vadd.xlane.f32.xlu0 %v3739
    %v3741 = vpop.xlane.xlu0 %3740
    %v3742 = vsel %vm216, %v3736, 0.0
    %3743 = vadd.xlane.f32.xlu0 %v3742
    %v3744 = vpop.xlane.xlu0 %3743
    %v3745 = vmul.f32 %v3741, %v223
    %v3746 = vmul.f32 %v3744, %v223
    %v3750 = vunpack.c.l.s4 839922192
    %v3751 = vunpack.c.0.s8 %v3750
    %v3752 = vlaneseq
    %v3753 = vshrl.u32 %v3752, 7
    %v3754 = vsub.s32 %v3751, %v3753
    %v3755 = vrot.slane %v3745, %v3754
    %v3757 = vunpack.c.l.s4 1985246804
    %v3758 = vunpack.c.0.s8 %v3757
    %v3759 = vlaneseq
    %v3760 = vshrl.u32 %v3759, 7
    %v3761 = vsub.s32 %v3758, %v3760
    %v3762 = vrot.slane %v3745, %v3761
    %v3764 = vunpack.c.l.s4 839922192
    %v3765 = vunpack.c.0.s8 %v3764
    %v3766 = vlaneseq
    %v3767 = vshrl.u32 %v3766, 7
    %v3768 = vsub.s32 %v3765, %v3767
    %v3769 = vrot.slane %v3746, %v3768
    %v3771 = vunpack.c.l.s4 1985246804
    %v3772 = vunpack.c.0.s8 %v3771
    %v3773 = vlaneseq
    %v3774 = vshrl.u32 %v3773, 7
    %v3775 = vsub.s32 %v3772, %v3774
    %v3776 = vrot.slane %v3746, %v3775
    %v3781 = vsub.f32 %v3727, %v3755
    %v3782 = vsub.f32 %v3728, %v3762
    %v3783 = vsub.f32 %v3729, %v3769
    %v3784 = vsub.f32 %v3730, %v3776
    %v3785 = vmul.f32 %v3781, %v3781
    %v3786 = vmul.f32 %v3782, %v3782
    %v3787 = vmul.f32 %v3783, %v3783
    %v3788 = vmul.f32 %v3784, %v3784
    %v3793 = vcombine.low %v3785, %v3786
    %v3794 = vcombine.low %v3787, %v3788
    %v3797 = vsel %vm216, %v3793, 0.0
    %3798 = vadd.xlane.f32.xlu0 %v3797
    %v3799 = vpop.xlane.xlu0 %3798
    %v3800 = vsel %vm216, %v3794, 0.0
    %3801 = vadd.xlane.f32.xlu0 %v3800
    %v3802 = vpop.xlane.xlu0 %3801
    %v3803 = vmul.f32 %v3799, 0.032258064
    %v3804 = vmul.f32 %v3802, 0.032258064
    %v3805 = vrsqrt.pop %v3803
    %v3806 = vmul.f32 %v3803, %v3805
    %vm3807 = vcmp.eq.f32.partialorder %v3803, inf
    %v3808 = vsel %vm3807, %v3803, %v3806
    %vm3809 = vcmp.eq.f32.partialorder %v3803, 0.0
    %v3810 = vand.u32 %v3803, 2147483648
    %v3811 = vsel %vm3809, %v3810, %v3808
    %v3812 = vrsqrt.pop %v3804
    %v3813 = vmul.f32 %v3804, %v3812
    %vm3814 = vcmp.eq.f32.partialorder %v3804, inf
    %v3815 = vsel %vm3814, %v3804, %v3813
    %vm3816 = vcmp.eq.f32.partialorder %v3804, 0.0
    %v3817 = vand.u32 %v3804, 2147483648
    %v3818 = vsel %vm3816, %v3817, %v3815
    %v3819 = vadd.f32 %v3811, 1e-06
    %v3820 = vadd.f32 %v3818, 1e-06
    %v3821 = vrcp.pop %v3819
    %v3822 = vmul.f32 1.0, %v3821
    %v3823 = vrcp.pop %v3820
    %v3824 = vmul.f32 1.0, %v3823
    %v3825 = vlaneseq
    %v3826 = vshrl.u32 %v3825, 7
    %v3827 = vsub.s32 0, %v3826
    %v3828 = vrot.slane %v2121, %v3827
    %v3833 = vcombine.low %v3781, %v3782
    %v3834 = vcombine.low %v3783, %v3784
    %v3837 = vmul.f32 %v3828, %v3833
    %v3838 = vmul.f32 %v3828, %v3834
    %v3839 = vmul.f32 %v3837, %v3822
    %v3840 = vmul.f32 %v3838, %v3824
    %v3841 = vlaneseq
    %v3842 = vshrl.u32 %v3841, 7
    %v3843 = vsub.s32 0, %v3842
    %v3844 = vrot.slane %v2122, %v3843
    %v3845 = vadd.f32 %v3839, %v3844
    %v3846 = vadd.f32 %v3840, %v3844
    %v3847 = vpack.c.bf16 %v3846, %v3845
    %v3848 = vlaneseq
    %v3849 = vshrl.u32 %v3848, 7
    %v3850 = vsub.s32 0, %v3849
    %v3851 = vrot.slane %v2117, %v3850
    %v3856 = vunpack.c.l.b16 %v2103
    %v3857 = vunpack.c.l.b16 %v2104
    %v3858 = vunpack.c.l.b16 %v2105
    %v3859 = vunpack.c.l.b16 %v2106
    %v3860 = vpack.c.b16 %v3857, %v3856
    %v3861 = vpack.c.b16 %v3859, %v3858
    %v3865 = vsel %vm216, %v3847, 0
    %3867 = vmatprep.subr.bf16.mxu0 0
    %3868 = vmatpush1.bf16.msra.mxu0 %v3860
    %3869 = vmatprep.subr.bf16.mxu0 0
    %3870 = vmatpush1.bf16.msra.mxu0 %v3861
    %3871 = vmatprep.subr.bf16.mxu0 0
    %3872 = vmatpush1.bf16.msra.mxu0 0
    %3873 = vmatprep.subr.bf16.mxu0 0
    %3874 = vmatpush1.bf16.msra.mxu0 0
    %3875 = vmatprep.subr.bf16.mxu0 0
    %3876 = vmatpush1.bf16.msra.mxu0 0
    %3877 = vmatprep.subr.bf16.mxu0 0
    %3878 = vmatpush1.bf16.msra.mxu0 0
    %3879 = vmatprep.subr.bf16.mxu0 0
    %3880 = vmatpush1.bf16.msra.mxu0 0
    %3881 = vmatprep.subr.bf16.mxu0 0
    %3882 = vmatpush1.bf16.msra.mxu0 0
    %3883 = vmatprep.subr.bf16.mxu0 0
    %3884 = vmatpush1.bf16.msra.mxu0 0
    %3885 = vmatprep.subr.bf16.mxu0 0
    %3886 = vmatpush1.bf16.msra.mxu0 0
    %3887 = vmatprep.subr.bf16.mxu0 0
    %3888 = vmatpush1.bf16.msra.mxu0 0
    %3889 = vmatprep.subr.bf16.mxu0 0
    %3890 = vmatpush1.bf16.msra.mxu0 0
    %3891 = vmatprep.subr.bf16.mxu0 0
    %3892 = vmatpush1.bf16.msra.mxu0 0
    %3893 = vmatprep.subr.bf16.mxu0 0
    %3894 = vmatpush1.bf16.msra.mxu0 0
    %3895 = vmatprep.subr.bf16.mxu0 0
    %3896 = vmatpush1.bf16.msra.mxu0 0
    %3897 = vmatprep.subr.bf16.mxu0 0
    %3898 = vmatpush1.bf16.msra.mxu0 0
    %3899 = vmatprep.mubr.bf16.mxu0 0
    %3900 = vmatmul.mubr.bf16.gmra.mrb[0].mxu0 %v3865
    %v3901 = vpop.f32.mrb[0].mxu0
    %v3902 = vadd.f32 %v3851, %v3901
    %v3903 = vpop.f32.mrb[0].mxu0
    %v3904 = vpop.f32.mrb[0].mxu0
    %v3905 = vadd.f32 %v3851, %v3904
    %v3906 = vpop.f32.mrb[0].mxu0
    %3907 = vdwg.mxu0
    %v3908 = vmax.f32 %v3902, 0.0
    %v3909 = vmax.f32 %v3905, 0.0
    %v3910 = vpack.c.bf16 %v3909, %v3908
    %v3911 = vlaneseq
    %v3912 = vshrl.u32 %v3911, 7
    %v3913 = vsub.s32 0, %v3912
    %v3914 = vrot.slane %v2118, %v3913
    %v3923 = vunpack.c.l.b16 %v2107
    %v3924 = vunpack.c.l.b16 %v2108
    %v3925 = vunpack.c.l.b16 %v2109
    %v3926 = vunpack.c.l.b16 %v2110
    %v3927 = vunpack.c.l.b16 %v2111
    %v3928 = vunpack.c.l.b16 %v2112
    %v3929 = vunpack.c.l.b16 %v2113
    %v3930 = vunpack.c.l.b16 %v2114
    %v3931 = vpack.c.b16 %v3924, %v3923
    %v3932 = vpack.c.b16 %v3926, %v3925
    %v3933 = vpack.c.b16 %v3928, %v3927
    %v3934 = vpack.c.b16 %v3930, %v3929
    %v3940 = vsel %vm2039, %v3910, 0
    %3942 = vmatprep.subr.bf16.mxu0 0
    %3943 = vmatpush1.bf16.msra.mxu0 %v3931
    %3944 = vmatprep.subr.bf16.mxu0 0
    %3945 = vmatpush1.bf16.msra.mxu0 %v3932
    %3946 = vmatprep.subr.bf16.mxu0 0
    %3947 = vmatpush1.bf16.msra.mxu0 %v3933
    %3948 = vmatprep.subr.bf16.mxu0 0
    %3949 = vmatpush1.bf16.msra.mxu0 %v3934
    %3950 = vmatprep.subr.bf16.mxu0 0
    %3951 = vmatpush1.bf16.msra.mxu0 0
    %3952 = vmatprep.subr.bf16.mxu0 0
    %3953 = vmatpush1.bf16.msra.mxu0 0
    %3954 = vmatprep.subr.bf16.mxu0 0
    %3955 = vmatpush1.bf16.msra.mxu0 0
    %3956 = vmatprep.subr.bf16.mxu0 0
    %3957 = vmatpush1.bf16.msra.mxu0 0
    %3958 = vmatprep.subr.bf16.mxu0 0
    %3959 = vmatpush1.bf16.msra.mxu0 0
    %3960 = vmatprep.subr.bf16.mxu0 0
    %3961 = vmatpush1.bf16.msra.mxu0 0
    %3962 = vmatprep.subr.bf16.mxu0 0
    %3963 = vmatpush1.bf16.msra.mxu0 0
    %3964 = vmatprep.subr.bf16.mxu0 0
    %3965 = vmatpush1.bf16.msra.mxu0 0
    %3966 = vmatprep.subr.bf16.mxu0 0
    %3967 = vmatpush1.bf16.msra.mxu0 0
    %3968 = vmatprep.subr.bf16.mxu0 0
    %3969 = vmatpush1.bf16.msra.mxu0 0
    %3970 = vmatprep.subr.bf16.mxu0 0
    %3971 = vmatpush1.bf16.msra.mxu0 0
    %3972 = vmatprep.subr.bf16.mxu0 0
    %3973 = vmatpush1.bf16.msra.mxu0 0
    %3974 = vmatprep.mubr.bf16.mxu0 0
    %3975 = vmatmul.mubr.bf16.gmra.mrb[0].mxu0 %v3940
    %v3976 = vpop.f32.mrb[0].mxu0
    %v3977 = vadd.f32 %v3914, %v3976
    %v3978 = vpop.f32.mrb[0].mxu0
    %v3979 = vpop.f32.mrb[0].mxu0
    %v3980 = vadd.f32 %v3914, %v3979
    %v3981 = vpop.f32.mrb[0].mxu0
    %3982 = vdwg.mxu0
    %v3985 = vcombine.high %v3977, %v3977
    %v3986 = vcombine.high %v3980, %v3980
    %v3989 = vadd.f32 %v3727, %v3977
    %v3990 = vadd.f32 %v3728, %v3985
    %v3991 = vadd.f32 %v3729, %v3980
    %v3992 = vadd.f32 %v3730, %v3986
    %s3993 = scalar_lea.vmem [#allocation7], 16
    %v3994 = vld [vmem:[%s3993] sm:$0x1]
    %v3995 = vld [vmem:[%s3993 + $0x1] sm:$0x1]
    %v4000 = vcombine.low %v3989, %v3990
    %v4001 = vcombine.low %v3991, %v3992
    %v4004 = vsel %vm216, %v4000, 0.0
    %4005 = vadd.xlane.f32.xlu0 %v4004
    %v4006 = vpop.xlane.xlu0 %4005
    %v4007 = vsel %vm216, %v4001, 0.0
    %4008 = vadd.xlane.f32.xlu0 %v4007
    %v4009 = vpop.xlane.xlu0 %4008
    %v4010 = vmul.f32 %v4006, %v223
    %v4011 = vmul.f32 %v4009, %v223
    %v4015 = vunpack.c.l.s4 839922192
    %v4016 = vunpack.c.0.s8 %v4015
    %v4017 = vlaneseq
    %v4018 = vshrl.u32 %v4017, 7
    %v4019 = vsub.s32 %v4016, %v4018
    %v4020 = vrot.slane %v4010, %v4019
    %v4022 = vunpack.c.l.s4 1985246804
    %v4023 = vunpack.c.0.s8 %v4022
    %v4024 = vlaneseq
    %v4025 = vshrl.u32 %v4024, 7
    %v4026 = vsub.s32 %v4023, %v4025
    %v4027 = vrot.slane %v4010, %v4026
    %v4029 = vunpack.c.l.s4 839922192
    %v4030 = vunpack.c.0.s8 %v4029
    %v4031 = vlaneseq
    %v4032 = vshrl.u32 %v4031, 7
    %v4033 = vsub.s32 %v4030, %v4032
    %v4034 = vrot.slane %v4011, %v4033
    %v4036 = vunpack.c.l.s4 1985246804
    %v4037 = vunpack.c.0.s8 %v4036
    %v4038 = vlaneseq
    %v4039 = vshrl.u32 %v4038, 7
    %v4040 = vsub.s32 %v4037, %v4039
    %v4041 = vrot.slane %v4011, %v4040
    %v4046 = vsub.f32 %v3989, %v4020
    %v4047 = vsub.f32 %v3990, %v4027
    %v4048 = vsub.f32 %v3991, %v4034
    %v4049 = vsub.f32 %v3992, %v4041
    %v4050 = vmul.f32 %v4046, %v4046
    %v4051 = vmul.f32 %v4047, %v4047
    %v4052 = vmul.f32 %v4048, %v4048
    %v4053 = vmul.f32 %v4049, %v4049
    %v4058 = vcombine.low %v4050, %v4051
    %v4059 = vcombine.low %v4052, %v4053
    %v4062 = vsel %vm216, %v4058, 0.0
    %4063 = vadd.xlane.f32.xlu0 %v4062
    %v4064 = vpop.xlane.xlu0 %4063
    %v4065 = vsel %vm216, %v4059, 0.0
    %4066 = vadd.xlane.f32.xlu0 %v4065
    %v4067 = vpop.xlane.xlu0 %4066
    %v4068 = vmul.f32 %v4064, 0.032258064
    %v4069 = vmul.f32 %v4067, 0.032258064
    %v4070 = vrsqrt.pop %v4068
    %v4071 = vmul.f32 %v4068, %v4070
    %vm4072 = vcmp.eq.f32.partialorder %v4068, inf
    %v4073 = vsel %vm4072, %v4068, %v4071
    %vm4074 = vcmp.eq.f32.partialorder %v4068, 0.0
    %v4075 = vand.u32 %v4068, 2147483648
    %v4076 = vsel %vm4074, %v4075, %v4073
    %v4077 = vrsqrt.pop %v4069
    %v4078 = vmul.f32 %v4069, %v4077
    %vm4079 = vcmp.eq.f32.partialorder %v4069, inf
    %v4080 = vsel %vm4079, %v4069, %v4078
    %vm4081 = vcmp.eq.f32.partialorder %v4069, 0.0
    %v4082 = vand.u32 %v4069, 2147483648
    %v4083 = vsel %vm4081, %v4082, %v4080
    %v4084 = vadd.f32 %v4076, 1e-06
    %v4085 = vadd.f32 %v4083, 1e-06
    %v4086 = vrcp.pop %v4084
    %v4087 = vmul.f32 1.0, %v4086
    %v4088 = vrcp.pop %v4085
    %v4089 = vmul.f32 1.0, %v4088
    %v4090 = vlaneseq
    %v4091 = vshrl.u32 %v4090, 7
    %v4092 = vsub.s32 0, %v4091
    %v4093 = vrot.slane %v3994, %v4092
    %v4098 = vcombine.low %v4046, %v4047
    %v4099 = vcombine.low %v4048, %v4049
    %v4102 = vmul.f32 %v4093, %v4098
    %v4103 = vmul.f32 %v4093, %v4099
    %v4104 = vmul.f32 %v4102, %v4087
    %v4105 = vmul.f32 %v4103, %v4089
    %v4106 = vlaneseq
    %v4107 = vshrl.u32 %v4106, 7
    %v4108 = vsub.s32 0, %v4107
    %v4109 = vrot.slane %v3995, %v4108
    %v4110 = vadd.f32 %v4104, %v4109
    %v4111 = vadd.f32 %v4105, %v4109
    %v4114 = vcombine.high %v4110, %v4110
    %v4115 = vcombine.high %v4111, %v4111
    %v4116 = vlaneseq
    %v4117 = vshrl.u32 %v4116, 7
    %v4118 = vsub.s32 0, %v4117
    %v4119 = vrot.slane %v4110, %v4118
    %v4120 = vlaneseq
    %v4121 = vshrl.u32 %v4120, 7
    %v4122 = vsub.s32 0, %v4121
    %v4123 = vrot.slane %v4114, %v4122
    %v4124 = vlaneseq
    %v4125 = vshrl.u32 %v4124, 7
    %v4126 = vsub.s32 0, %v4125
    %v4127 = vrot.slane %v4111, %v4126
    %v4128 = vlaneseq
    %v4129 = vshrl.u32 %v4128, 7
    %v4130 = vsub.s32 0, %v4129
    %v4131 = vrot.slane %v4115, %v4130
    %vm4132 = vcmask 1041409
    %v4133 = vsel %vm4132, %v4123, %v4119
    %vm4134 = vcmask 1042434
    %v4135 = vsel %vm4134, %v4127, %v4133
    %vm4136 = vcmask 1043459
    %v4137 = vsel %vm4136, %v4131, %v4135
    %v4139 = vlaneseq
    %v4140 = vshrl.u32 %v4139, 7
    %v4141 = vsub.s32 1, %v4140
    %v4142 = vrot.slane %v4110, %v4141
    %v4143 = vlaneseq
    %v4144 = vshrl.u32 %v4143, 7
    %v4145 = vsub.s32 1, %v4144
    %v4146 = vrot.slane %v4114, %v4145
    %v4147 = vlaneseq
    %v4148 = vshrl.u32 %v4147, 7
    %v4149 = vsub.s32 1, %v4148
    %v4150 = vrot.slane %v4111, %v4149
    %v4151 = vlaneseq
    %v4152 = vshrl.u32 %v4151, 7
    %v4153 = vsub.s32 1, %v4152
    %v4154 = vrot.slane %v4115, %v4153
    %v4155 = vsel %vm4132, %v4146, %v4142
    %v4156 = vsel %vm4134, %v4150, %v4155
    %v4157 = vsel %vm4136, %v4154, %v4156
    %4158 = vrot.lane.b32.xlu0 %v4157, 32
    %v4159 = vpop.permute.xlu0 %4158
    %v4161 = vlaneseq
    %v4162 = vshrl.u32 %v4161, 7
    %v4163 = vsub.s32 2, %v4162
    %v4164 = vrot.slane %v4110, %v4163
    %v4165 = vlaneseq
    %v4166 = vshrl.u32 %v4165, 7
    %v4167 = vsub.s32 2, %v4166
    %v4168 = vrot.slane %v4114, %v4167
    %v4169 = vlaneseq
    %v4170 = vshrl.u32 %v4169, 7
    %v4171 = vsub.s32 2, %v4170
    %v4172 = vrot.slane %v4111, %v4171
    %v4173 = vlaneseq
    %v4174 = vshrl.u32 %v4173, 7
    %v4175 = vsub.s32 2, %v4174
    %v4176 = vrot.slane %v4115, %v4175
    %v4177 = vsel %vm4132, %v4168, %v4164
    %v4178 = vsel %vm4134, %v4172, %v4177
    %v4179 = vsel %vm4136, %v4176, %v4178
    %4180 = vrot.lane.b32.xlu0 %v4179, 64
    %v4181 = vpop.permute.xlu0 %4180
    %v4183 = vlaneseq
    %v4184 = vshrl.u32 %v4183, 7
    %v4185 = vsub.s32 3, %v4184
    %v4186 = vrot.slane %v4110, %v4185
    %v4187 = vlaneseq
    %v4188 = vshrl.u32 %v4187, 7
    %v4189 = vsub.s32 3, %v4188
    %v4190 = vrot.slane %v4114, %v4189
    %v4191 = vlaneseq
    %v4192 = vshrl.u32 %v4191, 7
    %v4193 = vsub.s32 3, %v4192
    %v4194 = vrot.slane %v4111, %v4193
    %v4195 = vlaneseq
    %v4196 = vshrl.u32 %v4195, 7
    %v4197 = vsub.s32 3, %v4196
    %v4198 = vrot.slane %v4115, %v4197
    %v4199 = vsel %vm4132, %v4190, %v4186
    %v4200 = vsel %vm4134, %v4194, %v4199
    %v4201 = vsel %vm4136, %v4198, %v4200
    %4202 = vrot.lane.b32.xlu0 %v4201, 96
    %v4203 = vpop.permute.xlu0 %4202
    %v4205 = vsel %vm216, %v4137, %v4159
    %v4206 = vsel %vm2039, %v4205, %v4181
    %vm4207 = vcmask 785408
    %v4208 = vsel %vm4207, %v4206, %v4203
    %4209 = vst [vmem:[#allocation8] sm:$0xf] %v4208
    // Predicated region
    $region30: #{tpu_custom_call.1} parent=1 // pred_check
      _
    $region31: #{tpu_custom_call.1} parent=1 // pred_check_branch
      %4211 = sbr.rel (0) target = $region33
    $region32: #{tpu_custom_call.1} parent=1 // pred_region
      %s4213 = ssub.s32 64, 64
      %4214 = vsyncadd [#allocation4], %s4213
      %s4216 = sshll.u32 [#allocation8], 4
      %s4217 = int_to_ptr.vmem [resolvable:$true] %s4216
      %4219 = dma.vmem_to_hbm [thread:$0]  %s4217, 64, %s4, [#allocation4]
    $region33: #{tpu_custom_call.1} parent=1 // pred_fallthru
      _
    // Predicated region
    $region34: #{tpu_custom_call.1} parent=1 // pred_check
      _
    $region35: #{tpu_custom_call.1} parent=1 // pred_check_branch
      %4221 = sbr.rel (0) target = $region37
    $region36: #{tpu_custom_call.1} parent=1 // pred_region
      %4222 = dma.done [#allocation4], 64
    $region37: #{tpu_custom_call.1} parent=1 // pred_fallthru
      _
    %4223 = vsyncpa [#allocation3], 1
    %4224 = vsyncpa [#allocation6], 1
    %4225 = vsyncpa [#allocation4], 1

</llo_original>
